<compile_context>
chip_gen: v7x
topology: tpu7x:2x2x1
jax: 0.10.0
libtpu: 0.0.40
codegen_flags: <defaults>
</compile_context>

<pallas_src>
import functools

import jax
import jax.numpy as jnp
from jax import lax
from jax.experimental import pallas as pl
from jax.experimental.pallas import tpu as pltpu


def _vmem_full():
    return pl.BlockSpec(memory_space=pltpu.MemorySpace.VMEM)


def _lstm_gates(gates, c, H):
    """LSTM pointwise stage. Activations run on the full (Bp, 4H) vreg
    (one sigmoid pass + one tanh pass), then slice the i/f/g/o chunks."""
    sig = jax.nn.sigmoid(gates)
    tg = jnp.tanh(gates)
    i = sig[:, 0 * H:1 * H]
    f = sig[:, 1 * H:2 * H]
    g = tg[:, 2 * H:3 * H]
    o = sig[:, 3 * H:4 * H]
    c_new = f * c + i * g
    h_new = o * jnp.tanh(c_new)
    return h_new, c_new


# --------------------------------------------------------------------------
# Fused forward kernel
# --------------------------------------------------------------------------
def _vae_fused_kernel(lens_ref, x_enc_ref, dec_tgt_ref, eps_ref, w_ref, b_ref,
                      stats_ref, preds_ref, h_all_ref, *, B, pad_id):
    Bp, H = eps_ref.shape
    E = x_enc_ref.shape[1]
    W = w_ref.shape[1]                 # padded lane width (>= 4H, >= padded vocab)
    T = x_enc_ref.shape[0] // Bp
    Tm1 = T - 1

    # static row offsets into the packed weight slab
    r_enc_wih = 0
    r_enc_whh = r_enc_wih + E
    r_dec_wih = r_enc_whh + H
    r_dec_whh = r_dec_wih + E
    r_zp_w = r_dec_whh + H
    r_init_w = r_zp_w + H
    r_out_w = r_init_w + E
    r_end = r_out_w + H

    x_flat = x_enc_ref[...]                                    # (T*Bp, E)
    lens = lens_ref[...]                                       # (Bp, 1) int32

    # ---------------- encoder (length-masked LSTM, unrolled) ------------------
    # hoisted input projection: one batched matmul for all T steps
    xp_enc = (jnp.dot(x_flat, w_ref[r_enc_wih:r_enc_whh, :],
                      preferred_element_type=jnp.float32)
              + b_ref[0:1, :])                                 # (T*Bp, 4H[+pad])
    enc_whh = w_ref[r_enc_whh:r_dec_wih, :]                    # (H, 4H[+pad])

    h = jnp.zeros((Bp, H), jnp.float32)
    c = jnp.zeros((Bp, H), jnp.float32)
    for t in range(T):
        gates = (xp_enc[t * Bp:(t + 1) * Bp, :]
                 + jnp.dot(h, enc_whh, preferred_element_type=jnp.float32))
        h_new, c_new = _lstm_gates(gates, c, H)
        valid = t < lens                                       # (Bp, 1) bool
        h = jnp.where(valid, h_new, h)
        c = jnp.where(valid, c_new, c)

    # ---------------- z projection + reparameterize + KLD ---------------------
    z_enc = (jnp.dot(h, w_ref[r_zp_w:r_init_w, :],
                     preferred_element_type=jnp.float32)
             + b_ref[2:3, :])                                  # (Bp, W); cols>=2H are zero-pad
    mu = z_enc[:, 0:H]
    lv = z_enc[:, H:2 * H]
    s = jnp.exp(0.5 * lv)                                      # exp(lv) = s * s
    z = mu + s * eps_ref[...]
    row_ok = lax.broadcasted_iota(jnp.int32, (Bp, H), 0) < B   # mask padded batch rows
    kld = -0.5 * jnp.sum(jnp.where(row_ok, 1.0 + lv - mu * mu - s * s, 0.0))

    # ---------------- decoder init state (merged h0|c0 projection) ------------
    hc0 = (jnp.dot(z, w_ref[r_init_w:r_out_w, :],
                   preferred_element_type=jnp.float32)
           + b_ref[3:4, :])                                    # (Bp, W)
    h = hc0[:, 0:H]
    c = hc0[:, H:2 * H]

    # ---------------- decoder (teacher forcing, unrolled) ---------------------
    # decoder inputs are emb(sentences[:, :-1]) == first (T-1)*Bp rows of x_flat
    xp_dec = (jnp.dot(x_flat[0:Tm1 * Bp, :], w_ref[r_dec_wih:r_dec_whh, :],
                      preferred_element_type=jnp.float32)
              + b_ref[1:2, :])                                 # (Tm1*Bp, 4H[+pad])
    dec_whh = w_ref[r_dec_whh:r_zp_w, :]

    for t in range(Tm1):
        gates = (xp_dec[t * Bp:(t + 1) * Bp, :]
                 + jnp.dot(h, dec_whh, preferred_element_type=jnp.float32))
        h, c = _lstm_gates(gates, c, H)
        h_all_ref[t * Bp:(t + 1) * Bp, :] = h                  # stash; not on recurrence path

    # ---------------- batched vocab projection / logsumexp / argmax -----------
    h_all = h_all_ref[...]                                     # (Tm1*Bp, H)
    logits = (jnp.dot(h_all, w_ref[r_out_w:r_end, :],
                      preferred_element_type=jnp.float32)
              + b_ref[4:5, :])                                 # (Tm1*Bp, W); pad cols biased -1e30
    m = jnp.max(logits, axis=-1, keepdims=True)
    logz = m + jnp.log(jnp.sum(jnp.exp(logits - m), axis=-1, keepdims=True))

    tgt = dec_tgt_ref[...]                                     # (Tm1*Bp, 1) int32
    vidx = lax.broadcasted_iota(jnp.int32, (Tm1 * Bp, W), 1)
    tgt_logit = jnp.sum(jnp.where(vidx == tgt, logits, 0.0),
                        axis=-1, keepdims=True)                # (Tm1*Bp, 1)
    lp = tgt_logit - logz
    mask = (tgt != pad_id).astype(jnp.float32)                 # pad targets masked out
    logp = jnp.sum(lp * mask) / jnp.maximum(jnp.sum(mask), 1.0)

    # argmax = lowest index achieving the row max (pad cols can't win); one store
    preds_ref[...] = jnp.min(jnp.where(logits == m, vidx, W),
                             axis=-1, keepdims=True).astype(jnp.int32)

    # fold kld / log_prob into one (1, 2) output
    col = lax.broadcasted_iota(jnp.int32, (1, 2), 1)
    stats_ref[...] = jnp.where(col == 0, kld, logp)


# --------------------------------------------------------------------------
# Model: parameters + forward
# --------------------------------------------------------------------------
class Config:
    vocab_size = 64
    embedding_size = 32
    state_size = 32
    lstm_layers = 1        # single-layer LSTMs
    pad_id = 0
    start_id = 1
    end_id = 2
    z_beta = 1.0
    max_dec_len = 8


def init_params(cfg, key):
    ks = jax.random.split(key, 12)
    V, E, H = cfg.vocab_size, cfg.embedding_size, cfg.state_size
    L = cfg.lstm_layers
    sc = 0.1
    p = {
        "emb": sc * jax.random.normal(ks[0], (V, E), jnp.float32),
        # encoder LSTM
        "enc_wih": sc * jax.random.normal(ks[1], (E, 4 * H), jnp.float32),
        "enc_whh": sc * jax.random.normal(ks[2], (H, 4 * H), jnp.float32),
        "enc_b": jnp.zeros((4 * H,), jnp.float32),
        # z projection
        "zp_w": sc * jax.random.normal(ks[3], (H, 2 * H), jnp.float32),
        "zp_b": jnp.zeros((2 * H,), jnp.float32),
        # decoder init-state projections (in_features = embedding_size == H)
        "ih_w": sc * jax.random.normal(ks[4], (E, L * H), jnp.float32),
        "ih_b": jnp.zeros((L * H,), jnp.float32),
        "ic_w": sc * jax.random.normal(ks[5], (E, L * H), jnp.float32),
        "ic_b": jnp.zeros((L * H,), jnp.float32),
        # decoder LSTM + output projection
        "dec_wih": sc * jax.random.normal(ks[6], (E, 4 * H), jnp.float32),
        "dec_whh": sc * jax.random.normal(ks[7], (H, 4 * H), jnp.float32),
        "dec_b": jnp.zeros((4 * H,), jnp.float32),
        "out_w": sc * jax.random.normal(ks[8], (H, V), jnp.float32),
        "out_b": jnp.zeros((V,), jnp.float32),
    }
    return p


def pack_params(params, cfg):
    """Pack the 10 small weight/bias tensors into two VMEM-friendly slabs.
    Done ONCE (not per forward call)."""
    E, H, V = cfg.embedding_size, cfg.state_size, cfg.vocab_size
    W = -(-max(4 * H, V) // 128) * 128     # lane-dense slab width

    def padw(mat):
        return jnp.pad(mat, ((0, 0), (0, W - mat.shape[1])))

    init_w = jnp.concatenate([params["ih_w"], params["ic_w"]], axis=1)   # (E, 2H)

    w_slab = jnp.concatenate([
        padw(params["enc_wih"]),          # rows [0, E)
        padw(params["enc_whh"]),          # rows [E, E+H)
        padw(params["dec_wih"]),          # rows [E+H, 2E+H)
        padw(params["dec_whh"]),          # rows [2E+H, 2E+2H)
        padw(params["zp_w"]),             # rows [2E+2H, 2E+3H)
        padw(init_w),                     # rows [2E+3H, 3E+3H)
        padw(params["out_w"]),            # rows [3E+3H, 3E+4H)
    ], axis=0)                            # (3E+4H, W)

    def padb(vec):
        return jnp.pad(vec, (0, W - vec.shape[0]))

    b_slab = jnp.stack([
        padb(params["enc_b"]),                                            # row 0
        padb(params["dec_b"]),                                            # row 1
        padb(params["zp_b"]),                                             # row 2
        padb(jnp.concatenate([params["ih_b"], params["ic_b"]])),          # row 3
        jnp.pad(params["out_b"], (0, W - V), constant_values=-1e30),      # row 4: pad vocab masked
        jnp.zeros((W,), jnp.float32),
        jnp.zeros((W,), jnp.float32),
        jnp.zeros((W,), jnp.float32),
    ], axis=0)                                                            # (8, W)

    return {"emb": params["emb"], "w_slab": w_slab, "b_slab": b_slab}


def gaussian_vae_forward(packed, sentences, sent_lens, eps_key, *, cfg):
    B, T = sentences.shape
    E, H = cfg.embedding_size, cfg.state_size
    Tm1 = T - 1
    Bp = max(8, -(-B // 8) * 8)          # pad batch to sublane multiple
    pad_b = Bp - B

    # embedding gather + time-major layout (XLA glue outside the kernel)
    sent_emb = jnp.take(packed["emb"], sentences, axis=0)                 # (B, T, E)
    x_enc = jnp.pad(jnp.transpose(sent_emb, (1, 0, 2)),
                    ((0, 0), (0, pad_b), (0, 0)))                         # (T, Bp, E)
    x_enc_flat = x_enc.reshape(T * Bp, E)
    # decoder inputs == emb(sentences[:, :-1]) == first (T-1)*Bp rows of x_enc_flat

    dec_tgt = jnp.pad(jnp.transpose(sentences[:, 1:]).astype(jnp.int32),
                      ((0, 0), (0, pad_b)),
                      constant_values=cfg.pad_id).reshape(Tm1 * Bp, 1)    # (Tm1*Bp, 1)

    lens = jnp.pad(sent_lens.astype(jnp.int32), (0, pad_b)).reshape(Bp, 1)
    eps = jnp.pad(jax.random.normal(eps_key, (B, H), jnp.float32),
                  ((0, pad_b), (0, 0)))                                   # (Bp, H)

    kernel = functools.partial(_vae_fused_kernel, B=B, pad_id=cfg.pad_id)
    stats, preds = pl.pallas_call(
        kernel,
        out_shape=(
            jax.ShapeDtypeStruct((1, 2), jnp.float32),                    # [kld, log_prob]
            jax.ShapeDtypeStruct((Tm1 * Bp, 1), jnp.int32),               # time-major preds
        ),
        in_specs=[_vmem_full()] * 6,
        out_specs=(_vmem_full(), _vmem_full()),
        scratch_shapes=[pltpu.VMEM((Tm1 * Bp, H), jnp.float32)],          # stashed decoder h_t
    )(lens, x_enc_flat, dec_tgt, eps, packed["w_slab"], packed["b_slab"])

    kld = stats[0, 0]
    log_prob = stats[0, 1]
    predictions = jnp.transpose(preds.reshape(Tm1, Bp))[:B]               # (B, T-1)
    loss = cfg.z_beta * kld - log_prob
    out_dict = {"kld": kld, "log_prob": log_prob, "loss": loss,
                "predictions": predictions}
    return loss, out_dict


# TODO(synk): infer()/decode_infer (free-running greedy decode) is not
# implemented; only the training forward pass is translated.

if __name__ == "__main__":
    cfg = Config()
    key = jax.random.PRNGKey(0)
    pkey, skey, ekey = jax.random.split(key, 3)

    params = init_params(cfg, pkey)
    packed = pack_params(params, cfg)          # one-time param fusion, reused every call

    B, T = 4, 8
    # deterministic token ids in [3, vocab), start token at position 0, padded tail
    toks = jax.random.randint(skey, (B, T), 3, cfg.vocab_size, dtype=jnp.int32)
    toks = toks.at[:, 0].set(cfg.start_id)
    sent_lens = jnp.array([8, 6, 7, 5], dtype=jnp.int32)
    pos = jnp.arange(T, dtype=jnp.int32)[None, :]
    sentences = jnp.where(pos < sent_lens[:, None], toks, cfg.pad_id)

    fwd = jax.jit(functools.partial(gaussian_vae_forward, cfg=cfg))
    loss, out = fwd(packed, sentences, sent_lens, ekey)
    loss = jax.block_until_ready(loss)
    jax.block_until_ready(out["predictions"])

    assert jnp.isfinite(loss)
    print("KERNEL_OK")
</pallas_src>

<mosaic_0001>
module attributes {stable_mosaic.version = 11 : i64} {
  func.func @_vae_fused_kernel(%arg0: memref<8x1xi32, #tpu.memory_space<vmem>>, %arg1: memref<64x32xf32, #tpu.memory_space<vmem>>, %arg2: memref<56x1xi32, #tpu.memory_space<vmem>>, %arg3: memref<8x32xf32, #tpu.memory_space<vmem>>, %arg4: memref<224x128xf32, #tpu.memory_space<vmem>>, %arg5: memref<8x128xf32, #tpu.memory_space<vmem>>, %arg6: memref<1x2xf32, #tpu.memory_space<vmem>>, %arg7: memref<56x1xi32, #tpu.memory_space<vmem>>, %arg8: memref<56x32xf32, #tpu.memory_space<vmem>>) attributes {dimension_semantics = [], scalar_prefetch = 0 : i64, scratch_operands = 1 : i64, tpu.core_type = #tpu.core_type<tc>} {
    %c0 = arith.constant 0 : index
    %c0_0 = arith.constant 0 : index
    %0 = vector.load %arg1[%c0, %c0_0] : memref<64x32xf32, #tpu.memory_space<vmem>>, vector<64x32xf32>
    %c0_1 = arith.constant 0 : index
    %c0_2 = arith.constant 0 : index
    %1 = vector.load %arg0[%c0_1, %c0_2] : memref<8x1xi32, #tpu.memory_space<vmem>>, vector<8x1xi32>
    %c0_3 = arith.constant 0 : index
    %c0_4 = arith.constant 0 : index
    %2 = vector.load %arg4[%c0_3, %c0_4] : memref<224x128xf32, #tpu.memory_space<vmem>>, vector<32x128xf32>
    %cst = arith.constant dense<0.000000e+00> : vector<64x128xf32>
    %3 = tpu.matmul %0, %2, %cst {dimension_numbers = #tpu.dot_dimension_numbers<[1], [0], [0], [1], [0, 0, 1, 1], [], []>} : vector<64x32xf32>, vector<32x128xf32>, vector<64x128xf32> -> vector<64x128xf32>
    %c0_5 = arith.constant 0 : index
    %c0_6 = arith.constant 0 : index
    %4 = vector.load %arg5[%c0_5, %c0_6] : memref<8x128xf32, #tpu.memory_space<vmem>>, vector<1x128xf32>
    %5 = vector.broadcast %4 : vector<1x128xf32> to vector<64x128xf32>
    %6 = arith.addf %3, %5 : vector<64x128xf32>
    %c32 = arith.constant 32 : index
    %c0_7 = arith.constant 0 : index
    %7 = vector.load %arg4[%c32, %c0_7] : memref<224x128xf32, #tpu.memory_space<vmem>>, vector<32x128xf32>
    %cst_8 = arith.constant 0.000000e+00 : f32
    %8 = vector.broadcast %cst_8 : f32 to vector<8x32xf32>
    %cst_9 = arith.constant 0.000000e+00 : f32
    %9 = vector.broadcast %cst_9 : f32 to vector<8x32xf32>
    %10 = vector.extract_strided_slice %6 {offsets = [0, 0], sizes = [8, 128], strides = [1, 1]} : vector<64x128xf32> to vector<8x128xf32>
    %cst_10 = arith.constant dense<0.000000e+00> : vector<8x128xf32>
    %11 = tpu.matmul %8, %7, %cst_10 {dimension_numbers = #tpu.dot_dimension_numbers<[1], [0], [0], [1], [0, 0, 1, 1], [], []>} : vector<8x32xf32>, vector<32x128xf32>, vector<8x128xf32> -> vector<8x128xf32>
    %12 = arith.addf %10, %11 : vector<8x128xf32>
    %13 = arith.negf %12 : vector<8x128xf32>
    %14 = math.exp %13 : vector<8x128xf32>
    %cst_11 = arith.constant 1.000000e+00 : f32
    %15 = vector.broadcast %cst_11 : f32 to vector<8x128xf32>
    %16 = arith.addf %15, %14 : vector<8x128xf32>
    %17 = arith.divf %15, %16 : vector<8x128xf32>
    %18 = math.tanh %12 : vector<8x128xf32>
    %19 = vector.extract_strided_slice %17 {offsets = [0, 0], sizes = [8, 32], strides = [1, 1]} : vector<8x128xf32> to vector<8x32xf32>
    %20 = vector.extract_strided_slice %17 {offsets = [0, 32], sizes = [8, 32], strides = [1, 1]} : vector<8x128xf32> to vector<8x32xf32>
    %21 = vector.extract_strided_slice %18 {offsets = [0, 64], sizes = [8, 32], strides = [1, 1]} : vector<8x128xf32> to vector<8x32xf32>
    %22 = vector.extract_strided_slice %17 {offsets = [0, 96], sizes = [8, 32], strides = [1, 1]} : vector<8x128xf32> to vector<8x32xf32>
    %23 = arith.mulf %20, %9 : vector<8x32xf32>
    %24 = arith.mulf %19, %21 : vector<8x32xf32>
    %25 = arith.addf %23, %24 : vector<8x32xf32>
    %26 = math.tanh %25 : vector<8x32xf32>
    %27 = arith.mulf %22, %26 : vector<8x32xf32>
    %c0_i32 = arith.constant 0 : i32
    %28 = vector.broadcast %c0_i32 : i32 to vector<8x1xi32>
    %29 = arith.cmpi sgt, %1, %28 : vector<8x1xi32>
    %30 = vector.shape_cast %29 : vector<8x1xi1> to vector<8x1xi1>
    %31 = vector.broadcast %30 : vector<8x1xi1> to vector<8x32xi1>
    %32 = arith.select %31, %27, %8 : vector<8x32xi1>, vector<8x32xf32>
    %33 = vector.shape_cast %29 : vector<8x1xi1> to vector<8x1xi1>
    %34 = vector.broadcast %33 : vector<8x1xi1> to vector<8x32xi1>
    %35 = arith.select %34, %25, %9 : vector<8x32xi1>, vector<8x32xf32>
    %36 = vector.extract_strided_slice %6 {offsets = [8, 0], sizes = [8, 128], strides = [1, 1]} : vector<64x128xf32> to vector<8x128xf32>
    %cst_12 = arith.constant dense<0.000000e+00> : vector<8x128xf32>
    %37 = tpu.matmul %32, %7, %cst_12 {dimension_numbers = #tpu.dot_dimension_numbers<[1], [0], [0], [1], [0, 0, 1, 1], [], []>} : vector<8x32xf32>, vector<32x128xf32>, vector<8x128xf32> -> vector<8x128xf32>
    %38 = arith.addf %36, %37 : vector<8x128xf32>
    %39 = arith.negf %38 : vector<8x128xf32>
    %40 = math.exp %39 : vector<8x128xf32>
    %cst_13 = arith.constant 1.000000e+00 : f32
    %41 = vector.broadcast %cst_13 : f32 to vector<8x128xf32>
    %42 = arith.addf %41, %40 : vector<8x128xf32>
    %43 = arith.divf %41, %42 : vector<8x128xf32>
    %44 = math.tanh %38 : vector<8x128xf32>
    %45 = vector.extract_strided_slice %43 {offsets = [0, 0], sizes = [8, 32], strides = [1, 1]} : vector<8x128xf32> to vector<8x32xf32>
    %46 = vector.extract_strided_slice %43 {offsets = [0, 32], sizes = [8, 32], strides = [1, 1]} : vector<8x128xf32> to vector<8x32xf32>
    %47 = vector.extract_strided_slice %44 {offsets = [0, 64], sizes = [8, 32], strides = [1, 1]} : vector<8x128xf32> to vector<8x32xf32>
    %48 = vector.extract_strided_slice %43 {offsets = [0, 96], sizes = [8, 32], strides = [1, 1]} : vector<8x128xf32> to vector<8x32xf32>
    %49 = arith.mulf %46, %35 : vector<8x32xf32>
    %50 = arith.mulf %45, %47 : vector<8x32xf32>
    %51 = arith.addf %49, %50 : vector<8x32xf32>
    %52 = math.tanh %51 : vector<8x32xf32>
    %53 = arith.mulf %48, %52 : vector<8x32xf32>
    %c1_i32 = arith.constant 1 : i32
    %54 = vector.broadcast %c1_i32 : i32 to vector<8x1xi32>
    %55 = arith.cmpi sgt, %1, %54 : vector<8x1xi32>
    %56 = vector.shape_cast %55 : vector<8x1xi1> to vector<8x1xi1>
    %57 = vector.broadcast %56 : vector<8x1xi1> to vector<8x32xi1>
    %58 = arith.select %57, %53, %32 : vector<8x32xi1>, vector<8x32xf32>
    %59 = vector.shape_cast %55 : vector<8x1xi1> to vector<8x1xi1>
    %60 = vector.broadcast %59 : vector<8x1xi1> to vector<8x32xi1>
    %61 = arith.select %60, %51, %35 : vector<8x32xi1>, vector<8x32xf32>
    %62 = vector.extract_strided_slice %6 {offsets = [16, 0], sizes = [8, 128], strides = [1, 1]} : vector<64x128xf32> to vector<8x128xf32>
    %cst_14 = arith.constant dense<0.000000e+00> : vector<8x128xf32>
    %63 = tpu.matmul %58, %7, %cst_14 {dimension_numbers = #tpu.dot_dimension_numbers<[1], [0], [0], [1], [0, 0, 1, 1], [], []>} : vector<8x32xf32>, vector<32x128xf32>, vector<8x128xf32> -> vector<8x128xf32>
    %64 = arith.addf %62, %63 : vector<8x128xf32>
    %65 = arith.negf %64 : vector<8x128xf32>
    %66 = math.exp %65 : vector<8x128xf32>
    %cst_15 = arith.constant 1.000000e+00 : f32
    %67 = vector.broadcast %cst_15 : f32 to vector<8x128xf32>
    %68 = arith.addf %67, %66 : vector<8x128xf32>
    %69 = arith.divf %67, %68 : vector<8x128xf32>
    %70 = math.tanh %64 : vector<8x128xf32>
    %71 = vector.extract_strided_slice %69 {offsets = [0, 0], sizes = [8, 32], strides = [1, 1]} : vector<8x128xf32> to vector<8x32xf32>
    %72 = vector.extract_strided_slice %69 {offsets = [0, 32], sizes = [8, 32], strides = [1, 1]} : vector<8x128xf32> to vector<8x32xf32>
    %73 = vector.extract_strided_slice %70 {offsets = [0, 64], sizes = [8, 32], strides = [1, 1]} : vector<8x128xf32> to vector<8x32xf32>
    %74 = vector.extract_strided_slice %69 {offsets = [0, 96], sizes = [8, 32], strides = [1, 1]} : vector<8x128xf32> to vector<8x32xf32>
    %75 = arith.mulf %72, %61 : vector<8x32xf32>
    %76 = arith.mulf %71, %73 : vector<8x32xf32>
    %77 = arith.addf %75, %76 : vector<8x32xf32>
    %78 = math.tanh %77 : vector<8x32xf32>
    %79 = arith.mulf %74, %78 : vector<8x32xf32>
    %c2_i32 = arith.constant 2 : i32
    %80 = vector.broadcast %c2_i32 : i32 to vector<8x1xi32>
    %81 = arith.cmpi sgt, %1, %80 : vector<8x1xi32>
    %82 = vector.shape_cast %81 : vector<8x1xi1> to vector<8x1xi1>
    %83 = vector.broadcast %82 : vector<8x1xi1> to vector<8x32xi1>
    %84 = arith.select %83, %79, %58 : vector<8x32xi1>, vector<8x32xf32>
    %85 = vector.shape_cast %81 : vector<8x1xi1> to vector<8x1xi1>
    %86 = vector.broadcast %85 : vector<8x1xi1> to vector<8x32xi1>
    %87 = arith.select %86, %77, %61 : vector<8x32xi1>, vector<8x32xf32>
    %88 = vector.extract_strided_slice %6 {offsets = [24, 0], sizes = [8, 128], strides = [1, 1]} : vector<64x128xf32> to vector<8x128xf32>
    %cst_16 = arith.constant dense<0.000000e+00> : vector<8x128xf32>
    %89 = tpu.matmul %84, %7, %cst_16 {dimension_numbers = #tpu.dot_dimension_numbers<[1], [0], [0], [1], [0, 0, 1, 1], [], []>} : vector<8x32xf32>, vector<32x128xf32>, vector<8x128xf32> -> vector<8x128xf32>
    %90 = arith.addf %88, %89 : vector<8x128xf32>
    %91 = arith.negf %90 : vector<8x128xf32>
    %92 = math.exp %91 : vector<8x128xf32>
    %cst_17 = arith.constant 1.000000e+00 : f32
    %93 = vector.broadcast %cst_17 : f32 to vector<8x128xf32>
    %94 = arith.addf %93, %92 : vector<8x128xf32>
    %95 = arith.divf %93, %94 : vector<8x128xf32>
    %96 = math.tanh %90 : vector<8x128xf32>
    %97 = vector.extract_strided_slice %95 {offsets = [0, 0], sizes = [8, 32], strides = [1, 1]} : vector<8x128xf32> to vector<8x32xf32>
    %98 = vector.extract_strided_slice %95 {offsets = [0, 32], sizes = [8, 32], strides = [1, 1]} : vector<8x128xf32> to vector<8x32xf32>
    %99 = vector.extract_strided_slice %96 {offsets = [0, 64], sizes = [8, 32], strides = [1, 1]} : vector<8x128xf32> to vector<8x32xf32>
    %100 = vector.extract_strided_slice %95 {offsets = [0, 96], sizes = [8, 32], strides = [1, 1]} : vector<8x128xf32> to vector<8x32xf32>
    %101 = arith.mulf %98, %87 : vector<8x32xf32>
    %102 = arith.mulf %97, %99 : vector<8x32xf32>
    %103 = arith.addf %101, %102 : vector<8x32xf32>
    %104 = math.tanh %103 : vector<8x32xf32>
    %105 = arith.mulf %100, %104 : vector<8x32xf32>
    %c3_i32 = arith.constant 3 : i32
    %106 = vector.broadcast %c3_i32 : i32 to vector<8x1xi32>
    %107 = arith.cmpi sgt, %1, %106 : vector<8x1xi32>
    %108 = vector.shape_cast %107 : vector<8x1xi1> to vector<8x1xi1>
    %109 = vector.broadcast %108 : vector<8x1xi1> to vector<8x32xi1>
    %110 = arith.select %109, %105, %84 : vector<8x32xi1>, vector<8x32xf32>
    %111 = vector.shape_cast %107 : vector<8x1xi1> to vector<8x1xi1>
    %112 = vector.broadcast %111 : vector<8x1xi1> to vector<8x32xi1>
    %113 = arith.select %112, %103, %87 : vector<8x32xi1>, vector<8x32xf32>
    %114 = vector.extract_strided_slice %6 {offsets = [32, 0], sizes = [8, 128], strides = [1, 1]} : vector<64x128xf32> to vector<8x128xf32>
    %cst_18 = arith.constant dense<0.000000e+00> : vector<8x128xf32>
    %115 = tpu.matmul %110, %7, %cst_18 {dimension_numbers = #tpu.dot_dimension_numbers<[1], [0], [0], [1], [0, 0, 1, 1], [], []>} : vector<8x32xf32>, vector<32x128xf32>, vector<8x128xf32> -> vector<8x128xf32>
    %116 = arith.addf %114, %115 : vector<8x128xf32>
    %117 = arith.negf %116 : vector<8x128xf32>
    %118 = math.exp %117 : vector<8x128xf32>
    %cst_19 = arith.constant 1.000000e+00 : f32
    %119 = vector.broadcast %cst_19 : f32 to vector<8x128xf32>
    %120 = arith.addf %119, %118 : vector<8x128xf32>
    %121 = arith.divf %119, %120 : vector<8x128xf32>
    %122 = math.tanh %116 : vector<8x128xf32>
    %123 = vector.extract_strided_slice %121 {offsets = [0, 0], sizes = [8, 32], strides = [1, 1]} : vector<8x128xf32> to vector<8x32xf32>
    %124 = vector.extract_strided_slice %121 {offsets = [0, 32], sizes = [8, 32], strides = [1, 1]} : vector<8x128xf32> to vector<8x32xf32>
    %125 = vector.extract_strided_slice %122 {offsets = [0, 64], sizes = [8, 32], strides = [1, 1]} : vector<8x128xf32> to vector<8x32xf32>
    %126 = vector.extract_strided_slice %121 {offsets = [0, 96], sizes = [8, 32], strides = [1, 1]} : vector<8x128xf32> to vector<8x32xf32>
    %127 = arith.mulf %124, %113 : vector<8x32xf32>
    %128 = arith.mulf %123, %125 : vector<8x32xf32>
    %129 = arith.addf %127, %128 : vector<8x32xf32>
    %130 = math.tanh %129 : vector<8x32xf32>
    %131 = arith.mulf %126, %130 : vector<8x32xf32>
    %c4_i32 = arith.constant 4 : i32
    %132 = vector.broadcast %c4_i32 : i32 to vector<8x1xi32>
    %133 = arith.cmpi sgt, %1, %132 : vector<8x1xi32>
    %134 = vector.shape_cast %133 : vector<8x1xi1> to vector<8x1xi1>
    %135 = vector.broadcast %134 : vector<8x1xi1> to vector<8x32xi1>
    %136 = arith.select %135, %131, %110 : vector<8x32xi1>, vector<8x32xf32>
    %137 = vector.shape_cast %133 : vector<8x1xi1> to vector<8x1xi1>
    %138 = vector.broadcast %137 : vector<8x1xi1> to vector<8x32xi1>
    %139 = arith.select %138, %129, %113 : vector<8x32xi1>, vector<8x32xf32>
    %140 = vector.extract_strided_slice %6 {offsets = [40, 0], sizes = [8, 128], strides = [1, 1]} : vector<64x128xf32> to vector<8x128xf32>
    %cst_20 = arith.constant dense<0.000000e+00> : vector<8x128xf32>
    %141 = tpu.matmul %136, %7, %cst_20 {dimension_numbers = #tpu.dot_dimension_numbers<[1], [0], [0], [1], [0, 0, 1, 1], [], []>} : vector<8x32xf32>, vector<32x128xf32>, vector<8x128xf32> -> vector<8x128xf32>
    %142 = arith.addf %140, %141 : vector<8x128xf32>
    %143 = arith.negf %142 : vector<8x128xf32>
    %144 = math.exp %143 : vector<8x128xf32>
    %cst_21 = arith.constant 1.000000e+00 : f32
    %145 = vector.broadcast %cst_21 : f32 to vector<8x128xf32>
    %146 = arith.addf %145, %144 : vector<8x128xf32>
    %147 = arith.divf %145, %146 : vector<8x128xf32>
    %148 = math.tanh %142 : vector<8x128xf32>
    %149 = vector.extract_strided_slice %147 {offsets = [0, 0], sizes = [8, 32], strides = [1, 1]} : vector<8x128xf32> to vector<8x32xf32>
    %150 = vector.extract_strided_slice %147 {offsets = [0, 32], sizes = [8, 32], strides = [1, 1]} : vector<8x128xf32> to vector<8x32xf32>
    %151 = vector.extract_strided_slice %148 {offsets = [0, 64], sizes = [8, 32], strides = [1, 1]} : vector<8x128xf32> to vector<8x32xf32>
    %152 = vector.extract_strided_slice %147 {offsets = [0, 96], sizes = [8, 32], strides = [1, 1]} : vector<8x128xf32> to vector<8x32xf32>
    %153 = arith.mulf %150, %139 : vector<8x32xf32>
    %154 = arith.mulf %149, %151 : vector<8x32xf32>
    %155 = arith.addf %153, %154 : vector<8x32xf32>
    %156 = math.tanh %155 : vector<8x32xf32>
    %157 = arith.mulf %152, %156 : vector<8x32xf32>
    %c5_i32 = arith.constant 5 : i32
    %158 = vector.broadcast %c5_i32 : i32 to vector<8x1xi32>
    %159 = arith.cmpi sgt, %1, %158 : vector<8x1xi32>
    %160 = vector.shape_cast %159 : vector<8x1xi1> to vector<8x1xi1>
    %161 = vector.broadcast %160 : vector<8x1xi1> to vector<8x32xi1>
    %162 = arith.select %161, %157, %136 : vector<8x32xi1>, vector<8x32xf32>
    %163 = vector.shape_cast %159 : vector<8x1xi1> to vector<8x1xi1>
    %164 = vector.broadcast %163 : vector<8x1xi1> to vector<8x32xi1>
    %165 = arith.select %164, %155, %139 : vector<8x32xi1>, vector<8x32xf32>
    %166 = vector.extract_strided_slice %6 {offsets = [48, 0], sizes = [8, 128], strides = [1, 1]} : vector<64x128xf32> to vector<8x128xf32>
    %cst_22 = arith.constant dense<0.000000e+00> : vector<8x128xf32>
    %167 = tpu.matmul %162, %7, %cst_22 {dimension_numbers = #tpu.dot_dimension_numbers<[1], [0], [0], [1], [0, 0, 1, 1], [], []>} : vector<8x32xf32>, vector<32x128xf32>, vector<8x128xf32> -> vector<8x128xf32>
    %168 = arith.addf %166, %167 : vector<8x128xf32>
    %169 = arith.negf %168 : vector<8x128xf32>
    %170 = math.exp %169 : vector<8x128xf32>
    %cst_23 = arith.constant 1.000000e+00 : f32
    %171 = vector.broadcast %cst_23 : f32 to vector<8x128xf32>
    %172 = arith.addf %171, %170 : vector<8x128xf32>
    %173 = arith.divf %171, %172 : vector<8x128xf32>
    %174 = math.tanh %168 : vector<8x128xf32>
    %175 = vector.extract_strided_slice %173 {offsets = [0, 0], sizes = [8, 32], strides = [1, 1]} : vector<8x128xf32> to vector<8x32xf32>
    %176 = vector.extract_strided_slice %173 {offsets = [0, 32], sizes = [8, 32], strides = [1, 1]} : vector<8x128xf32> to vector<8x32xf32>
    %177 = vector.extract_strided_slice %174 {offsets = [0, 64], sizes = [8, 32], strides = [1, 1]} : vector<8x128xf32> to vector<8x32xf32>
    %178 = vector.extract_strided_slice %173 {offsets = [0, 96], sizes = [8, 32], strides = [1, 1]} : vector<8x128xf32> to vector<8x32xf32>
    %179 = arith.mulf %176, %165 : vector<8x32xf32>
    %180 = arith.mulf %175, %177 : vector<8x32xf32>
    %181 = arith.addf %179, %180 : vector<8x32xf32>
    %182 = math.tanh %181 : vector<8x32xf32>
    %183 = arith.mulf %178, %182 : vector<8x32xf32>
    %c6_i32 = arith.constant 6 : i32
    %184 = vector.broadcast %c6_i32 : i32 to vector<8x1xi32>
    %185 = arith.cmpi sgt, %1, %184 : vector<8x1xi32>
    %186 = vector.shape_cast %185 : vector<8x1xi1> to vector<8x1xi1>
    %187 = vector.broadcast %186 : vector<8x1xi1> to vector<8x32xi1>
    %188 = arith.select %187, %183, %162 : vector<8x32xi1>, vector<8x32xf32>
    %189 = vector.shape_cast %185 : vector<8x1xi1> to vector<8x1xi1>
    %190 = vector.broadcast %189 : vector<8x1xi1> to vector<8x32xi1>
    %191 = arith.select %190, %181, %165 : vector<8x32xi1>, vector<8x32xf32>
    %192 = vector.extract_strided_slice %6 {offsets = [56, 0], sizes = [8, 128], strides = [1, 1]} : vector<64x128xf32> to vector<8x128xf32>
    %cst_24 = arith.constant dense<0.000000e+00> : vector<8x128xf32>
    %193 = tpu.matmul %188, %7, %cst_24 {dimension_numbers = #tpu.dot_dimension_numbers<[1], [0], [0], [1], [0, 0, 1, 1], [], []>} : vector<8x32xf32>, vector<32x128xf32>, vector<8x128xf32> -> vector<8x128xf32>
    %194 = arith.addf %192, %193 : vector<8x128xf32>
    %195 = arith.negf %194 : vector<8x128xf32>
    %196 = math.exp %195 : vector<8x128xf32>
    %cst_25 = arith.constant 1.000000e+00 : f32
    %197 = vector.broadcast %cst_25 : f32 to vector<8x128xf32>
    %198 = arith.addf %197, %196 : vector<8x128xf32>
    %199 = arith.divf %197, %198 : vector<8x128xf32>
    %200 = math.tanh %194 : vector<8x128xf32>
    %201 = vector.extract_strided_slice %199 {offsets = [0, 0], sizes = [8, 32], strides = [1, 1]} : vector<8x128xf32> to vector<8x32xf32>
    %202 = vector.extract_strided_slice %199 {offsets = [0, 32], sizes = [8, 32], strides = [1, 1]} : vector<8x128xf32> to vector<8x32xf32>
    %203 = vector.extract_strided_slice %200 {offsets = [0, 64], sizes = [8, 32], strides = [1, 1]} : vector<8x128xf32> to vector<8x32xf32>
    %204 = vector.extract_strided_slice %199 {offsets = [0, 96], sizes = [8, 32], strides = [1, 1]} : vector<8x128xf32> to vector<8x32xf32>
    %205 = arith.mulf %202, %191 : vector<8x32xf32>
    %206 = arith.mulf %201, %203 : vector<8x32xf32>
    %207 = arith.addf %205, %206 : vector<8x32xf32>
    %208 = math.tanh %207 : vector<8x32xf32>
    %209 = arith.mulf %204, %208 : vector<8x32xf32>
    %c7_i32 = arith.constant 7 : i32
    %210 = vector.broadcast %c7_i32 : i32 to vector<8x1xi32>
    %211 = arith.cmpi sgt, %1, %210 : vector<8x1xi32>
    %212 = vector.shape_cast %211 : vector<8x1xi1> to vector<8x1xi1>
    %213 = vector.broadcast %212 : vector<8x1xi1> to vector<8x32xi1>
    %214 = arith.select %213, %209, %188 : vector<8x32xi1>, vector<8x32xf32>
    %c128 = arith.constant 128 : index
    %c0_26 = arith.constant 0 : index
    %215 = vector.load %arg4[%c128, %c0_26] : memref<224x128xf32, #tpu.memory_space<vmem>>, vector<32x128xf32>
    %cst_27 = arith.constant dense<0.000000e+00> : vector<8x128xf32>
    %216 = tpu.matmul %214, %215, %cst_27 {dimension_numbers = #tpu.dot_dimension_numbers<[1], [0], [0], [1], [0, 0, 1, 1], [], []>} : vector<8x32xf32>, vector<32x128xf32>, vector<8x128xf32> -> vector<8x128xf32>
    %c2 = arith.constant 2 : index
    %c0_28 = arith.constant 0 : index
    %217 = vector.load %arg5[%c2, %c0_28] : memref<8x128xf32, #tpu.memory_space<vmem>>, vector<1x128xf32>
    %218 = vector.broadcast %217 : vector<1x128xf32> to vector<8x128xf32>
    %219 = arith.addf %216, %218 : vector<8x128xf32>
    %220 = vector.extract_strided_slice %219 {offsets = [0, 0], sizes = [8, 32], strides = [1, 1]} : vector<8x128xf32> to vector<8x32xf32>
    %221 = vector.extract_strided_slice %219 {offsets = [0, 32], sizes = [8, 32], strides = [1, 1]} : vector<8x128xf32> to vector<8x32xf32>
    %cst_29 = arith.constant 5.000000e-01 : f32
    %222 = vector.broadcast %cst_29 : f32 to vector<8x32xf32>
    %223 = arith.mulf %222, %221 : vector<8x32xf32>
    %224 = math.exp %223 : vector<8x32xf32>
    %c0_30 = arith.constant 0 : index
    %c0_31 = arith.constant 0 : index
    %225 = vector.load %arg3[%c0_30, %c0_31] : memref<8x32xf32, #tpu.memory_space<vmem>>, vector<8x32xf32>
    %226 = arith.mulf %224, %225 : vector<8x32xf32>
    %227 = arith.addf %220, %226 : vector<8x32xf32>
    %228 = tpu.iota {dimensions = array<i32: 0>} : vector<8x32xi32>
    %c4_i32_32 = arith.constant 4 : i32
    %229 = vector.broadcast %c4_i32_32 : i32 to vector<8x32xi32>
    %230 = arith.cmpi slt, %228, %229 : vector<8x32xi32>
    %cst_33 = arith.constant 1.000000e+00 : f32
    %231 = vector.broadcast %cst_33 : f32 to vector<8x32xf32>
    %232 = arith.addf %231, %221 : vector<8x32xf32>
    %233 = arith.mulf %220, %220 : vector<8x32xf32>
    %234 = arith.subf %232, %233 : vector<8x32xf32>
    %235 = arith.mulf %224, %224 : vector<8x32xf32>
    %236 = arith.subf %234, %235 : vector<8x32xf32>
    %cst_34 = arith.constant 0.000000e+00 : f32
    %237 = vector.broadcast %cst_34 : f32 to vector<8x32xf32>
    %238 = arith.select %230, %236, %237 : vector<8x32xi1>, vector<8x32xf32>
    %239 = vector.shape_cast %238 : vector<8x32xf32> to vector<1x8x32xf32>
    %cst_35 = arith.constant dense<0.000000e+00> : vector<1xf32>
    %240 = vector.multi_reduction <add>, %239, %cst_35 [1, 2] : vector<1x8x32xf32> to vector<1xf32>
    %241 = vector.shape_cast %240 : vector<1xf32> to vector<1x1x1xf32>
    %242 = vector.extract %241[0, 0, 0] : f32 from vector<1x1x1xf32>
    %cst_36 = arith.constant -5.000000e-01 : f32
    %243 = arith.mulf %cst_36, %242 : f32
    %c160 = arith.constant 160 : index
    %c0_37 = arith.constant 0 : index
    %244 = vector.load %arg4[%c160, %c0_37] : memref<224x128xf32, #tpu.memory_space<vmem>>, vector<32x128xf32>
    %cst_38 = arith.constant dense<0.000000e+00> : vector<8x128xf32>
    %245 = tpu.matmul %227, %244, %cst_38 {dimension_numbers = #tpu.dot_dimension_numbers<[1], [0], [0], [1], [0, 0, 1, 1], [], []>} : vector<8x32xf32>, vector<32x128xf32>, vector<8x128xf32> -> vector<8x128xf32>
    %c3 = arith.constant 3 : index
    %c0_39 = arith.constant 0 : index
    %246 = vector.load %arg5[%c3, %c0_39] : memref<8x128xf32, #tpu.memory_space<vmem>>, vector<1x128xf32>
    %247 = vector.broadcast %246 : vector<1x128xf32> to vector<8x128xf32>
    %248 = arith.addf %245, %247 : vector<8x128xf32>
    %249 = vector.extract_strided_slice %248 {offsets = [0, 0], sizes = [8, 32], strides = [1, 1]} : vector<8x128xf32> to vector<8x32xf32>
    %250 = vector.extract_strided_slice %248 {offsets = [0, 32], sizes = [8, 32], strides = [1, 1]} : vector<8x128xf32> to vector<8x32xf32>
    %251 = vector.extract_strided_slice %0 {offsets = [0, 0], sizes = [56, 32], strides = [1, 1]} : vector<64x32xf32> to vector<56x32xf32>
    %c64 = arith.constant 64 : index
    %c0_40 = arith.constant 0 : index
    %252 = vector.load %arg4[%c64, %c0_40] : memref<224x128xf32, #tpu.memory_space<vmem>>, vector<32x128xf32>
    %cst_41 = arith.constant dense<0.000000e+00> : vector<56x128xf32>
    %253 = tpu.matmul %251, %252, %cst_41 {dimension_numbers = #tpu.dot_dimension_numbers<[1], [0], [0], [1], [0, 0, 1, 1], [], []>} : vector<56x32xf32>, vector<32x128xf32>, vector<56x128xf32> -> vector<56x128xf32>
    %c1 = arith.constant 1 : index
    %c0_42 = arith.constant 0 : index
    %254 = vector.load %arg5[%c1, %c0_42] : memref<8x128xf32, #tpu.memory_space<vmem>>, vector<1x128xf32>
    %255 = vector.broadcast %254 : vector<1x128xf32> to vector<56x128xf32>
    %256 = arith.addf %253, %255 : vector<56x128xf32>
    %c96 = arith.constant 96 : index
    %c0_43 = arith.constant 0 : index
    %257 = vector.load %arg4[%c96, %c0_43] : memref<224x128xf32, #tpu.memory_space<vmem>>, vector<32x128xf32>
    %258 = vector.extract_strided_slice %256 {offsets = [0, 0], sizes = [8, 128], strides = [1, 1]} : vector<56x128xf32> to vector<8x128xf32>
    %cst_44 = arith.constant dense<0.000000e+00> : vector<8x128xf32>
    %259 = tpu.matmul %249, %257, %cst_44 {dimension_numbers = #tpu.dot_dimension_numbers<[1], [0], [0], [1], [0, 0, 1, 1], [], []>} : vector<8x32xf32>, vector<32x128xf32>, vector<8x128xf32> -> vector<8x128xf32>
    %260 = arith.addf %258, %259 : vector<8x128xf32>
    %261 = arith.negf %260 : vector<8x128xf32>
    %262 = math.exp %261 : vector<8x128xf32>
    %cst_45 = arith.constant 1.000000e+00 : f32
    %263 = vector.broadcast %cst_45 : f32 to vector<8x128xf32>
    %264 = arith.addf %263, %262 : vector<8x128xf32>
    %265 = arith.divf %263, %264 : vector<8x128xf32>
    %266 = math.tanh %260 : vector<8x128xf32>
    %267 = vector.extract_strided_slice %265 {offsets = [0, 0], sizes = [8, 32], strides = [1, 1]} : vector<8x128xf32> to vector<8x32xf32>
    %268 = vector.extract_strided_slice %265 {offsets = [0, 32], sizes = [8, 32], strides = [1, 1]} : vector<8x128xf32> to vector<8x32xf32>
    %269 = vector.extract_strided_slice %266 {offsets = [0, 64], sizes = [8, 32], strides = [1, 1]} : vector<8x128xf32> to vector<8x32xf32>
    %270 = vector.extract_strided_slice %265 {offsets = [0, 96], sizes = [8, 32], strides = [1, 1]} : vector<8x128xf32> to vector<8x32xf32>
    %271 = arith.mulf %268, %250 : vector<8x32xf32>
    %272 = arith.mulf %267, %269 : vector<8x32xf32>
    %273 = arith.addf %271, %272 : vector<8x32xf32>
    %274 = math.tanh %273 : vector<8x32xf32>
    %275 = arith.mulf %270, %274 : vector<8x32xf32>
    %c0_46 = arith.constant 0 : index
    %c0_47 = arith.constant 0 : index
    %276 = vector.load %arg8[%c0_46, %c0_47] : memref<56x32xf32, #tpu.memory_space<vmem>>, vector<8x32xf32>
    tpu.vector_store %arg8[%c0_46, %c0_47], %275 {strides = array<i32>} : memref<56x32xf32, #tpu.memory_space<vmem>>, vector<8x32xf32>,
    %277 = vector.extract_strided_slice %256 {offsets = [8, 0], sizes = [8, 128], strides = [1, 1]} : vector<56x128xf32> to vector<8x128xf32>
    %cst_48 = arith.constant dense<0.000000e+00> : vector<8x128xf32>
    %278 = tpu.matmul %275, %257, %cst_48 {dimension_numbers = #tpu.dot_dimension_numbers<[1], [0], [0], [1], [0, 0, 1, 1], [], []>} : vector<8x32xf32>, vector<32x128xf32>, vector<8x128xf32> -> vector<8x128xf32>
    %279 = arith.addf %277, %278 : vector<8x128xf32>
    %280 = arith.negf %279 : vector<8x128xf32>
    %281 = math.exp %280 : vector<8x128xf32>
    %cst_49 = arith.constant 1.000000e+00 : f32
    %282 = vector.broadcast %cst_49 : f32 to vector<8x128xf32>
    %283 = arith.addf %282, %281 : vector<8x128xf32>
    %284 = arith.divf %282, %283 : vector<8x128xf32>
    %285 = math.tanh %279 : vector<8x128xf32>
    %286 = vector.extract_strided_slice %284 {offsets = [0, 0], sizes = [8, 32], strides = [1, 1]} : vector<8x128xf32> to vector<8x32xf32>
    %287 = vector.extract_strided_slice %284 {offsets = [0, 32], sizes = [8, 32], strides = [1, 1]} : vector<8x128xf32> to vector<8x32xf32>
    %288 = vector.extract_strided_slice %285 {offsets = [0, 64], sizes = [8, 32], strides = [1, 1]} : vector<8x128xf32> to vector<8x32xf32>
    %289 = vector.extract_strided_slice %284 {offsets = [0, 96], sizes = [8, 32], strides = [1, 1]} : vector<8x128xf32> to vector<8x32xf32>
    %290 = arith.mulf %287, %273 : vector<8x32xf32>
    %291 = arith.mulf %286, %288 : vector<8x32xf32>
    %292 = arith.addf %290, %291 : vector<8x32xf32>
    %293 = math.tanh %292 : vector<8x32xf32>
    %294 = arith.mulf %289, %293 : vector<8x32xf32>
    %c8 = arith.constant 8 : index
    %c0_50 = arith.constant 0 : index
    %295 = vector.load %arg8[%c8, %c0_50] : memref<56x32xf32, #tpu.memory_space<vmem>>, vector<8x32xf32>
    tpu.vector_store %arg8[%c8, %c0_50], %294 {strides = array<i32>} : memref<56x32xf32, #tpu.memory_space<vmem>>, vector<8x32xf32>,
    %296 = vector.extract_strided_slice %256 {offsets = [16, 0], sizes = [8, 128], strides = [1, 1]} : vector<56x128xf32> to vector<8x128xf32>
    %cst_51 = arith.constant dense<0.000000e+00> : vector<8x128xf32>
    %297 = tpu.matmul %294, %257, %cst_51 {dimension_numbers = #tpu.dot_dimension_numbers<[1], [0], [0], [1], [0, 0, 1, 1], [], []>} : vector<8x32xf32>, vector<32x128xf32>, vector<8x128xf32> -> vector<8x128xf32>
    %298 = arith.addf %296, %297 : vector<8x128xf32>
    %299 = arith.negf %298 : vector<8x128xf32>
    %300 = math.exp %299 : vector<8x128xf32>
    %cst_52 = arith.constant 1.000000e+00 : f32
    %301 = vector.broadcast %cst_52 : f32 to vector<8x128xf32>
    %302 = arith.addf %301, %300 : vector<8x128xf32>
    %303 = arith.divf %301, %302 : vector<8x128xf32>
    %304 = math.tanh %298 : vector<8x128xf32>
    %305 = vector.extract_strided_slice %303 {offsets = [0, 0], sizes = [8, 32], strides = [1, 1]} : vector<8x128xf32> to vector<8x32xf32>
    %306 = vector.extract_strided_slice %303 {offsets = [0, 32], sizes = [8, 32], strides = [1, 1]} : vector<8x128xf32> to vector<8x32xf32>
    %307 = vector.extract_strided_slice %304 {offsets = [0, 64], sizes = [8, 32], strides = [1, 1]} : vector<8x128xf32> to vector<8x32xf32>
    %308 = vector.extract_strided_slice %303 {offsets = [0, 96], sizes = [8, 32], strides = [1, 1]} : vector<8x128xf32> to vector<8x32xf32>
    %309 = arith.mulf %306, %292 : vector<8x32xf32>
    %310 = arith.mulf %305, %307 : vector<8x32xf32>
    %311 = arith.addf %309, %310 : vector<8x32xf32>
    %312 = math.tanh %311 : vector<8x32xf32>
    %313 = arith.mulf %308, %312 : vector<8x32xf32>
    %c16 = arith.constant 16 : index
    %c0_53 = arith.constant 0 : index
    %314 = vector.load %arg8[%c16, %c0_53] : memref<56x32xf32, #tpu.memory_space<vmem>>, vector<8x32xf32>
    tpu.vector_store %arg8[%c16, %c0_53], %313 {strides = array<i32>} : memref<56x32xf32, #tpu.memory_space<vmem>>, vector<8x32xf32>,
    %315 = vector.extract_strided_slice %256 {offsets = [24, 0], sizes = [8, 128], strides = [1, 1]} : vector<56x128xf32> to vector<8x128xf32>
    %cst_54 = arith.constant dense<0.000000e+00> : vector<8x128xf32>
    %316 = tpu.matmul %313, %257, %cst_54 {dimension_numbers = #tpu.dot_dimension_numbers<[1], [0], [0], [1], [0, 0, 1, 1], [], []>} : vector<8x32xf32>, vector<32x128xf32>, vector<8x128xf32> -> vector<8x128xf32>
    %317 = arith.addf %315, %316 : vector<8x128xf32>
    %318 = arith.negf %317 : vector<8x128xf32>
    %319 = math.exp %318 : vector<8x128xf32>
    %cst_55 = arith.constant 1.000000e+00 : f32
    %320 = vector.broadcast %cst_55 : f32 to vector<8x128xf32>
    %321 = arith.addf %320, %319 : vector<8x128xf32>
    %322 = arith.divf %320, %321 : vector<8x128xf32>
    %323 = math.tanh %317 : vector<8x128xf32>
    %324 = vector.extract_strided_slice %322 {offsets = [0, 0], sizes = [8, 32], strides = [1, 1]} : vector<8x128xf32> to vector<8x32xf32>
    %325 = vector.extract_strided_slice %322 {offsets = [0, 32], sizes = [8, 32], strides = [1, 1]} : vector<8x128xf32> to vector<8x32xf32>
    %326 = vector.extract_strided_slice %323 {offsets = [0, 64], sizes = [8, 32], strides = [1, 1]} : vector<8x128xf32> to vector<8x32xf32>
    %327 = vector.extract_strided_slice %322 {offsets = [0, 96], sizes = [8, 32], strides = [1, 1]} : vector<8x128xf32> to vector<8x32xf32>
    %328 = arith.mulf %325, %311 : vector<8x32xf32>
    %329 = arith.mulf %324, %326 : vector<8x32xf32>
    %330 = arith.addf %328, %329 : vector<8x32xf32>
    %331 = math.tanh %330 : vector<8x32xf32>
    %332 = arith.mulf %327, %331 : vector<8x32xf32>
    %c24 = arith.constant 24 : index
    %c0_56 = arith.constant 0 : index
    %333 = vector.load %arg8[%c24, %c0_56] : memref<56x32xf32, #tpu.memory_space<vmem>>, vector<8x32xf32>
    tpu.vector_store %arg8[%c24, %c0_56], %332 {strides = array<i32>} : memref<56x32xf32, #tpu.memory_space<vmem>>, vector<8x32xf32>,
    %334 = vector.extract_strided_slice %256 {offsets = [32, 0], sizes = [8, 128], strides = [1, 1]} : vector<56x128xf32> to vector<8x128xf32>
    %cst_57 = arith.constant dense<0.000000e+00> : vector<8x128xf32>
    %335 = tpu.matmul %332, %257, %cst_57 {dimension_numbers = #tpu.dot_dimension_numbers<[1], [0], [0], [1], [0, 0, 1, 1], [], []>} : vector<8x32xf32>, vector<32x128xf32>, vector<8x128xf32> -> vector<8x128xf32>
    %336 = arith.addf %334, %335 : vector<8x128xf32>
    %337 = arith.negf %336 : vector<8x128xf32>
    %338 = math.exp %337 : vector<8x128xf32>
    %cst_58 = arith.constant 1.000000e+00 : f32
    %339 = vector.broadcast %cst_58 : f32 to vector<8x128xf32>
    %340 = arith.addf %339, %338 : vector<8x128xf32>
    %341 = arith.divf %339, %340 : vector<8x128xf32>
    %342 = math.tanh %336 : vector<8x128xf32>
    %343 = vector.extract_strided_slice %341 {offsets = [0, 0], sizes = [8, 32], strides = [1, 1]} : vector<8x128xf32> to vector<8x32xf32>
    %344 = vector.extract_strided_slice %341 {offsets = [0, 32], sizes = [8, 32], strides = [1, 1]} : vector<8x128xf32> to vector<8x32xf32>
    %345 = vector.extract_strided_slice %342 {offsets = [0, 64], sizes = [8, 32], strides = [1, 1]} : vector<8x128xf32> to vector<8x32xf32>
    %346 = vector.extract_strided_slice %341 {offsets = [0, 96], sizes = [8, 32], strides = [1, 1]} : vector<8x128xf32> to vector<8x32xf32>
    %347 = arith.mulf %344, %330 : vector<8x32xf32>
    %348 = arith.mulf %343, %345 : vector<8x32xf32>
    %349 = arith.addf %347, %348 : vector<8x32xf32>
    %350 = math.tanh %349 : vector<8x32xf32>
    %351 = arith.mulf %346, %350 : vector<8x32xf32>
    %c32_59 = arith.constant 32 : index
    %c0_60 = arith.constant 0 : index
    %352 = vector.load %arg8[%c32_59, %c0_60] : memref<56x32xf32, #tpu.memory_space<vmem>>, vector<8x32xf32>
    tpu.vector_store %arg8[%c32_59, %c0_60], %351 {strides = array<i32>} : memref<56x32xf32, #tpu.memory_space<vmem>>, vector<8x32xf32>,
    %353 = vector.extract_strided_slice %256 {offsets = [40, 0], sizes = [8, 128], strides = [1, 1]} : vector<56x128xf32> to vector<8x128xf32>
    %cst_61 = arith.constant dense<0.000000e+00> : vector<8x128xf32>
    %354 = tpu.matmul %351, %257, %cst_61 {dimension_numbers = #tpu.dot_dimension_numbers<[1], [0], [0], [1], [0, 0, 1, 1], [], []>} : vector<8x32xf32>, vector<32x128xf32>, vector<8x128xf32> -> vector<8x128xf32>
    %355 = arith.addf %353, %354 : vector<8x128xf32>
    %356 = arith.negf %355 : vector<8x128xf32>
    %357 = math.exp %356 : vector<8x128xf32>
    %cst_62 = arith.constant 1.000000e+00 : f32
    %358 = vector.broadcast %cst_62 : f32 to vector<8x128xf32>
    %359 = arith.addf %358, %357 : vector<8x128xf32>
    %360 = arith.divf %358, %359 : vector<8x128xf32>
    %361 = math.tanh %355 : vector<8x128xf32>
    %362 = vector.extract_strided_slice %360 {offsets = [0, 0], sizes = [8, 32], strides = [1, 1]} : vector<8x128xf32> to vector<8x32xf32>
    %363 = vector.extract_strided_slice %360 {offsets = [0, 32], sizes = [8, 32], strides = [1, 1]} : vector<8x128xf32> to vector<8x32xf32>
    %364 = vector.extract_strided_slice %361 {offsets = [0, 64], sizes = [8, 32], strides = [1, 1]} : vector<8x128xf32> to vector<8x32xf32>
    %365 = vector.extract_strided_slice %360 {offsets = [0, 96], sizes = [8, 32], strides = [1, 1]} : vector<8x128xf32> to vector<8x32xf32>
    %366 = arith.mulf %363, %349 : vector<8x32xf32>
    %367 = arith.mulf %362, %364 : vector<8x32xf32>
    %368 = arith.addf %366, %367 : vector<8x32xf32>
    %369 = math.tanh %368 : vector<8x32xf32>
    %370 = arith.mulf %365, %369 : vector<8x32xf32>
    %c40 = arith.constant 40 : index
    %c0_63 = arith.constant 0 : index
    %371 = vector.load %arg8[%c40, %c0_63] : memref<56x32xf32, #tpu.memory_space<vmem>>, vector<8x32xf32>
    tpu.vector_store %arg8[%c40, %c0_63], %370 {strides = array<i32>} : memref<56x32xf32, #tpu.memory_space<vmem>>, vector<8x32xf32>,
    %372 = vector.extract_strided_slice %256 {offsets = [48, 0], sizes = [8, 128], strides = [1, 1]} : vector<56x128xf32> to vector<8x128xf32>
    %cst_64 = arith.constant dense<0.000000e+00> : vector<8x128xf32>
    %373 = tpu.matmul %370, %257, %cst_64 {dimension_numbers = #tpu.dot_dimension_numbers<[1], [0], [0], [1], [0, 0, 1, 1], [], []>} : vector<8x32xf32>, vector<32x128xf32>, vector<8x128xf32> -> vector<8x128xf32>
    %374 = arith.addf %372, %373 : vector<8x128xf32>
    %375 = arith.negf %374 : vector<8x128xf32>
    %376 = math.exp %375 : vector<8x128xf32>
    %cst_65 = arith.constant 1.000000e+00 : f32
    %377 = vector.broadcast %cst_65 : f32 to vector<8x128xf32>
    %378 = arith.addf %377, %376 : vector<8x128xf32>
    %379 = arith.divf %377, %378 : vector<8x128xf32>
    %380 = math.tanh %374 : vector<8x128xf32>
    %381 = vector.extract_strided_slice %379 {offsets = [0, 0], sizes = [8, 32], strides = [1, 1]} : vector<8x128xf32> to vector<8x32xf32>
    %382 = vector.extract_strided_slice %379 {offsets = [0, 32], sizes = [8, 32], strides = [1, 1]} : vector<8x128xf32> to vector<8x32xf32>
    %383 = vector.extract_strided_slice %380 {offsets = [0, 64], sizes = [8, 32], strides = [1, 1]} : vector<8x128xf32> to vector<8x32xf32>
    %384 = vector.extract_strided_slice %379 {offsets = [0, 96], sizes = [8, 32], strides = [1, 1]} : vector<8x128xf32> to vector<8x32xf32>
    %385 = arith.mulf %382, %368 : vector<8x32xf32>
    %386 = arith.mulf %381, %383 : vector<8x32xf32>
    %387 = arith.addf %385, %386 : vector<8x32xf32>
    %388 = math.tanh %387 : vector<8x32xf32>
    %389 = arith.mulf %384, %388 : vector<8x32xf32>
    %c48 = arith.constant 48 : index
    %c0_66 = arith.constant 0 : index
    %390 = vector.load %arg8[%c48, %c0_66] : memref<56x32xf32, #tpu.memory_space<vmem>>, vector<8x32xf32>
    tpu.vector_store %arg8[%c48, %c0_66], %389 {strides = array<i32>} : memref<56x32xf32, #tpu.memory_space<vmem>>, vector<8x32xf32>,
    %c0_67 = arith.constant 0 : index
    %c0_68 = arith.constant 0 : index
    %391 = vector.load %arg8[%c0_67, %c0_68] : memref<56x32xf32, #tpu.memory_space<vmem>>, vector<56x32xf32>
    %c192 = arith.constant 192 : index
    %c0_69 = arith.constant 0 : index
    %392 = vector.load %arg4[%c192, %c0_69] : memref<224x128xf32, #tpu.memory_space<vmem>>, vector<32x128xf32>
    %cst_70 = arith.constant dense<0.000000e+00> : vector<56x128xf32>
    %393 = tpu.matmul %391, %392, %cst_70 {dimension_numbers = #tpu.dot_dimension_numbers<[1], [0], [0], [1], [0, 0, 1, 1], [], []>} : vector<56x32xf32>, vector<32x128xf32>, vector<56x128xf32> -> vector<56x128xf32>
    %c4 = arith.constant 4 : index
    %c0_71 = arith.constant 0 : index
    %394 = vector.load %arg5[%c4, %c0_71] : memref<8x128xf32, #tpu.memory_space<vmem>>, vector<1x128xf32>
    %395 = vector.broadcast %394 : vector<1x128xf32> to vector<56x128xf32>
    %396 = arith.addf %393, %395 : vector<56x128xf32>
    %cst_72 = arith.constant dense<0xFF800000> : vector<56xf32>
    %397 = vector.multi_reduction <maximumf>, %396, %cst_72 [1] : vector<56x128xf32> to vector<56xf32>
    %398 = vector.shape_cast %397 : vector<56xf32> to vector<56x1xf32>
    %399 = vector.broadcast %398 : vector<56x1xf32> to vector<56x128xf32>
    %400 = arith.subf %396, %399 : vector<56x128xf32>
    %401 = math.exp %400 : vector<56x128xf32>
    %cst_73 = arith.constant dense<0.000000e+00> : vector<56xf32>
    %402 = vector.multi_reduction <add>, %401, %cst_73 [1] : vector<56x128xf32> to vector<56xf32>
    %403 = vector.shape_cast %402 : vector<56xf32> to vector<56x1xf32>
    %404 = math.log %403 : vector<56x1xf32>
    %405 = arith.addf %398, %404 : vector<56x1xf32>
    %c0_74 = arith.constant 0 : index
    %c0_75 = arith.constant 0 : index
    %406 = vector.load %arg2[%c0_74, %c0_75] : memref<56x1xi32, #tpu.memory_space<vmem>>, vector<56x1xi32>
    %407 = tpu.iota {dimensions = array<i32: 1>} : vector<56x128xi32>
    %408 = vector.broadcast %406 : vector<56x1xi32> to vector<56x128xi32>
    %409 = arith.cmpi eq, %407, %408 : vector<56x128xi32>
    %cst_76 = arith.constant 0.000000e+00 : f32
    %410 = vector.broadcast %cst_76 : f32 to vector<56x128xf32>
    %411 = arith.select %409, %396, %410 : vector<56x128xi1>, vector<56x128xf32>
    %cst_77 = arith.constant dense<0.000000e+00> : vector<56xf32>
    %412 = vector.multi_reduction <add>, %411, %cst_77 [1] : vector<56x128xf32> to vector<56xf32>
    %413 = vector.shape_cast %412 : vector<56xf32> to vector<56x1xf32>
    %414 = arith.subf %413, %405 : vector<56x1xf32>
    %c0_i32_78 = arith.constant 0 : i32
    %415 = vector.broadcast %c0_i32_78 : i32 to vector<56x1xi32>
    %416 = arith.cmpi ne, %406, %415 : vector<56x1xi32>
    %417 = arith.extui %416 : vector<56x1xi1> to vector<56x1xi32>
    %418 = arith.sitofp %417 : vector<56x1xi32> to vector<56x1xf32>
    %419 = arith.mulf %414, %418 : vector<56x1xf32>
    %420 = vector.shape_cast %419 : vector<56x1xf32> to vector<1x56x1xf32>
    %cst_79 = arith.constant dense<0.000000e+00> : vector<1xf32>
    %421 = vector.multi_reduction <add>, %420, %cst_79 [1, 2] : vector<1x56x1xf32> to vector<1xf32>
    %422 = vector.shape_cast %421 : vector<1xf32> to vector<1x1x1xf32>
    %423 = vector.extract %422[0, 0, 0] : f32 from vector<1x1x1xf32>
    %424 = vector.shape_cast %418 : vector<56x1xf32> to vector<1x56x1xf32>
    %cst_80 = arith.constant dense<0.000000e+00> : vector<1xf32>
    %425 = vector.multi_reduction <add>, %424, %cst_80 [1, 2] : vector<1x56x1xf32> to vector<1xf32>
    %426 = vector.shape_cast %425 : vector<1xf32> to vector<1x1x1xf32>
    %427 = vector.extract %426[0, 0, 0] : f32 from vector<1x1x1xf32>
    %cst_81 = arith.constant 1.000000e+00 : f32
    %428 = arith.maximumf %427, %cst_81 : f32
    %429 = arith.divf %423, %428 : f32
    %430 = vector.broadcast %398 : vector<56x1xf32> to vector<56x128xf32>
    %431 = arith.cmpf oeq, %396, %430 : vector<56x128xf32>
    %c128_i32 = arith.constant 128 : i32
    %432 = vector.broadcast %c128_i32 : i32 to vector<56x128xi32>
    %433 = arith.select %431, %407, %432 : vector<56x128xi1>, vector<56x128xi32>
    %cst_82 = arith.constant dense<2147483647> : vector<56xi32>
    %434 = vector.multi_reduction <minsi>, %433, %cst_82 [1] : vector<56x128xi32> to vector<56xi32>
    %435 = vector.shape_cast %434 : vector<56xi32> to vector<56x1xi32>
    %c0_83 = arith.constant 0 : index
    %c0_84 = arith.constant 0 : index
    %436 = vector.load %arg7[%c0_83, %c0_84] : memref<56x1xi32, #tpu.memory_space<vmem>>, vector<56x1xi32>
    tpu.vector_store %arg7[%c0_83, %c0_84], %435 {strides = array<i32>} : memref<56x1xi32, #tpu.memory_space<vmem>>, vector<56x1xi32>,
    %437 = tpu.iota {dimensions = array<i32: 1>} : vector<1x2xi32>
    %c0_i32_85 = arith.constant 0 : i32
    %438 = vector.broadcast %c0_i32_85 : i32 to vector<1x2xi32>
    %439 = arith.cmpi eq, %437, %438 : vector<1x2xi32>
    %440 = vector.broadcast %243 : f32 to vector<1x2xf32>
    %441 = vector.broadcast %429 : f32 to vector<1x2xf32>
    %442 = arith.select %439, %440, %441 : vector<1x2xi1>, vector<1x2xf32>
    %c0_86 = arith.constant 0 : index
    %c0_87 = arith.constant 0 : index
    %443 = vector.load %arg6[%c0_86, %c0_87] : memref<1x2xf32, #tpu.memory_space<vmem>>, vector<1x2xf32>
    tpu.vector_store %arg6[%c0_86, %c0_87], %442 {strides = array<i32>} : memref<1x2xf32, #tpu.memory_space<vmem>>, vector<1x2xf32>,
    return
  }
}

</mosaic_0001>

<llo_original>
// kernel: gaussian_vae_forward.1
$region0: #{gaussian_vae_forward.1}
  #allocation0 [shape = 'u32[]', space=smem, size = 0x4, offset = 0x4, fixed_abs, tag = 'smem constant byte address 0x4 - core index']
  #allocation1 [shape = 'u32[144,128]{1,0:T(1,128)}', space=vmem, size = 0x12000, scoped, tag = 'internal scratch']
  #allocation2 [shape = 'f32[56,32]{1,0:T(8,128)}', space=vmem, size = 0x7000, scoped, tag = 'scratch operand']
  %s0 = inlined_call_operand.vmem [shape: s32[8,1], index: 0, kind: input, shape index: {}]
  %s1 = inlined_call_operand.vmem [shape: f32[64,32], index: 1, kind: input, shape index: {}]
  %s2 = inlined_call_operand.vmem [shape: s32[56,1], index: 2, kind: input, shape index: {}]
  %s3 = inlined_call_operand.vmem [shape: f32[8,32], index: 3, kind: input, shape index: {}]
  %s4 = inlined_call_operand.vmem [shape: f32[224,128], index: 4, kind: input, shape index: {}]
  %s5 = inlined_call_operand.vmem [shape: f32[8,128], index: 5, kind: input, shape index: {}]
  %s6 = inlined_call_operand.vmem [shape: f32[1,2], index: 6, kind: output, shape index: {0}]
  %s7 = inlined_call_operand.vmem [shape: s32[56,1], index: 7, kind: output, shape index: {1}]
  %8 = xla_tuple %s6, %s7
  %s9 = sld [smem:[#allocation0]]
  $region42: #{gaussian_vae_forward.1} parent=0
    _
  %s11 = ssub.s32 1, %s9
  %s12 = scalar_select 0, %s11, %s9
  // Predicated region
  $region2: #{gaussian_vae_forward.1} parent=0 // pred_check
    _
  $region3: #{gaussian_vae_forward.1} parent=0 // pred_check_branch
    %14 = sbr.rel (0) target = $region5
  $region4: #{gaussian_vae_forward.1} parent=0 // pred_region
    _
  $region5: #{gaussian_vae_forward.1} parent=0 // pred_fallthru
    _
  // Predicated region
  $region6: #{gaussian_vae_forward.1} parent=0 // pred_check
    _
  $region7: #{gaussian_vae_forward.1} parent=0 // pred_check_branch
    %16 = sbr.rel (0) target = $region9
  $region8: #{gaussian_vae_forward.1} parent=0 // pred_region
    _
  $region9: #{gaussian_vae_forward.1} parent=0 // pred_fallthru
    _
  // Predicated region
  $region10: #{gaussian_vae_forward.1} parent=0 // pred_check
    _
  $region11: #{gaussian_vae_forward.1} parent=0 // pred_check_branch
    %18 = sbr.rel (0) target = $region13
  $region12: #{gaussian_vae_forward.1} parent=0 // pred_region
    _
  $region13: #{gaussian_vae_forward.1} parent=0 // pred_fallthru
    _
  // Predicated region
  $region14: #{gaussian_vae_forward.1} parent=0 // pred_check
    _
  $region15: #{gaussian_vae_forward.1} parent=0 // pred_check_branch
    %20 = sbr.rel (0) target = $region17
  $region16: #{gaussian_vae_forward.1} parent=0 // pred_region
    _
  $region17: #{gaussian_vae_forward.1} parent=0 // pred_fallthru
    _
  // Predicated region
  $region18: #{gaussian_vae_forward.1} parent=0 // pred_check
    _
  $region19: #{gaussian_vae_forward.1} parent=0 // pred_check_branch
    %22 = sbr.rel (0) target = $region21
  $region20: #{gaussian_vae_forward.1} parent=0 // pred_region
    _
  $region21: #{gaussian_vae_forward.1} parent=0 // pred_fallthru
    _
  // Predicated region
  $region22: #{gaussian_vae_forward.1} parent=0 // pred_check
    _
  $region23: #{gaussian_vae_forward.1} parent=0 // pred_check_branch
    %24 = sbr.rel (0) target = $region25
  $region24: #{gaussian_vae_forward.1} parent=0 // pred_region
    _
  $region25: #{gaussian_vae_forward.1} parent=0 // pred_fallthru
    _
  %v25 = vld [vmem:[%s1] sm:$0xff]
  %v26 = vld [vmem:[%s1 + $0x8] sm:$0xff]
  %v27 = vld [vmem:[%s1 + $0x10] sm:$0xff]
  %v28 = vld [vmem:[%s1 + $0x18] sm:$0xff]
  %v29 = vld [vmem:[%s1 + $0x20] sm:$0xff]
  %v30 = vld [vmem:[%s1 + $0x28] sm:$0xff]
  %v31 = vld [vmem:[%s1 + $0x30] sm:$0xff]
  %v32 = vld [vmem:[%s1 + $0x38] sm:$0xff]
  %v33 = vld [vmem:[%s0] sm:$0xff]
  %v34 = vld [vmem:[%s4] sm:$0xff]
  %v35 = vld [vmem:[%s4 + $0x8] sm:$0xff]
  %v36 = vld [vmem:[%s4 + $0x10] sm:$0xff]
  %v37 = vld [vmem:[%s4 + $0x18] sm:$0xff]
  %v38 = vld [vmem:[%s5] sm:$0x1]
  %v39 = vlaneseq
  %v40 = vshrl.u32 %v39, 7
  %v41 = vsub.s32 0, %v40
  %v42 = vrot.slane %v38, %v41
  %vm43 = vcmask 261120
  %v45 = vsel %vm43, %v25, 0
  %v48 = vsel %vm43, %v26, 0
  %v51 = vsel %vm43, %v27, 0
  %v54 = vsel %vm43, %v28, 0
  %v57 = vsel %vm43, %v29, 0
  %v60 = vsel %vm43, %v30, 0
  %v63 = vsel %vm43, %v31, 0
  %v66 = vsel %vm43, %v32, 0
  %68 = vmatprep.subr.mxu0 0.0
  %69 = vmatpush1.msra.mxu0 %v34
  %70 = vmatprep.subr.mxu0 0.0
  %71 = vmatpush1.msra.mxu0 %v35
  %72 = vmatprep.subr.mxu0 0.0
  %73 = vmatpush1.msra.mxu0 %v36
  %74 = vmatprep.subr.mxu0 0.0
  %75 = vmatpush1.msra.mxu0 %v37
  %76 = vmatprep.subr.mxu0 0.0
  %77 = vmatpush1.msra.mxu0 0.0
  %78 = vmatprep.subr.mxu0 0.0
  %79 = vmatpush1.msra.mxu0 0.0
  %80 = vmatprep.subr.mxu0 0.0
  %81 = vmatpush1.msra.mxu0 0.0
  %82 = vmatprep.subr.mxu0 0.0
  %83 = vmatpush1.msra.mxu0 0.0
  %84 = vmatprep.subr.mxu0 0.0
  %85 = vmatpush1.msra.mxu0 0.0
  %86 = vmatprep.subr.mxu0 0.0
  %87 = vmatpush1.msra.mxu0 0.0
  %88 = vmatprep.subr.mxu0 0.0
  %89 = vmatpush1.msra.mxu0 0.0
  %90 = vmatprep.subr.mxu0 0.0
  %91 = vmatpush1.msra.mxu0 0.0
  %92 = vmatprep.subr.mxu0 0.0
  %93 = vmatpush1.msra.mxu0 0.0
  %94 = vmatprep.subr.mxu0 0.0
  %95 = vmatpush1.msra.mxu0 0.0
  %96 = vmatprep.subr.mxu0 0.0
  %97 = vmatpush1.msra.mxu0 0.0
  %98 = vmatprep.subr.mxu0 0.0
  %99 = vmatpush1.msra.mxu0 0.0
  %100 = vmatprep.subr.mxu0 0.0
  %101 = vmatpush1.msra.mxu0 0.0
  %102 = vmatprep.subr.mxu0 0.0
  %103 = vmatpush1.msra.mxu0 0.0
  %104 = vmatprep.subr.mxu0 0.0
  %105 = vmatpush1.msra.mxu0 0.0
  %106 = vmatprep.subr.mxu0 0.0
  %107 = vmatpush1.msra.mxu0 0.0
  %108 = vmatprep.subr.mxu0 0.0
  %109 = vmatpush1.msra.mxu0 0.0
  %110 = vmatprep.subr.mxu0 0.0
  %111 = vmatpush1.msra.mxu0 0.0
  %112 = vmatprep.subr.mxu0 0.0
  %113 = vmatpush1.msra.mxu0 0.0
  %114 = vmatprep.subr.mxu0 0.0
  %115 = vmatpush1.msra.mxu0 0.0
  %116 = vmatprep.subr.mxu0 0.0
  %117 = vmatpush1.msra.mxu0 0.0
  %118 = vmatprep.subr.mxu0 0.0
  %119 = vmatpush1.msra.mxu0 0.0
  %120 = vmatprep.subr.mxu0 0.0
  %121 = vmatpush1.msra.mxu0 0.0
  %122 = vmatprep.subr.mxu0 0.0
  %123 = vmatpush1.msra.mxu0 0.0
  %124 = vmatprep.subr.mxu0 0.0
  %125 = vmatpush1.msra.mxu0 0.0
  %126 = vmatprep.subr.mxu0 0.0
  %127 = vmatpush1.msra.mxu0 0.0
  %128 = vmatprep.subr.mxu0 0.0
  %129 = vmatpush1.msra.mxu0 0.0
  %130 = vmatprep.subr.mxu0 0.0
  %131 = vmatpush1.msra.mxu0 0.0
  %132 = vmatprep.mubr.f32.mxu0 0.0
  %133 = vmatmul.mubr.f32.gmra.mrb[0].mxu0 %v45
  %v134 = vpop.f32.mrb[0].mxu0
  %v135 = vadd.f32 %v42, %v134
  %v136 = vpop.f32.mrb[0].mxu0
  %137 = vmatprep.mubr.f32.mxu0 0.0
  %138 = vmatmul.mubr.f32.gmra.mrb[0].mxu0 %v48
  %v139 = vpop.f32.mrb[0].mxu0
  %v140 = vadd.f32 %v42, %v139
  %v141 = vpop.f32.mrb[0].mxu0
  %142 = vmatprep.mubr.f32.mxu0 0.0
  %143 = vmatmul.mubr.f32.gmra.mrb[0].mxu0 %v51
  %v144 = vpop.f32.mrb[0].mxu0
  %v145 = vadd.f32 %v42, %v144
  %v146 = vpop.f32.mrb[0].mxu0
  %147 = vmatprep.mubr.f32.mxu0 0.0
  %148 = vmatmul.mubr.f32.gmra.mrb[0].mxu0 %v54
  %v149 = vpop.f32.mrb[0].mxu0
  %v150 = vadd.f32 %v42, %v149
  %v151 = vpop.f32.mrb[0].mxu0
  %152 = vmatprep.mubr.f32.mxu0 0.0
  %153 = vmatmul.mubr.f32.gmra.mrb[0].mxu0 %v57
  %v154 = vpop.f32.mrb[0].mxu0
  %v155 = vadd.f32 %v42, %v154
  %v156 = vpop.f32.mrb[0].mxu0
  %157 = vmatprep.mubr.f32.mxu0 0.0
  %158 = vmatmul.mubr.f32.gmra.mrb[0].mxu0 %v60
  %v159 = vpop.f32.mrb[0].mxu0
  %v160 = vadd.f32 %v42, %v159
  %v161 = vpop.f32.mrb[0].mxu0
  %162 = vmatprep.mubr.f32.mxu0 0.0
  %163 = vmatmul.mubr.f32.gmra.mrb[0].mxu0 %v63
  %v164 = vpop.f32.mrb[0].mxu0
  %v165 = vadd.f32 %v42, %v164
  %v166 = vpop.f32.mrb[0].mxu0
  %167 = vmatprep.mubr.f32.mxu0 0.0
  %168 = vmatmul.mubr.f32.gmra.mrb[0].mxu0 %v66
  %v169 = vpop.f32.mrb[0].mxu0
  %v170 = vadd.f32 %v42, %v169
  %v171 = vpop.f32.mrb[0].mxu0
  %172 = vdwg.mxu0
  %v173 = vld [vmem:[%s4 + $0x20] sm:$0xff]
  %v174 = vld [vmem:[%s4 + $0x28] sm:$0xff]
  %v175 = vld [vmem:[%s4 + $0x30] sm:$0xff]
  %v176 = vld [vmem:[%s4 + $0x38] sm:$0xff]
  %v178 = vsel %vm43, 0.0, 0
  %180 = vmatprep.subr.mxu0 0.0
  %181 = vmatpush1.msra.mxu0 %v173
  %182 = vmatprep.subr.mxu0 0.0
  %183 = vmatpush1.msra.mxu0 %v174
  %184 = vmatprep.subr.mxu0 0.0
  %185 = vmatpush1.msra.mxu0 %v175
  %186 = vmatprep.subr.mxu0 0.0
  %187 = vmatpush1.msra.mxu0 %v176
  %188 = vmatprep.subr.mxu0 0.0
  %189 = vmatpush1.msra.mxu0 0.0
  %190 = vmatprep.subr.mxu0 0.0
  %191 = vmatpush1.msra.mxu0 0.0
  %192 = vmatprep.subr.mxu0 0.0
  %193 = vmatpush1.msra.mxu0 0.0
  %194 = vmatprep.subr.mxu0 0.0
  %195 = vmatpush1.msra.mxu0 0.0
  %196 = vmatprep.subr.mxu0 0.0
  %197 = vmatpush1.msra.mxu0 0.0
  %198 = vmatprep.subr.mxu0 0.0
  %199 = vmatpush1.msra.mxu0 0.0
  %200 = vmatprep.subr.mxu0 0.0
  %201 = vmatpush1.msra.mxu0 0.0
  %202 = vmatprep.subr.mxu0 0.0
  %203 = vmatpush1.msra.mxu0 0.0
  %204 = vmatprep.subr.mxu0 0.0
  %205 = vmatpush1.msra.mxu0 0.0
  %206 = vmatprep.subr.mxu0 0.0
  %207 = vmatpush1.msra.mxu0 0.0
  %208 = vmatprep.subr.mxu0 0.0
  %209 = vmatpush1.msra.mxu0 0.0
  %210 = vmatprep.subr.mxu0 0.0
  %211 = vmatpush1.msra.mxu0 0.0
  %212 = vmatprep.subr.mxu0 0.0
  %213 = vmatpush1.msra.mxu0 0.0
  %214 = vmatprep.subr.mxu0 0.0
  %215 = vmatpush1.msra.mxu0 0.0
  %216 = vmatprep.subr.mxu0 0.0
  %217 = vmatpush1.msra.mxu0 0.0
  %218 = vmatprep.subr.mxu0 0.0
  %219 = vmatpush1.msra.mxu0 0.0
  %220 = vmatprep.subr.mxu0 0.0
  %221 = vmatpush1.msra.mxu0 0.0
  %222 = vmatprep.subr.mxu0 0.0
  %223 = vmatpush1.msra.mxu0 0.0
  %224 = vmatprep.subr.mxu0 0.0
  %225 = vmatpush1.msra.mxu0 0.0
  %226 = vmatprep.subr.mxu0 0.0
  %227 = vmatpush1.msra.mxu0 0.0
  %228 = vmatprep.subr.mxu0 0.0
  %229 = vmatpush1.msra.mxu0 0.0
  %230 = vmatprep.subr.mxu0 0.0
  %231 = vmatpush1.msra.mxu0 0.0
  %232 = vmatprep.subr.mxu0 0.0
  %233 = vmatpush1.msra.mxu0 0.0
  %234 = vmatprep.subr.mxu0 0.0
  %235 = vmatpush1.msra.mxu0 0.0
  %236 = vmatprep.subr.mxu0 0.0
  %237 = vmatpush1.msra.mxu0 0.0
  %238 = vmatprep.subr.mxu0 0.0
  %239 = vmatpush1.msra.mxu0 0.0
  %240 = vmatprep.subr.mxu0 0.0
  %241 = vmatpush1.msra.mxu0 0.0
  %242 = vmatprep.subr.mxu0 0.0
  %243 = vmatpush1.msra.mxu0 0.0
  %244 = vmatprep.mubr.f32.mxu0 0.0
  %245 = vmatmul.mubr.f32.gmra.mrb[0].mxu0 %v178
  %v246 = vpop.f32.mrb[0].mxu0
  %v247 = vadd.f32 0.0, %v246
  %v248 = vpop.f32.mrb[0].mxu0
  %249 = vdwg.mxu0
  %v250 = vadd.f32 %v135, %v247
  %v251 = vxor.u32 %v250, 2147483648
  %v252 = vmul.f32 %v251, 1.442695
  %v253 = vpow.pop %v252
  %v254 = vadd.f32 %v253, 1.0
  %v255 = vrcp.pop %v254
  %v256 = vmul.f32 1.0, %v255
  %v257 = vtanh.pop %v250
  %v258 = vmul.f32 %v256, 0.0
  %260 = vrot.lane.b32.xlu0 %v257, 64
  %v261 = vpop.permute.xlu0 %260
  %v263 = vmul.f32 %v256, %v261
  %265 = vrot.lane.b32.xlu0 %v263, 32
  %v266 = vpop.permute.xlu0 %265
  %v268 = vadd.f32 %v258, %v266
  %v269 = vtanh.pop %v268
  %271 = vrot.lane.b32.xlu0 %v269, 64
  %v272 = vpop.permute.xlu0 %271
  %v274 = vmul.f32 %v256, %v272
  %vm275 = vcmp.gt.s32.totalorder %v33, 0
  %v276 = vsel %vm275, 1, 0
  %277 = vset.pattern.permute.xlu0 0
  %278 = vperm.xlu0 %277, %v276
  %v279 = vpop.permute.xlu0 %278
  %vm280 = vcmp.eq.s32.totalorder %v279, 1
  %v281 = vsel %vm280, %v274, 0.0
  %v282 = vsel %vm280, %v268, 0.0
  %284 = vrot.lane.b32.xlu0 %v281, 32
  %v285 = vpop.permute.xlu0 %284
  %v286 = vsel %vm43, %v285, 0
  %288 = vmatprep.subr.mxu0 0.0
  %289 = vmatpush1.msra.mxu0 %v173
  %290 = vmatprep.subr.mxu0 0.0
  %291 = vmatpush1.msra.mxu0 %v174
  %292 = vmatprep.subr.mxu0 0.0
  %293 = vmatpush1.msra.mxu0 %v175
  %294 = vmatprep.subr.mxu0 0.0
  %295 = vmatpush1.msra.mxu0 %v176
  %296 = vmatprep.subr.mxu0 0.0
  %297 = vmatpush1.msra.mxu0 0.0
  %298 = vmatprep.subr.mxu0 0.0
  %299 = vmatpush1.msra.mxu0 0.0
  %300 = vmatprep.subr.mxu0 0.0
  %301 = vmatpush1.msra.mxu0 0.0
  %302 = vmatprep.subr.mxu0 0.0
  %303 = vmatpush1.msra.mxu0 0.0
  %304 = vmatprep.subr.mxu0 0.0
  %305 = vmatpush1.msra.mxu0 0.0
  %306 = vmatprep.subr.mxu0 0.0
  %307 = vmatpush1.msra.mxu0 0.0
  %308 = vmatprep.subr.mxu0 0.0
  %309 = vmatpush1.msra.mxu0 0.0
  %310 = vmatprep.subr.mxu0 0.0
  %311 = vmatpush1.msra.mxu0 0.0
  %312 = vmatprep.subr.mxu0 0.0
  %313 = vmatpush1.msra.mxu0 0.0
  %314 = vmatprep.subr.mxu0 0.0
  %315 = vmatpush1.msra.mxu0 0.0
  %316 = vmatprep.subr.mxu0 0.0
  %317 = vmatpush1.msra.mxu0 0.0
  %318 = vmatprep.subr.mxu0 0.0
  %319 = vmatpush1.msra.mxu0 0.0
  %320 = vmatprep.subr.mxu0 0.0
  %321 = vmatpush1.msra.mxu0 0.0
  %322 = vmatprep.subr.mxu0 0.0
  %323 = vmatpush1.msra.mxu0 0.0
  %324 = vmatprep.subr.mxu0 0.0
  %325 = vmatpush1.msra.mxu0 0.0
  %326 = vmatprep.subr.mxu0 0.0
  %327 = vmatpush1.msra.mxu0 0.0
  %328 = vmatprep.subr.mxu0 0.0
  %329 = vmatpush1.msra.mxu0 0.0
  %330 = vmatprep.subr.mxu0 0.0
  %331 = vmatpush1.msra.mxu0 0.0
  %332 = vmatprep.subr.mxu0 0.0
  %333 = vmatpush1.msra.mxu0 0.0
  %334 = vmatprep.subr.mxu0 0.0
  %335 = vmatpush1.msra.mxu0 0.0
  %336 = vmatprep.subr.mxu0 0.0
  %337 = vmatpush1.msra.mxu0 0.0
  %338 = vmatprep.subr.mxu0 0.0
  %339 = vmatpush1.msra.mxu0 0.0
  %340 = vmatprep.subr.mxu0 0.0
  %341 = vmatpush1.msra.mxu0 0.0
  %342 = vmatprep.subr.mxu0 0.0
  %343 = vmatpush1.msra.mxu0 0.0
  %344 = vmatprep.subr.mxu0 0.0
  %345 = vmatpush1.msra.mxu0 0.0
  %346 = vmatprep.subr.mxu0 0.0
  %347 = vmatpush1.msra.mxu0 0.0
  %348 = vmatprep.subr.mxu0 0.0
  %349 = vmatpush1.msra.mxu0 0.0
  %350 = vmatprep.subr.mxu0 0.0
  %351 = vmatpush1.msra.mxu0 0.0
  %352 = vmatprep.mubr.f32.mxu0 0.0
  %353 = vmatmul.mubr.f32.gmra.mrb[0].mxu0 %v286
  %v354 = vpop.f32.mrb[0].mxu0
  %v355 = vadd.f32 0.0, %v354
  %v356 = vpop.f32.mrb[0].mxu0
  %357 = vdwg.mxu0
  %v358 = vadd.f32 %v140, %v355
  %v359 = vxor.u32 %v358, 2147483648
  %v360 = vmul.f32 %v359, 1.442695
  %v361 = vpow.pop %v360
  %v362 = vadd.f32 %v361, 1.0
  %v363 = vrcp.pop %v362
  %v364 = vmul.f32 1.0, %v363
  %v365 = vtanh.pop %v358
  %v366 = vmul.f32 %v364, %v282
  %368 = vrot.lane.b32.xlu0 %v365, 64
  %v369 = vpop.permute.xlu0 %368
  %v371 = vmul.f32 %v364, %v369
  %373 = vrot.lane.b32.xlu0 %v371, 32
  %v374 = vpop.permute.xlu0 %373
  %v376 = vadd.f32 %v366, %v374
  %v377 = vtanh.pop %v376
  %379 = vrot.lane.b32.xlu0 %v377, 64
  %v380 = vpop.permute.xlu0 %379
  %v382 = vmul.f32 %v364, %v380
  %vm383 = vcmp.gt.s32.totalorder %v33, 1
  %v384 = vsel %vm383, 1, 0
  %385 = vset.pattern.permute.xlu0 0
  %386 = vperm.xlu0 %385, %v384
  %v387 = vpop.permute.xlu0 %386
  %vm388 = vcmp.eq.s32.totalorder %v387, 1
  %v389 = vsel %vm388, %v382, %v281
  %v390 = vsel %vm388, %v376, %v282
  %392 = vrot.lane.b32.xlu0 %v389, 32
  %v393 = vpop.permute.xlu0 %392
  %v394 = vsel %vm43, %v393, 0
  %396 = vmatprep.subr.mxu0 0.0
  %397 = vmatpush1.msra.mxu0 %v173
  %398 = vmatprep.subr.mxu0 0.0
  %399 = vmatpush1.msra.mxu0 %v174
  %400 = vmatprep.subr.mxu0 0.0
  %401 = vmatpush1.msra.mxu0 %v175
  %402 = vmatprep.subr.mxu0 0.0
  %403 = vmatpush1.msra.mxu0 %v176
  %404 = vmatprep.subr.mxu0 0.0
  %405 = vmatpush1.msra.mxu0 0.0
  %406 = vmatprep.subr.mxu0 0.0
  %407 = vmatpush1.msra.mxu0 0.0
  %408 = vmatprep.subr.mxu0 0.0
  %409 = vmatpush1.msra.mxu0 0.0
  %410 = vmatprep.subr.mxu0 0.0
  %411 = vmatpush1.msra.mxu0 0.0
  %412 = vmatprep.subr.mxu0 0.0
  %413 = vmatpush1.msra.mxu0 0.0
  %414 = vmatprep.subr.mxu0 0.0
  %415 = vmatpush1.msra.mxu0 0.0
  %416 = vmatprep.subr.mxu0 0.0
  %417 = vmatpush1.msra.mxu0 0.0
  %418 = vmatprep.subr.mxu0 0.0
  %419 = vmatpush1.msra.mxu0 0.0
  %420 = vmatprep.subr.mxu0 0.0
  %421 = vmatpush1.msra.mxu0 0.0
  %422 = vmatprep.subr.mxu0 0.0
  %423 = vmatpush1.msra.mxu0 0.0
  %424 = vmatprep.subr.mxu0 0.0
  %425 = vmatpush1.msra.mxu0 0.0
  %426 = vmatprep.subr.mxu0 0.0
  %427 = vmatpush1.msra.mxu0 0.0
  %428 = vmatprep.subr.mxu0 0.0
  %429 = vmatpush1.msra.mxu0 0.0
  %430 = vmatprep.subr.mxu0 0.0
  %431 = vmatpush1.msra.mxu0 0.0
  %432 = vmatprep.subr.mxu0 0.0
  %433 = vmatpush1.msra.mxu0 0.0
  %434 = vmatprep.subr.mxu0 0.0
  %435 = vmatpush1.msra.mxu0 0.0
  %436 = vmatprep.subr.mxu0 0.0
  %437 = vmatpush1.msra.mxu0 0.0
  %438 = vmatprep.subr.mxu0 0.0
  %439 = vmatpush1.msra.mxu0 0.0
  %440 = vmatprep.subr.mxu0 0.0
  %441 = vmatpush1.msra.mxu0 0.0
  %442 = vmatprep.subr.mxu0 0.0
  %443 = vmatpush1.msra.mxu0 0.0
  %444 = vmatprep.subr.mxu0 0.0
  %445 = vmatpush1.msra.mxu0 0.0
  %446 = vmatprep.subr.mxu0 0.0
  %447 = vmatpush1.msra.mxu0 0.0
  %448 = vmatprep.subr.mxu0 0.0
  %449 = vmatpush1.msra.mxu0 0.0
  %450 = vmatprep.subr.mxu0 0.0
  %451 = vmatpush1.msra.mxu0 0.0
  %452 = vmatprep.subr.mxu0 0.0
  %453 = vmatpush1.msra.mxu0 0.0
  %454 = vmatprep.subr.mxu0 0.0
  %455 = vmatpush1.msra.mxu0 0.0
  %456 = vmatprep.subr.mxu0 0.0
  %457 = vmatpush1.msra.mxu0 0.0
  %458 = vmatprep.subr.mxu0 0.0
  %459 = vmatpush1.msra.mxu0 0.0
  %460 = vmatprep.mubr.f32.mxu0 0.0
  %461 = vmatmul.mubr.f32.gmra.mrb[0].mxu0 %v394
  %v462 = vpop.f32.mrb[0].mxu0
  %v463 = vadd.f32 0.0, %v462
  %v464 = vpop.f32.mrb[0].mxu0
  %465 = vdwg.mxu0
  %v466 = vadd.f32 %v145, %v463
  %v467 = vxor.u32 %v466, 2147483648
  %v468 = vmul.f32 %v467, 1.442695
  %v469 = vpow.pop %v468
  %v470 = vadd.f32 %v469, 1.0
  %v471 = vrcp.pop %v470
  %v472 = vmul.f32 1.0, %v471
  %v473 = vtanh.pop %v466
  %v474 = vmul.f32 %v472, %v390
  %476 = vrot.lane.b32.xlu0 %v473, 64
  %v477 = vpop.permute.xlu0 %476
  %v479 = vmul.f32 %v472, %v477
  %481 = vrot.lane.b32.xlu0 %v479, 32
  %v482 = vpop.permute.xlu0 %481
  %v484 = vadd.f32 %v474, %v482
  %v485 = vtanh.pop %v484
  %487 = vrot.lane.b32.xlu0 %v485, 64
  %v488 = vpop.permute.xlu0 %487
  %v490 = vmul.f32 %v472, %v488
  %vm491 = vcmp.gt.s32.totalorder %v33, 2
  %v492 = vsel %vm491, 1, 0
  %493 = vset.pattern.permute.xlu0 0
  %494 = vperm.xlu0 %493, %v492
  %v495 = vpop.permute.xlu0 %494
  %vm496 = vcmp.eq.s32.totalorder %v495, 1
  %v497 = vsel %vm496, %v490, %v389
  %v498 = vsel %vm496, %v484, %v390
  %500 = vrot.lane.b32.xlu0 %v497, 32
  %v501 = vpop.permute.xlu0 %500
  %v502 = vsel %vm43, %v501, 0
  %504 = vmatprep.subr.mxu0 0.0
  %505 = vmatpush1.msra.mxu0 %v173
  %506 = vmatprep.subr.mxu0 0.0
  %507 = vmatpush1.msra.mxu0 %v174
  %508 = vmatprep.subr.mxu0 0.0
  %509 = vmatpush1.msra.mxu0 %v175
  %510 = vmatprep.subr.mxu0 0.0
  %511 = vmatpush1.msra.mxu0 %v176
  %512 = vmatprep.subr.mxu0 0.0
  %513 = vmatpush1.msra.mxu0 0.0
  %514 = vmatprep.subr.mxu0 0.0
  %515 = vmatpush1.msra.mxu0 0.0
  %516 = vmatprep.subr.mxu0 0.0
  %517 = vmatpush1.msra.mxu0 0.0
  %518 = vmatprep.subr.mxu0 0.0
  %519 = vmatpush1.msra.mxu0 0.0
  %520 = vmatprep.subr.mxu0 0.0
  %521 = vmatpush1.msra.mxu0 0.0
  %522 = vmatprep.subr.mxu0 0.0
  %523 = vmatpush1.msra.mxu0 0.0
  %524 = vmatprep.subr.mxu0 0.0
  %525 = vmatpush1.msra.mxu0 0.0
  %526 = vmatprep.subr.mxu0 0.0
  %527 = vmatpush1.msra.mxu0 0.0
  %528 = vmatprep.subr.mxu0 0.0
  %529 = vmatpush1.msra.mxu0 0.0
  %530 = vmatprep.subr.mxu0 0.0
  %531 = vmatpush1.msra.mxu0 0.0
  %532 = vmatprep.subr.mxu0 0.0
  %533 = vmatpush1.msra.mxu0 0.0
  %534 = vmatprep.subr.mxu0 0.0
  %535 = vmatpush1.msra.mxu0 0.0
  %536 = vmatprep.subr.mxu0 0.0
  %537 = vmatpush1.msra.mxu0 0.0
  %538 = vmatprep.subr.mxu0 0.0
  %539 = vmatpush1.msra.mxu0 0.0
  %540 = vmatprep.subr.mxu0 0.0
  %541 = vmatpush1.msra.mxu0 0.0
  %542 = vmatprep.subr.mxu0 0.0
  %543 = vmatpush1.msra.mxu0 0.0
  %544 = vmatprep.subr.mxu0 0.0
  %545 = vmatpush1.msra.mxu0 0.0
  %546 = vmatprep.subr.mxu0 0.0
  %547 = vmatpush1.msra.mxu0 0.0
  %548 = vmatprep.subr.mxu0 0.0
  %549 = vmatpush1.msra.mxu0 0.0
  %550 = vmatprep.subr.mxu0 0.0
  %551 = vmatpush1.msra.mxu0 0.0
  %552 = vmatprep.subr.mxu0 0.0
  %553 = vmatpush1.msra.mxu0 0.0
  %554 = vmatprep.subr.mxu0 0.0
  %555 = vmatpush1.msra.mxu0 0.0
  %556 = vmatprep.subr.mxu0 0.0
  %557 = vmatpush1.msra.mxu0 0.0
  %558 = vmatprep.subr.mxu0 0.0
  %559 = vmatpush1.msra.mxu0 0.0
  %560 = vmatprep.subr.mxu0 0.0
  %561 = vmatpush1.msra.mxu0 0.0
  %562 = vmatprep.subr.mxu0 0.0
  %563 = vmatpush1.msra.mxu0 0.0
  %564 = vmatprep.subr.mxu0 0.0
  %565 = vmatpush1.msra.mxu0 0.0
  %566 = vmatprep.subr.mxu0 0.0
  %567 = vmatpush1.msra.mxu0 0.0
  %568 = vmatprep.mubr.f32.mxu0 0.0
  %569 = vmatmul.mubr.f32.gmra.mrb[0].mxu0 %v502
  %v570 = vpop.f32.mrb[0].mxu0
  %v571 = vadd.f32 0.0, %v570
  %v572 = vpop.f32.mrb[0].mxu0
  %573 = vdwg.mxu0
  %v574 = vadd.f32 %v150, %v571
  %v575 = vxor.u32 %v574, 2147483648
  %v576 = vmul.f32 %v575, 1.442695
  %v577 = vpow.pop %v576
  %v578 = vadd.f32 %v577, 1.0
  %v579 = vrcp.pop %v578
  %v580 = vmul.f32 1.0, %v579
  %v581 = vtanh.pop %v574
  %v582 = vmul.f32 %v580, %v498
  %584 = vrot.lane.b32.xlu0 %v581, 64
  %v585 = vpop.permute.xlu0 %584
  %v587 = vmul.f32 %v580, %v585
  %589 = vrot.lane.b32.xlu0 %v587, 32
  %v590 = vpop.permute.xlu0 %589
  %v592 = vadd.f32 %v582, %v590
  %v593 = vtanh.pop %v592
  %595 = vrot.lane.b32.xlu0 %v593, 64
  %v596 = vpop.permute.xlu0 %595
  %v598 = vmul.f32 %v580, %v596
  %vm599 = vcmp.gt.s32.totalorder %v33, 3
  %v600 = vsel %vm599, 1, 0
  %601 = vset.pattern.permute.xlu0 0
  %602 = vperm.xlu0 %601, %v600
  %v603 = vpop.permute.xlu0 %602
  %vm604 = vcmp.eq.s32.totalorder %v603, 1
  %v605 = vsel %vm604, %v598, %v497
  %v606 = vsel %vm604, %v592, %v498
  %608 = vrot.lane.b32.xlu0 %v605, 32
  %v609 = vpop.permute.xlu0 %608
  %v610 = vsel %vm43, %v609, 0
  %612 = vmatprep.subr.mxu0 0.0
  %613 = vmatpush1.msra.mxu0 %v173
  %614 = vmatprep.subr.mxu0 0.0
  %615 = vmatpush1.msra.mxu0 %v174
  %616 = vmatprep.subr.mxu0 0.0
  %617 = vmatpush1.msra.mxu0 %v175
  %618 = vmatprep.subr.mxu0 0.0
  %619 = vmatpush1.msra.mxu0 %v176
  %620 = vmatprep.subr.mxu0 0.0
  %621 = vmatpush1.msra.mxu0 0.0
  %622 = vmatprep.subr.mxu0 0.0
  %623 = vmatpush1.msra.mxu0 0.0
  %624 = vmatprep.subr.mxu0 0.0
  %625 = vmatpush1.msra.mxu0 0.0
  %626 = vmatprep.subr.mxu0 0.0
  %627 = vmatpush1.msra.mxu0 0.0
  %628 = vmatprep.subr.mxu0 0.0
  %629 = vmatpush1.msra.mxu0 0.0
  %630 = vmatprep.subr.mxu0 0.0
  %631 = vmatpush1.msra.mxu0 0.0
  %632 = vmatprep.subr.mxu0 0.0
  %633 = vmatpush1.msra.mxu0 0.0
  %634 = vmatprep.subr.mxu0 0.0
  %635 = vmatpush1.msra.mxu0 0.0
  %636 = vmatprep.subr.mxu0 0.0
  %637 = vmatpush1.msra.mxu0 0.0
  %638 = vmatprep.subr.mxu0 0.0
  %639 = vmatpush1.msra.mxu0 0.0
  %640 = vmatprep.subr.mxu0 0.0
  %641 = vmatpush1.msra.mxu0 0.0
  %642 = vmatprep.subr.mxu0 0.0
  %643 = vmatpush1.msra.mxu0 0.0
  %644 = vmatprep.subr.mxu0 0.0
  %645 = vmatpush1.msra.mxu0 0.0
  %646 = vmatprep.subr.mxu0 0.0
  %647 = vmatpush1.msra.mxu0 0.0
  %648 = vmatprep.subr.mxu0 0.0
  %649 = vmatpush1.msra.mxu0 0.0
  %650 = vmatprep.subr.mxu0 0.0
  %651 = vmatpush1.msra.mxu0 0.0
  %652 = vmatprep.subr.mxu0 0.0
  %653 = vmatpush1.msra.mxu0 0.0
  %654 = vmatprep.subr.mxu0 0.0
  %655 = vmatpush1.msra.mxu0 0.0
  %656 = vmatprep.subr.mxu0 0.0
  %657 = vmatpush1.msra.mxu0 0.0
  %658 = vmatprep.subr.mxu0 0.0
  %659 = vmatpush1.msra.mxu0 0.0
  %660 = vmatprep.subr.mxu0 0.0
  %661 = vmatpush1.msra.mxu0 0.0
  %662 = vmatprep.subr.mxu0 0.0
  %663 = vmatpush1.msra.mxu0 0.0
  %664 = vmatprep.subr.mxu0 0.0
  %665 = vmatpush1.msra.mxu0 0.0
  %666 = vmatprep.subr.mxu0 0.0
  %667 = vmatpush1.msra.mxu0 0.0
  %668 = vmatprep.subr.mxu0 0.0
  %669 = vmatpush1.msra.mxu0 0.0
  %670 = vmatprep.subr.mxu0 0.0
  %671 = vmatpush1.msra.mxu0 0.0
  %672 = vmatprep.subr.mxu0 0.0
  %673 = vmatpush1.msra.mxu0 0.0
  %674 = vmatprep.subr.mxu0 0.0
  %675 = vmatpush1.msra.mxu0 0.0
  %676 = vmatprep.mubr.f32.mxu0 0.0
  %677 = vmatmul.mubr.f32.gmra.mrb[0].mxu0 %v610
  %v678 = vpop.f32.mrb[0].mxu0
  %v679 = vadd.f32 0.0, %v678
  %v680 = vpop.f32.mrb[0].mxu0
  %681 = vdwg.mxu0
  %v682 = vadd.f32 %v155, %v679
  %v683 = vxor.u32 %v682, 2147483648
  %v684 = vmul.f32 %v683, 1.442695
  %v685 = vpow.pop %v684
  %v686 = vadd.f32 %v685, 1.0
  %v687 = vrcp.pop %v686
  %v688 = vmul.f32 1.0, %v687
  %v689 = vtanh.pop %v682
  %v690 = vmul.f32 %v688, %v606
  %692 = vrot.lane.b32.xlu0 %v689, 64
  %v693 = vpop.permute.xlu0 %692
  %v695 = vmul.f32 %v688, %v693
  %697 = vrot.lane.b32.xlu0 %v695, 32
  %v698 = vpop.permute.xlu0 %697
  %v700 = vadd.f32 %v690, %v698
  %v701 = vtanh.pop %v700
  %703 = vrot.lane.b32.xlu0 %v701, 64
  %v704 = vpop.permute.xlu0 %703
  %v706 = vmul.f32 %v688, %v704
  %vm707 = vcmp.gt.s32.totalorder %v33, 4
  %v708 = vsel %vm707, 1, 0
  %709 = vset.pattern.permute.xlu0 0
  %710 = vperm.xlu0 %709, %v708
  %v711 = vpop.permute.xlu0 %710
  %vm712 = vcmp.eq.s32.totalorder %v711, 1
  %v713 = vsel %vm712, %v706, %v605
  %v714 = vsel %vm712, %v700, %v606
  %716 = vrot.lane.b32.xlu0 %v713, 32
  %v717 = vpop.permute.xlu0 %716
  %v718 = vsel %vm43, %v717, 0
  %720 = vmatprep.subr.mxu0 0.0
  %721 = vmatpush1.msra.mxu0 %v173
  %722 = vmatprep.subr.mxu0 0.0
  %723 = vmatpush1.msra.mxu0 %v174
  %724 = vmatprep.subr.mxu0 0.0
  %725 = vmatpush1.msra.mxu0 %v175
  %726 = vmatprep.subr.mxu0 0.0
  %727 = vmatpush1.msra.mxu0 %v176
  %728 = vmatprep.subr.mxu0 0.0
  %729 = vmatpush1.msra.mxu0 0.0
  %730 = vmatprep.subr.mxu0 0.0
  %731 = vmatpush1.msra.mxu0 0.0
  %732 = vmatprep.subr.mxu0 0.0
  %733 = vmatpush1.msra.mxu0 0.0
  %734 = vmatprep.subr.mxu0 0.0
  %735 = vmatpush1.msra.mxu0 0.0
  %736 = vmatprep.subr.mxu0 0.0
  %737 = vmatpush1.msra.mxu0 0.0
  %738 = vmatprep.subr.mxu0 0.0
  %739 = vmatpush1.msra.mxu0 0.0
  %740 = vmatprep.subr.mxu0 0.0
  %741 = vmatpush1.msra.mxu0 0.0
  %742 = vmatprep.subr.mxu0 0.0
  %743 = vmatpush1.msra.mxu0 0.0
  %744 = vmatprep.subr.mxu0 0.0
  %745 = vmatpush1.msra.mxu0 0.0
  %746 = vmatprep.subr.mxu0 0.0
  %747 = vmatpush1.msra.mxu0 0.0
  %748 = vmatprep.subr.mxu0 0.0
  %749 = vmatpush1.msra.mxu0 0.0
  %750 = vmatprep.subr.mxu0 0.0
  %751 = vmatpush1.msra.mxu0 0.0
  %752 = vmatprep.subr.mxu0 0.0
  %753 = vmatpush1.msra.mxu0 0.0
  %754 = vmatprep.subr.mxu0 0.0
  %755 = vmatpush1.msra.mxu0 0.0
  %756 = vmatprep.subr.mxu0 0.0
  %757 = vmatpush1.msra.mxu0 0.0
  %758 = vmatprep.subr.mxu0 0.0
  %759 = vmatpush1.msra.mxu0 0.0
  %760 = vmatprep.subr.mxu0 0.0
  %761 = vmatpush1.msra.mxu0 0.0
  %762 = vmatprep.subr.mxu0 0.0
  %763 = vmatpush1.msra.mxu0 0.0
  %764 = vmatprep.subr.mxu0 0.0
  %765 = vmatpush1.msra.mxu0 0.0
  %766 = vmatprep.subr.mxu0 0.0
  %767 = vmatpush1.msra.mxu0 0.0
  %768 = vmatprep.subr.mxu0 0.0
  %769 = vmatpush1.msra.mxu0 0.0
  %770 = vmatprep.subr.mxu0 0.0
  %771 = vmatpush1.msra.mxu0 0.0
  %772 = vmatprep.subr.mxu0 0.0
  %773 = vmatpush1.msra.mxu0 0.0
  %774 = vmatprep.subr.mxu0 0.0
  %775 = vmatpush1.msra.mxu0 0.0
  %776 = vmatprep.subr.mxu0 0.0
  %777 = vmatpush1.msra.mxu0 0.0
  %778 = vmatprep.subr.mxu0 0.0
  %779 = vmatpush1.msra.mxu0 0.0
  %780 = vmatprep.subr.mxu0 0.0
  %781 = vmatpush1.msra.mxu0 0.0
  %782 = vmatprep.subr.mxu0 0.0
  %783 = vmatpush1.msra.mxu0 0.0
  %784 = vmatprep.mubr.f32.mxu0 0.0
  %785 = vmatmul.mubr.f32.gmra.mrb[0].mxu0 %v718
  %v786 = vpop.f32.mrb[0].mxu0
  %v787 = vadd.f32 0.0, %v786
  %v788 = vpop.f32.mrb[0].mxu0
  %789 = vdwg.mxu0
  %v790 = vadd.f32 %v160, %v787
  %v791 = vxor.u32 %v790, 2147483648
  %v792 = vmul.f32 %v791, 1.442695
  %v793 = vpow.pop %v792
  %v794 = vadd.f32 %v793, 1.0
  %v795 = vrcp.pop %v794
  %v796 = vmul.f32 1.0, %v795
  %v797 = vtanh.pop %v790
  %v798 = vmul.f32 %v796, %v714
  %800 = vrot.lane.b32.xlu0 %v797, 64
  %v801 = vpop.permute.xlu0 %800
  %v803 = vmul.f32 %v796, %v801
  %805 = vrot.lane.b32.xlu0 %v803, 32
  %v806 = vpop.permute.xlu0 %805
  %v808 = vadd.f32 %v798, %v806
  %v809 = vtanh.pop %v808
  %811 = vrot.lane.b32.xlu0 %v809, 64
  %v812 = vpop.permute.xlu0 %811
  %v814 = vmul.f32 %v796, %v812
  %vm815 = vcmp.gt.s32.totalorder %v33, 5
  %v816 = vsel %vm815, 1, 0
  %817 = vset.pattern.permute.xlu0 0
  %818 = vperm.xlu0 %817, %v816
  %v819 = vpop.permute.xlu0 %818
  %vm820 = vcmp.eq.s32.totalorder %v819, 1
  %v821 = vsel %vm820, %v814, %v713
  %v822 = vsel %vm820, %v808, %v714
  %824 = vrot.lane.b32.xlu0 %v821, 32
  %v825 = vpop.permute.xlu0 %824
  %v826 = vsel %vm43, %v825, 0
  %828 = vmatprep.subr.mxu0 0.0
  %829 = vmatpush1.msra.mxu0 %v173
  %830 = vmatprep.subr.mxu0 0.0
  %831 = vmatpush1.msra.mxu0 %v174
  %832 = vmatprep.subr.mxu0 0.0
  %833 = vmatpush1.msra.mxu0 %v175
  %834 = vmatprep.subr.mxu0 0.0
  %835 = vmatpush1.msra.mxu0 %v176
  %836 = vmatprep.subr.mxu0 0.0
  %837 = vmatpush1.msra.mxu0 0.0
  %838 = vmatprep.subr.mxu0 0.0
  %839 = vmatpush1.msra.mxu0 0.0
  %840 = vmatprep.subr.mxu0 0.0
  %841 = vmatpush1.msra.mxu0 0.0
  %842 = vmatprep.subr.mxu0 0.0
  %843 = vmatpush1.msra.mxu0 0.0
  %844 = vmatprep.subr.mxu0 0.0
  %845 = vmatpush1.msra.mxu0 0.0
  %846 = vmatprep.subr.mxu0 0.0
  %847 = vmatpush1.msra.mxu0 0.0
  %848 = vmatprep.subr.mxu0 0.0
  %849 = vmatpush1.msra.mxu0 0.0
  %850 = vmatprep.subr.mxu0 0.0
  %851 = vmatpush1.msra.mxu0 0.0
  %852 = vmatprep.subr.mxu0 0.0
  %853 = vmatpush1.msra.mxu0 0.0
  %854 = vmatprep.subr.mxu0 0.0
  %855 = vmatpush1.msra.mxu0 0.0
  %856 = vmatprep.subr.mxu0 0.0
  %857 = vmatpush1.msra.mxu0 0.0
  %858 = vmatprep.subr.mxu0 0.0
  %859 = vmatpush1.msra.mxu0 0.0
  %860 = vmatprep.subr.mxu0 0.0
  %861 = vmatpush1.msra.mxu0 0.0
  %862 = vmatprep.subr.mxu0 0.0
  %863 = vmatpush1.msra.mxu0 0.0
  %864 = vmatprep.subr.mxu0 0.0
  %865 = vmatpush1.msra.mxu0 0.0
  %866 = vmatprep.subr.mxu0 0.0
  %867 = vmatpush1.msra.mxu0 0.0
  %868 = vmatprep.subr.mxu0 0.0
  %869 = vmatpush1.msra.mxu0 0.0
  %870 = vmatprep.subr.mxu0 0.0
  %871 = vmatpush1.msra.mxu0 0.0
  %872 = vmatprep.subr.mxu0 0.0
  %873 = vmatpush1.msra.mxu0 0.0
  %874 = vmatprep.subr.mxu0 0.0
  %875 = vmatpush1.msra.mxu0 0.0
  %876 = vmatprep.subr.mxu0 0.0
  %877 = vmatpush1.msra.mxu0 0.0
  %878 = vmatprep.subr.mxu0 0.0
  %879 = vmatpush1.msra.mxu0 0.0
  %880 = vmatprep.subr.mxu0 0.0
  %881 = vmatpush1.msra.mxu0 0.0
  %882 = vmatprep.subr.mxu0 0.0
  %883 = vmatpush1.msra.mxu0 0.0
  %884 = vmatprep.subr.mxu0 0.0
  %885 = vmatpush1.msra.mxu0 0.0
  %886 = vmatprep.subr.mxu0 0.0
  %887 = vmatpush1.msra.mxu0 0.0
  %888 = vmatprep.subr.mxu0 0.0
  %889 = vmatpush1.msra.mxu0 0.0
  %890 = vmatprep.subr.mxu0 0.0
  %891 = vmatpush1.msra.mxu0 0.0
  %892 = vmatprep.mubr.f32.mxu0 0.0
  %893 = vmatmul.mubr.f32.gmra.mrb[0].mxu0 %v826
  %v894 = vpop.f32.mrb[0].mxu0
  %v895 = vadd.f32 0.0, %v894
  %v896 = vpop.f32.mrb[0].mxu0
  %897 = vdwg.mxu0
  %v898 = vadd.f32 %v165, %v895
  %v899 = vxor.u32 %v898, 2147483648
  %v900 = vmul.f32 %v899, 1.442695
  %v901 = vpow.pop %v900
  %v902 = vadd.f32 %v901, 1.0
  %v903 = vrcp.pop %v902
  %v904 = vmul.f32 1.0, %v903
  %v905 = vtanh.pop %v898
  %v906 = vmul.f32 %v904, %v822
  %908 = vrot.lane.b32.xlu0 %v905, 64
  %v909 = vpop.permute.xlu0 %908
  %v911 = vmul.f32 %v904, %v909
  %913 = vrot.lane.b32.xlu0 %v911, 32
  %v914 = vpop.permute.xlu0 %913
  %v916 = vadd.f32 %v906, %v914
  %v917 = vtanh.pop %v916
  %919 = vrot.lane.b32.xlu0 %v917, 64
  %v920 = vpop.permute.xlu0 %919
  %v922 = vmul.f32 %v904, %v920
  %vm923 = vcmp.gt.s32.totalorder %v33, 6
  %v924 = vsel %vm923, 1, 0
  %925 = vset.pattern.permute.xlu0 0
  %926 = vperm.xlu0 %925, %v924
  %v927 = vpop.permute.xlu0 %926
  %vm928 = vcmp.eq.s32.totalorder %v927, 1
  %v929 = vsel %vm928, %v922, %v821
  %v930 = vsel %vm928, %v916, %v822
  %932 = vrot.lane.b32.xlu0 %v929, 32
  %v933 = vpop.permute.xlu0 %932
  %v934 = vsel %vm43, %v933, 0
  %936 = vmatprep.subr.mxu0 0.0
  %937 = vmatpush1.msra.mxu0 %v173
  %938 = vmatprep.subr.mxu0 0.0
  %939 = vmatpush1.msra.mxu0 %v174
  %940 = vmatprep.subr.mxu0 0.0
  %941 = vmatpush1.msra.mxu0 %v175
  %942 = vmatprep.subr.mxu0 0.0
  %943 = vmatpush1.msra.mxu0 %v176
  %944 = vmatprep.subr.mxu0 0.0
  %945 = vmatpush1.msra.mxu0 0.0
  %946 = vmatprep.subr.mxu0 0.0
  %947 = vmatpush1.msra.mxu0 0.0
  %948 = vmatprep.subr.mxu0 0.0
  %949 = vmatpush1.msra.mxu0 0.0
  %950 = vmatprep.subr.mxu0 0.0
  %951 = vmatpush1.msra.mxu0 0.0
  %952 = vmatprep.subr.mxu0 0.0
  %953 = vmatpush1.msra.mxu0 0.0
  %954 = vmatprep.subr.mxu0 0.0
  %955 = vmatpush1.msra.mxu0 0.0
  %956 = vmatprep.subr.mxu0 0.0
  %957 = vmatpush1.msra.mxu0 0.0
  %958 = vmatprep.subr.mxu0 0.0
  %959 = vmatpush1.msra.mxu0 0.0
  %960 = vmatprep.subr.mxu0 0.0
  %961 = vmatpush1.msra.mxu0 0.0
  %962 = vmatprep.subr.mxu0 0.0
  %963 = vmatpush1.msra.mxu0 0.0
  %964 = vmatprep.subr.mxu0 0.0
  %965 = vmatpush1.msra.mxu0 0.0
  %966 = vmatprep.subr.mxu0 0.0
  %967 = vmatpush1.msra.mxu0 0.0
  %968 = vmatprep.subr.mxu0 0.0
  %969 = vmatpush1.msra.mxu0 0.0
  %970 = vmatprep.subr.mxu0 0.0
  %971 = vmatpush1.msra.mxu0 0.0
  %972 = vmatprep.subr.mxu0 0.0
  %973 = vmatpush1.msra.mxu0 0.0
  %974 = vmatprep.subr.mxu0 0.0
  %975 = vmatpush1.msra.mxu0 0.0
  %976 = vmatprep.subr.mxu0 0.0
  %977 = vmatpush1.msra.mxu0 0.0
  %978 = vmatprep.subr.mxu0 0.0
  %979 = vmatpush1.msra.mxu0 0.0
  %980 = vmatprep.subr.mxu0 0.0
  %981 = vmatpush1.msra.mxu0 0.0
  %982 = vmatprep.subr.mxu0 0.0
  %983 = vmatpush1.msra.mxu0 0.0
  %984 = vmatprep.subr.mxu0 0.0
  %985 = vmatpush1.msra.mxu0 0.0
  %986 = vmatprep.subr.mxu0 0.0
  %987 = vmatpush1.msra.mxu0 0.0
  %988 = vmatprep.subr.mxu0 0.0
  %989 = vmatpush1.msra.mxu0 0.0
  %990 = vmatprep.subr.mxu0 0.0
  %991 = vmatpush1.msra.mxu0 0.0
  %992 = vmatprep.subr.mxu0 0.0
  %993 = vmatpush1.msra.mxu0 0.0
  %994 = vmatprep.subr.mxu0 0.0
  %995 = vmatpush1.msra.mxu0 0.0
  %996 = vmatprep.subr.mxu0 0.0
  %997 = vmatpush1.msra.mxu0 0.0
  %998 = vmatprep.subr.mxu0 0.0
  %999 = vmatpush1.msra.mxu0 0.0
  %1000 = vmatprep.mubr.f32.mxu0 0.0
  %1001 = vmatmul.mubr.f32.gmra.mrb[0].mxu0 %v934
  %v1002 = vpop.f32.mrb[0].mxu0
  %v1003 = vadd.f32 0.0, %v1002
  %v1004 = vpop.f32.mrb[0].mxu0
  %1005 = vdwg.mxu0
  %v1006 = vadd.f32 %v170, %v1003
  %v1007 = vxor.u32 %v1006, 2147483648
  %v1008 = vmul.f32 %v1007, 1.442695
  %v1009 = vpow.pop %v1008
  %v1010 = vadd.f32 %v1009, 1.0
  %v1011 = vrcp.pop %v1010
  %v1012 = vmul.f32 1.0, %v1011
  %v1013 = vtanh.pop %v1006
  %v1014 = vmul.f32 %v1012, %v930
  %1016 = vrot.lane.b32.xlu0 %v1013, 64
  %v1017 = vpop.permute.xlu0 %1016
  %v1019 = vmul.f32 %v1012, %v1017
  %1021 = vrot.lane.b32.xlu0 %v1019, 32
  %v1022 = vpop.permute.xlu0 %1021
  %v1024 = vadd.f32 %v1014, %v1022
  %v1025 = vtanh.pop %v1024
  %1027 = vrot.lane.b32.xlu0 %v1025, 64
  %v1028 = vpop.permute.xlu0 %1027
  %v1030 = vmul.f32 %v1012, %v1028
  %vm1031 = vcmp.gt.s32.totalorder %v33, 7
  %v1032 = vsel %vm1031, 1, 0
  %1033 = vset.pattern.permute.xlu0 0
  %1034 = vperm.xlu0 %1033, %v1032
  %v1035 = vpop.permute.xlu0 %1034
  %vm1036 = vcmp.eq.s32.totalorder %v1035, 1
  %v1037 = vsel %vm1036, %v1030, %v929
  %v1038 = vld [vmem:[%s4 + $0x80] sm:$0xff]
  %v1039 = vld [vmem:[%s4 + $0x88] sm:$0xff]
  %v1040 = vld [vmem:[%s4 + $0x90] sm:$0xff]
  %v1041 = vld [vmem:[%s4 + $0x98] sm:$0xff]
  %v1042 = vld [vmem:[%s5 + $0x2] sm:$0x1]
  %v1043 = vlaneseq
  %v1044 = vshrl.u32 %v1043, 7
  %v1045 = vsub.s32 0, %v1044
  %v1046 = vrot.slane %v1042, %v1045
  %1048 = vrot.lane.b32.xlu0 %v1037, 32
  %v1049 = vpop.permute.xlu0 %1048
  %v1050 = vsel %vm43, %v1049, 0
  %1052 = vmatprep.subr.mxu0 0.0
  %1053 = vmatpush1.msra.mxu0 %v1038
  %1054 = vmatprep.subr.mxu0 0.0
  %1055 = vmatpush1.msra.mxu0 %v1039
  %1056 = vmatprep.subr.mxu0 0.0
  %1057 = vmatpush1.msra.mxu0 %v1040
  %1058 = vmatprep.subr.mxu0 0.0
  %1059 = vmatpush1.msra.mxu0 %v1041
  %1060 = vmatprep.subr.mxu0 0.0
  %1061 = vmatpush1.msra.mxu0 0.0
  %1062 = vmatprep.subr.mxu0 0.0
  %1063 = vmatpush1.msra.mxu0 0.0
  %1064 = vmatprep.subr.mxu0 0.0
  %1065 = vmatpush1.msra.mxu0 0.0
  %1066 = vmatprep.subr.mxu0 0.0
  %1067 = vmatpush1.msra.mxu0 0.0
  %1068 = vmatprep.subr.mxu0 0.0
  %1069 = vmatpush1.msra.mxu0 0.0
  %1070 = vmatprep.subr.mxu0 0.0
  %1071 = vmatpush1.msra.mxu0 0.0
  %1072 = vmatprep.subr.mxu0 0.0
  %1073 = vmatpush1.msra.mxu0 0.0
  %1074 = vmatprep.subr.mxu0 0.0
  %1075 = vmatpush1.msra.mxu0 0.0
  %1076 = vmatprep.subr.mxu0 0.0
  %1077 = vmatpush1.msra.mxu0 0.0
  %1078 = vmatprep.subr.mxu0 0.0
  %1079 = vmatpush1.msra.mxu0 0.0
  %1080 = vmatprep.subr.mxu0 0.0
  %1081 = vmatpush1.msra.mxu0 0.0
  %1082 = vmatprep.subr.mxu0 0.0
  %1083 = vmatpush1.msra.mxu0 0.0
  %1084 = vmatprep.subr.mxu0 0.0
  %1085 = vmatpush1.msra.mxu0 0.0
  %1086 = vmatprep.subr.mxu0 0.0
  %1087 = vmatpush1.msra.mxu0 0.0
  %1088 = vmatprep.subr.mxu0 0.0
  %1089 = vmatpush1.msra.mxu0 0.0
  %1090 = vmatprep.subr.mxu0 0.0
  %1091 = vmatpush1.msra.mxu0 0.0
  %1092 = vmatprep.subr.mxu0 0.0
  %1093 = vmatpush1.msra.mxu0 0.0
  %1094 = vmatprep.subr.mxu0 0.0
  %1095 = vmatpush1.msra.mxu0 0.0
  %1096 = vmatprep.subr.mxu0 0.0
  %1097 = vmatpush1.msra.mxu0 0.0
  %1098 = vmatprep.subr.mxu0 0.0
  %1099 = vmatpush1.msra.mxu0 0.0
  %1100 = vmatprep.subr.mxu0 0.0
  %1101 = vmatpush1.msra.mxu0 0.0
  %1102 = vmatprep.subr.mxu0 0.0
  %1103 = vmatpush1.msra.mxu0 0.0
  %1104 = vmatprep.subr.mxu0 0.0
  %1105 = vmatpush1.msra.mxu0 0.0
  %1106 = vmatprep.subr.mxu0 0.0
  %1107 = vmatpush1.msra.mxu0 0.0
  %1108 = vmatprep.subr.mxu0 0.0
  %1109 = vmatpush1.msra.mxu0 0.0
  %1110 = vmatprep.subr.mxu0 0.0
  %1111 = vmatpush1.msra.mxu0 0.0
  %1112 = vmatprep.subr.mxu0 0.0
  %1113 = vmatpush1.msra.mxu0 0.0
  %1114 = vmatprep.subr.mxu0 0.0
  %1115 = vmatpush1.msra.mxu0 0.0
  %1116 = vmatprep.mubr.f32.mxu0 0.0
  %1117 = vmatmul.mubr.f32.gmra.mrb[0].mxu0 %v1050
  %v1118 = vpop.f32.mrb[0].mxu0
  %v1119 = vadd.f32 %v1046, %v1118
  %v1120 = vpop.f32.mrb[0].mxu0
  %1121 = vdwg.mxu0
  %v1122 = vmul.f32 %v1119, 0.5
  %v1123 = vmul.f32 %v1122, 1.442695
  %v1124 = vpow.pop %v1123
  %v1125 = vld [vmem:[%s3] sm:$0xff]
  %1127 = vrot.lane.b32.xlu0 %v1125, 32
  %v1128 = vpop.permute.xlu0 %1127
  %v1130 = vmul.f32 %v1124, %v1128
  %1132 = vrot.lane.b32.xlu0 %v1130, 96
  %v1133 = vpop.permute.xlu0 %1132
  %v1135 = vadd.f32 %v1119, %v1133
  %v1136 = vlaneseq
  %v1137 = vshrl.u32 %v1136, 7
  %vm1138 = vcmp.lt.s32.totalorder %v1137, 4
  %v1139 = vadd.f32 %v1119, 1.0
  %v1140 = vmul.f32 %v1119, %v1119
  %1142 = vrot.lane.b32.xlu0 %v1140, 32
  %v1143 = vpop.permute.xlu0 %1142
  %v1145 = vsub.f32 %v1139, %v1143
  %v1146 = vmul.f32 %v1124, %v1124
  %v1147 = vsub.f32 %v1145, %v1146
  %v1148 = vsel %vm1138, %v1147, 0.0
  %1150 = vrot.lane.b32.xlu0 %v1148, 96
  %v1151 = vpop.permute.xlu0 %1150
  %v1153 = vsel %vm43, %v1151, 0.0
  %1154 = vadd.xlane.f32.xlu0 %v1153
  %v1155 = vpop.xlane.xlu0 %1154
  %v1156 = vrot.slane %v1155, 4
  %v1157 = vadd.f32 %v1155, %v1156
  %v1158 = vrot.slane %v1157, 2
  %v1159 = vadd.f32 %v1157, %v1158
  %v1160 = vrot.slane %v1159, 1
  %v1161 = vadd.f32 %v1159, %v1160
  %s1162 = vtos %v1161
  %s1163 = smul.f32 %s1162, -0.5
  %v1164 = vld [vmem:[%s4 + $0xa0] sm:$0xff]
  %v1165 = vld [vmem:[%s4 + $0xa8] sm:$0xff]
  %v1166 = vld [vmem:[%s4 + $0xb0] sm:$0xff]
  %v1167 = vld [vmem:[%s4 + $0xb8] sm:$0xff]
  %v1168 = vld [vmem:[%s5 + $0x3] sm:$0x1]
  %v1169 = vlaneseq
  %v1170 = vshrl.u32 %v1169, 7
  %v1171 = vsub.s32 0, %v1170
  %v1172 = vrot.slane %v1168, %v1171
  %v1174 = vsel %vm43, %v1135, 0
  %1176 = vmatprep.subr.mxu0 0.0
  %1177 = vmatpush1.msra.mxu0 %v1164
  %1178 = vmatprep.subr.mxu0 0.0
  %1179 = vmatpush1.msra.mxu0 %v1165
  %1180 = vmatprep.subr.mxu0 0.0
  %1181 = vmatpush1.msra.mxu0 %v1166
  %1182 = vmatprep.subr.mxu0 0.0
  %1183 = vmatpush1.msra.mxu0 %v1167
  %1184 = vmatprep.subr.mxu0 0.0
  %1185 = vmatpush1.msra.mxu0 0.0
  %1186 = vmatprep.subr.mxu0 0.0
  %1187 = vmatpush1.msra.mxu0 0.0
  %1188 = vmatprep.subr.mxu0 0.0
  %1189 = vmatpush1.msra.mxu0 0.0
  %1190 = vmatprep.subr.mxu0 0.0
  %1191 = vmatpush1.msra.mxu0 0.0
  %1192 = vmatprep.subr.mxu0 0.0
  %1193 = vmatpush1.msra.mxu0 0.0
  %1194 = vmatprep.subr.mxu0 0.0
  %1195 = vmatpush1.msra.mxu0 0.0
  %1196 = vmatprep.subr.mxu0 0.0
  %1197 = vmatpush1.msra.mxu0 0.0
  %1198 = vmatprep.subr.mxu0 0.0
  %1199 = vmatpush1.msra.mxu0 0.0
  %1200 = vmatprep.subr.mxu0 0.0
  %1201 = vmatpush1.msra.mxu0 0.0
  %1202 = vmatprep.subr.mxu0 0.0
  %1203 = vmatpush1.msra.mxu0 0.0
  %1204 = vmatprep.subr.mxu0 0.0
  %1205 = vmatpush1.msra.mxu0 0.0
  %1206 = vmatprep.subr.mxu0 0.0
  %1207 = vmatpush1.msra.mxu0 0.0
  %1208 = vmatprep.subr.mxu0 0.0
  %1209 = vmatpush1.msra.mxu0 0.0
  %1210 = vmatprep.subr.mxu0 0.0
  %1211 = vmatpush1.msra.mxu0 0.0
  %1212 = vmatprep.subr.mxu0 0.0
  %1213 = vmatpush1.msra.mxu0 0.0
  %1214 = vmatprep.subr.mxu0 0.0
  %1215 = vmatpush1.msra.mxu0 0.0
  %1216 = vmatprep.subr.mxu0 0.0
  %1217 = vmatpush1.msra.mxu0 0.0
  %1218 = vmatprep.subr.mxu0 0.0
  %1219 = vmatpush1.msra.mxu0 0.0
  %1220 = vmatprep.subr.mxu0 0.0
  %1221 = vmatpush1.msra.mxu0 0.0
  %1222 = vmatprep.subr.mxu0 0.0
  %1223 = vmatpush1.msra.mxu0 0.0
  %1224 = vmatprep.subr.mxu0 0.0
  %1225 = vmatpush1.msra.mxu0 0.0
  %1226 = vmatprep.subr.mxu0 0.0
  %1227 = vmatpush1.msra.mxu0 0.0
  %1228 = vmatprep.subr.mxu0 0.0
  %1229 = vmatpush1.msra.mxu0 0.0
  %1230 = vmatprep.subr.mxu0 0.0
  %1231 = vmatpush1.msra.mxu0 0.0
  %1232 = vmatprep.subr.mxu0 0.0
  %1233 = vmatpush1.msra.mxu0 0.0
  %1234 = vmatprep.subr.mxu0 0.0
  %1235 = vmatpush1.msra.mxu0 0.0
  %1236 = vmatprep.subr.mxu0 0.0
  %1237 = vmatpush1.msra.mxu0 0.0
  %1238 = vmatprep.subr.mxu0 0.0
  %1239 = vmatpush1.msra.mxu0 0.0
  %1240 = vmatprep.mubr.f32.mxu0 0.0
  %1241 = vmatmul.mubr.f32.gmra.mrb[0].mxu0 %v1174
  %v1242 = vpop.f32.mrb[0].mxu0
  %v1243 = vadd.f32 %v1172, %v1242
  %v1244 = vpop.f32.mrb[0].mxu0
  %1245 = vdwg.mxu0
  %v1246 = vld [vmem:[%s4 + $0x40] sm:$0xff]
  %v1247 = vld [vmem:[%s4 + $0x48] sm:$0xff]
  %v1248 = vld [vmem:[%s4 + $0x50] sm:$0xff]
  %v1249 = vld [vmem:[%s4 + $0x58] sm:$0xff]
  %v1250 = vld [vmem:[%s5 + $0x1] sm:$0x1]
  %v1251 = vlaneseq
  %v1252 = vshrl.u32 %v1251, 7
  %v1253 = vsub.s32 0, %v1252
  %v1254 = vrot.slane %v1250, %v1253
  %1255 = vmatprep.subr.mxu0 0.0
  %1256 = vmatpush1.msra.mxu0 %v1246
  %1257 = vmatprep.subr.mxu0 0.0
  %1258 = vmatpush1.msra.mxu0 %v1247
  %1259 = vmatprep.subr.mxu0 0.0
  %1260 = vmatpush1.msra.mxu0 %v1248
  %1261 = vmatprep.subr.mxu0 0.0
  %1262 = vmatpush1.msra.mxu0 %v1249
  %1263 = vmatprep.subr.mxu0 0.0
  %1264 = vmatpush1.msra.mxu0 0.0
  %1265 = vmatprep.subr.mxu0 0.0
  %1266 = vmatpush1.msra.mxu0 0.0
  %1267 = vmatprep.subr.mxu0 0.0
  %1268 = vmatpush1.msra.mxu0 0.0
  %1269 = vmatprep.subr.mxu0 0.0
  %1270 = vmatpush1.msra.mxu0 0.0
  %1271 = vmatprep.subr.mxu0 0.0
  %1272 = vmatpush1.msra.mxu0 0.0
  %1273 = vmatprep.subr.mxu0 0.0
  %1274 = vmatpush1.msra.mxu0 0.0
  %1275 = vmatprep.subr.mxu0 0.0
  %1276 = vmatpush1.msra.mxu0 0.0
  %1277 = vmatprep.subr.mxu0 0.0
  %1278 = vmatpush1.msra.mxu0 0.0
  %1279 = vmatprep.subr.mxu0 0.0
  %1280 = vmatpush1.msra.mxu0 0.0
  %1281 = vmatprep.subr.mxu0 0.0
  %1282 = vmatpush1.msra.mxu0 0.0
  %1283 = vmatprep.subr.mxu0 0.0
  %1284 = vmatpush1.msra.mxu0 0.0
  %1285 = vmatprep.subr.mxu0 0.0
  %1286 = vmatpush1.msra.mxu0 0.0
  %1287 = vmatprep.subr.mxu0 0.0
  %1288 = vmatpush1.msra.mxu0 0.0
  %1289 = vmatprep.subr.mxu0 0.0
  %1290 = vmatpush1.msra.mxu0 0.0
  %1291 = vmatprep.subr.mxu0 0.0
  %1292 = vmatpush1.msra.mxu0 0.0
  %1293 = vmatprep.subr.mxu0 0.0
  %1294 = vmatpush1.msra.mxu0 0.0
  %1295 = vmatprep.subr.mxu0 0.0
  %1296 = vmatpush1.msra.mxu0 0.0
  %1297 = vmatprep.subr.mxu0 0.0
  %1298 = vmatpush1.msra.mxu0 0.0
  %1299 = vmatprep.subr.mxu0 0.0
  %1300 = vmatpush1.msra.mxu0 0.0
  %1301 = vmatprep.subr.mxu0 0.0
  %1302 = vmatpush1.msra.mxu0 0.0
  %1303 = vmatprep.subr.mxu0 0.0
  %1304 = vmatpush1.msra.mxu0 0.0
  %1305 = vmatprep.subr.mxu0 0.0
  %1306 = vmatpush1.msra.mxu0 0.0
  %1307 = vmatprep.subr.mxu0 0.0
  %1308 = vmatpush1.msra.mxu0 0.0
  %1309 = vmatprep.subr.mxu0 0.0
  %1310 = vmatpush1.msra.mxu0 0.0
  %1311 = vmatprep.subr.mxu0 0.0
  %1312 = vmatpush1.msra.mxu0 0.0
  %1313 = vmatprep.subr.mxu0 0.0
  %1314 = vmatpush1.msra.mxu0 0.0
  %1315 = vmatprep.subr.mxu0 0.0
  %1316 = vmatpush1.msra.mxu0 0.0
  %1317 = vmatprep.subr.mxu0 0.0
  %1318 = vmatpush1.msra.mxu0 0.0
  %1319 = vmatprep.mubr.f32.mxu0 0.0
  %1320 = vmatmul.mubr.f32.gmra.mrb[0].mxu0 %v45
  %v1321 = vpop.f32.mrb[0].mxu0
  %v1322 = vadd.f32 %v1254, %v1321
  %v1323 = vpop.f32.mrb[0].mxu0
  %1324 = vmatprep.mubr.f32.mxu0 0.0
  %1325 = vmatmul.mubr.f32.gmra.mrb[0].mxu0 %v48
  %v1326 = vpop.f32.mrb[0].mxu0
  %v1327 = vadd.f32 %v1254, %v1326
  %v1328 = vpop.f32.mrb[0].mxu0
  %1329 = vmatprep.mubr.f32.mxu0 0.0
  %1330 = vmatmul.mubr.f32.gmra.mrb[0].mxu0 %v51
  %v1331 = vpop.f32.mrb[0].mxu0
  %v1332 = vadd.f32 %v1254, %v1331
  %v1333 = vpop.f32.mrb[0].mxu0
  %1334 = vmatprep.mubr.f32.mxu0 0.0
  %1335 = vmatmul.mubr.f32.gmra.mrb[0].mxu0 %v54
  %v1336 = vpop.f32.mrb[0].mxu0
  %v1337 = vadd.f32 %v1254, %v1336
  %v1338 = vpop.f32.mrb[0].mxu0
  %1339 = vmatprep.mubr.f32.mxu0 0.0
  %1340 = vmatmul.mubr.f32.gmra.mrb[0].mxu0 %v57
  %v1341 = vpop.f32.mrb[0].mxu0
  %v1342 = vadd.f32 %v1254, %v1341
  %v1343 = vpop.f32.mrb[0].mxu0
  %1344 = vmatprep.mubr.f32.mxu0 0.0
  %1345 = vmatmul.mubr.f32.gmra.mrb[0].mxu0 %v60
  %v1346 = vpop.f32.mrb[0].mxu0
  %v1347 = vadd.f32 %v1254, %v1346
  %v1348 = vpop.f32.mrb[0].mxu0
  %1349 = vmatprep.mubr.f32.mxu0 0.0
  %1350 = vmatmul.mubr.f32.gmra.mrb[0].mxu0 %v63
  %v1351 = vpop.f32.mrb[0].mxu0
  %v1352 = vadd.f32 %v1254, %v1351
  %v1353 = vpop.f32.mrb[0].mxu0
  %1354 = vdwg.mxu0
  %v1355 = vld [vmem:[%s4 + $0x60] sm:$0xff]
  %v1356 = vld [vmem:[%s4 + $0x68] sm:$0xff]
  %v1357 = vld [vmem:[%s4 + $0x70] sm:$0xff]
  %v1358 = vld [vmem:[%s4 + $0x78] sm:$0xff]
  %v1360 = vsel %vm43, %v1243, 0
  %1362 = vmatprep.subr.mxu0 0.0
  %1363 = vmatpush1.msra.mxu0 %v1355
  %1364 = vmatprep.subr.mxu0 0.0
  %1365 = vmatpush1.msra.mxu0 %v1356
  %1366 = vmatprep.subr.mxu0 0.0
  %1367 = vmatpush1.msra.mxu0 %v1357
  %1368 = vmatprep.subr.mxu0 0.0
  %1369 = vmatpush1.msra.mxu0 %v1358
  %1370 = vmatprep.subr.mxu0 0.0
  %1371 = vmatpush1.msra.mxu0 0.0
  %1372 = vmatprep.subr.mxu0 0.0
  %1373 = vmatpush1.msra.mxu0 0.0
  %1374 = vmatprep.subr.mxu0 0.0
  %1375 = vmatpush1.msra.mxu0 0.0
  %1376 = vmatprep.subr.mxu0 0.0
  %1377 = vmatpush1.msra.mxu0 0.0
  %1378 = vmatprep.subr.mxu0 0.0
  %1379 = vmatpush1.msra.mxu0 0.0
  %1380 = vmatprep.subr.mxu0 0.0
  %1381 = vmatpush1.msra.mxu0 0.0
  %1382 = vmatprep.subr.mxu0 0.0
  %1383 = vmatpush1.msra.mxu0 0.0
  %1384 = vmatprep.subr.mxu0 0.0
  %1385 = vmatpush1.msra.mxu0 0.0
  %1386 = vmatprep.subr.mxu0 0.0
  %1387 = vmatpush1.msra.mxu0 0.0
  %1388 = vmatprep.subr.mxu0 0.0
  %1389 = vmatpush1.msra.mxu0 0.0
  %1390 = vmatprep.subr.mxu0 0.0
  %1391 = vmatpush1.msra.mxu0 0.0
  %1392 = vmatprep.subr.mxu0 0.0
  %1393 = vmatpush1.msra.mxu0 0.0
  %1394 = vmatprep.subr.mxu0 0.0
  %1395 = vmatpush1.msra.mxu0 0.0
  %1396 = vmatprep.subr.mxu0 0.0
  %1397 = vmatpush1.msra.mxu0 0.0
  %1398 = vmatprep.subr.mxu0 0.0
  %1399 = vmatpush1.msra.mxu0 0.0
  %1400 = vmatprep.subr.mxu0 0.0
  %1401 = vmatpush1.msra.mxu0 0.0
  %1402 = vmatprep.subr.mxu0 0.0
  %1403 = vmatpush1.msra.mxu0 0.0
  %1404 = vmatprep.subr.mxu0 0.0
  %1405 = vmatpush1.msra.mxu0 0.0
  %1406 = vmatprep.subr.mxu0 0.0
  %1407 = vmatpush1.msra.mxu0 0.0
  %1408 = vmatprep.subr.mxu0 0.0
  %1409 = vmatpush1.msra.mxu0 0.0
  %1410 = vmatprep.subr.mxu0 0.0
  %1411 = vmatpush1.msra.mxu0 0.0
  %1412 = vmatprep.subr.mxu0 0.0
  %1413 = vmatpush1.msra.mxu0 0.0
  %1414 = vmatprep.subr.mxu0 0.0
  %1415 = vmatpush1.msra.mxu0 0.0
  %1416 = vmatprep.subr.mxu0 0.0
  %1417 = vmatpush1.msra.mxu0 0.0
  %1418 = vmatprep.subr.mxu0 0.0
  %1419 = vmatpush1.msra.mxu0 0.0
  %1420 = vmatprep.subr.mxu0 0.0
  %1421 = vmatpush1.msra.mxu0 0.0
  %1422 = vmatprep.subr.mxu0 0.0
  %1423 = vmatpush1.msra.mxu0 0.0
  %1424 = vmatprep.subr.mxu0 0.0
  %1425 = vmatpush1.msra.mxu0 0.0
  %1426 = vmatprep.mubr.f32.mxu0 0.0
  %1427 = vmatmul.mubr.f32.gmra.mrb[0].mxu0 %v1360
  %v1428 = vpop.f32.mrb[0].mxu0
  %v1429 = vadd.f32 0.0, %v1428
  %v1430 = vpop.f32.mrb[0].mxu0
  %1431 = vdwg.mxu0
  %v1432 = vadd.f32 %v1322, %v1429
  %v1433 = vxor.u32 %v1432, 2147483648
  %v1434 = vmul.f32 %v1433, 1.442695
  %v1435 = vpow.pop %v1434
  %v1436 = vadd.f32 %v1435, 1.0
  %v1437 = vrcp.pop %v1436
  %v1438 = vmul.f32 1.0, %v1437
  %v1439 = vtanh.pop %v1432
  %v1440 = vmul.f32 %v1438, %v1243
  %1442 = vrot.lane.b32.xlu0 %v1439, 64
  %v1443 = vpop.permute.xlu0 %1442
  %v1445 = vmul.f32 %v1438, %v1443
  %1447 = vrot.lane.b32.xlu0 %v1445, 32
  %v1448 = vpop.permute.xlu0 %1447
  %v1450 = vadd.f32 %v1440, %v1448
  %v1451 = vtanh.pop %v1450
  %1453 = vrot.lane.b32.xlu0 %v1451, 64
  %v1454 = vpop.permute.xlu0 %1453
  %v1456 = vmul.f32 %v1438, %v1454
  %1458 = vrot.lane.b32.xlu0 %v1456, 32
  %v1459 = vpop.permute.xlu0 %1458
  %1461 = vst.msk [vmem:[#allocation2] sm:$0xff] %vm43, %v1459
  %v1462 = vsel %vm43, %v1459, 0
  %1464 = vmatprep.subr.mxu0 0.0
  %1465 = vmatpush1.msra.mxu0 %v1355
  %1466 = vmatprep.subr.mxu0 0.0
  %1467 = vmatpush1.msra.mxu0 %v1356
  %1468 = vmatprep.subr.mxu0 0.0
  %1469 = vmatpush1.msra.mxu0 %v1357
  %1470 = vmatprep.subr.mxu0 0.0
  %1471 = vmatpush1.msra.mxu0 %v1358
  %1472 = vmatprep.subr.mxu0 0.0
  %1473 = vmatpush1.msra.mxu0 0.0
  %1474 = vmatprep.subr.mxu0 0.0
  %1475 = vmatpush1.msra.mxu0 0.0
  %1476 = vmatprep.subr.mxu0 0.0
  %1477 = vmatpush1.msra.mxu0 0.0
  %1478 = vmatprep.subr.mxu0 0.0
  %1479 = vmatpush1.msra.mxu0 0.0
  %1480 = vmatprep.subr.mxu0 0.0
  %1481 = vmatpush1.msra.mxu0 0.0
  %1482 = vmatprep.subr.mxu0 0.0
  %1483 = vmatpush1.msra.mxu0 0.0
  %1484 = vmatprep.subr.mxu0 0.0
  %1485 = vmatpush1.msra.mxu0 0.0
  %1486 = vmatprep.subr.mxu0 0.0
  %1487 = vmatpush1.msra.mxu0 0.0
  %1488 = vmatprep.subr.mxu0 0.0
  %1489 = vmatpush1.msra.mxu0 0.0
  %1490 = vmatprep.subr.mxu0 0.0
  %1491 = vmatpush1.msra.mxu0 0.0
  %1492 = vmatprep.subr.mxu0 0.0
  %1493 = vmatpush1.msra.mxu0 0.0
  %1494 = vmatprep.subr.mxu0 0.0
  %1495 = vmatpush1.msra.mxu0 0.0
  %1496 = vmatprep.subr.mxu0 0.0
  %1497 = vmatpush1.msra.mxu0 0.0
  %1498 = vmatprep.subr.mxu0 0.0
  %1499 = vmatpush1.msra.mxu0 0.0
  %1500 = vmatprep.subr.mxu0 0.0
  %1501 = vmatpush1.msra.mxu0 0.0
  %1502 = vmatprep.subr.mxu0 0.0
  %1503 = vmatpush1.msra.mxu0 0.0
  %1504 = vmatprep.subr.mxu0 0.0
  %1505 = vmatpush1.msra.mxu0 0.0
  %1506 = vmatprep.subr.mxu0 0.0
  %1507 = vmatpush1.msra.mxu0 0.0
  %1508 = vmatprep.subr.mxu0 0.0
  %1509 = vmatpush1.msra.mxu0 0.0
  %1510 = vmatprep.subr.mxu0 0.0
  %1511 = vmatpush1.msra.mxu0 0.0
  %1512 = vmatprep.subr.mxu0 0.0
  %1513 = vmatpush1.msra.mxu0 0.0
  %1514 = vmatprep.subr.mxu0 0.0
  %1515 = vmatpush1.msra.mxu0 0.0
  %1516 = vmatprep.subr.mxu0 0.0
  %1517 = vmatpush1.msra.mxu0 0.0
  %1518 = vmatprep.subr.mxu0 0.0
  %1519 = vmatpush1.msra.mxu0 0.0
  %1520 = vmatprep.subr.mxu0 0.0
  %1521 = vmatpush1.msra.mxu0 0.0
  %1522 = vmatprep.subr.mxu0 0.0
  %1523 = vmatpush1.msra.mxu0 0.0
  %1524 = vmatprep.subr.mxu0 0.0
  %1525 = vmatpush1.msra.mxu0 0.0
  %1526 = vmatprep.subr.mxu0 0.0
  %1527 = vmatpush1.msra.mxu0 0.0
  %1528 = vmatprep.mubr.f32.mxu0 0.0
  %1529 = vmatmul.mubr.f32.gmra.mrb[0].mxu0 %v1462
  %v1530 = vpop.f32.mrb[0].mxu0
  %v1531 = vadd.f32 0.0, %v1530
  %v1532 = vpop.f32.mrb[0].mxu0
  %1533 = vdwg.mxu0
  %v1534 = vadd.f32 %v1327, %v1531
  %v1535 = vxor.u32 %v1534, 2147483648
  %v1536 = vmul.f32 %v1535, 1.442695
  %v1537 = vpow.pop %v1536
  %v1538 = vadd.f32 %v1537, 1.0
  %v1539 = vrcp.pop %v1538
  %v1540 = vmul.f32 1.0, %v1539
  %v1541 = vtanh.pop %v1534
  %v1542 = vmul.f32 %v1540, %v1450
  %1544 = vrot.lane.b32.xlu0 %v1541, 64
  %v1545 = vpop.permute.xlu0 %1544
  %v1547 = vmul.f32 %v1540, %v1545
  %1549 = vrot.lane.b32.xlu0 %v1547, 32
  %v1550 = vpop.permute.xlu0 %1549
  %v1552 = vadd.f32 %v1542, %v1550
  %v1553 = vtanh.pop %v1552
  %1555 = vrot.lane.b32.xlu0 %v1553, 64
  %v1556 = vpop.permute.xlu0 %1555
  %v1558 = vmul.f32 %v1540, %v1556
  %1560 = vrot.lane.b32.xlu0 %v1558, 32
  %v1561 = vpop.permute.xlu0 %1560
  %1563 = vst.msk [vmem:[#allocation2 + $0x8] sm:$0xff] %vm43, %v1561
  %v1564 = vsel %vm43, %v1561, 0
  %1566 = vmatprep.subr.mxu0 0.0
  %1567 = vmatpush1.msra.mxu0 %v1355
  %1568 = vmatprep.subr.mxu0 0.0
  %1569 = vmatpush1.msra.mxu0 %v1356
  %1570 = vmatprep.subr.mxu0 0.0
  %1571 = vmatpush1.msra.mxu0 %v1357
  %1572 = vmatprep.subr.mxu0 0.0
  %1573 = vmatpush1.msra.mxu0 %v1358
  %1574 = vmatprep.subr.mxu0 0.0
  %1575 = vmatpush1.msra.mxu0 0.0
  %1576 = vmatprep.subr.mxu0 0.0
  %1577 = vmatpush1.msra.mxu0 0.0
  %1578 = vmatprep.subr.mxu0 0.0
  %1579 = vmatpush1.msra.mxu0 0.0
  %1580 = vmatprep.subr.mxu0 0.0
  %1581 = vmatpush1.msra.mxu0 0.0
  %1582 = vmatprep.subr.mxu0 0.0
  %1583 = vmatpush1.msra.mxu0 0.0
  %1584 = vmatprep.subr.mxu0 0.0
  %1585 = vmatpush1.msra.mxu0 0.0
  %1586 = vmatprep.subr.mxu0 0.0
  %1587 = vmatpush1.msra.mxu0 0.0
  %1588 = vmatprep.subr.mxu0 0.0
  %1589 = vmatpush1.msra.mxu0 0.0
  %1590 = vmatprep.subr.mxu0 0.0
  %1591 = vmatpush1.msra.mxu0 0.0
  %1592 = vmatprep.subr.mxu0 0.0
  %1593 = vmatpush1.msra.mxu0 0.0
  %1594 = vmatprep.subr.mxu0 0.0
  %1595 = vmatpush1.msra.mxu0 0.0
  %1596 = vmatprep.subr.mxu0 0.0
  %1597 = vmatpush1.msra.mxu0 0.0
  %1598 = vmatprep.subr.mxu0 0.0
  %1599 = vmatpush1.msra.mxu0 0.0
  %1600 = vmatprep.subr.mxu0 0.0
  %1601 = vmatpush1.msra.mxu0 0.0
  %1602 = vmatprep.subr.mxu0 0.0
  %1603 = vmatpush1.msra.mxu0 0.0
  %1604 = vmatprep.subr.mxu0 0.0
  %1605 = vmatpush1.msra.mxu0 0.0
  %1606 = vmatprep.subr.mxu0 0.0
  %1607 = vmatpush1.msra.mxu0 0.0
  %1608 = vmatprep.subr.mxu0 0.0
  %1609 = vmatpush1.msra.mxu0 0.0
  %1610 = vmatprep.subr.mxu0 0.0
  %1611 = vmatpush1.msra.mxu0 0.0
  %1612 = vmatprep.subr.mxu0 0.0
  %1613 = vmatpush1.msra.mxu0 0.0
  %1614 = vmatprep.subr.mxu0 0.0
  %1615 = vmatpush1.msra.mxu0 0.0
  %1616 = vmatprep.subr.mxu0 0.0
  %1617 = vmatpush1.msra.mxu0 0.0
  %1618 = vmatprep.subr.mxu0 0.0
  %1619 = vmatpush1.msra.mxu0 0.0
  %1620 = vmatprep.subr.mxu0 0.0
  %1621 = vmatpush1.msra.mxu0 0.0
  %1622 = vmatprep.subr.mxu0 0.0
  %1623 = vmatpush1.msra.mxu0 0.0
  %1624 = vmatprep.subr.mxu0 0.0
  %1625 = vmatpush1.msra.mxu0 0.0
  %1626 = vmatprep.subr.mxu0 0.0
  %1627 = vmatpush1.msra.mxu0 0.0
  %1628 = vmatprep.subr.mxu0 0.0
  %1629 = vmatpush1.msra.mxu0 0.0
  %1630 = vmatprep.mubr.f32.mxu0 0.0
  %1631 = vmatmul.mubr.f32.gmra.mrb[0].mxu0 %v1564
  %v1632 = vpop.f32.mrb[0].mxu0
  %v1633 = vadd.f32 0.0, %v1632
  %v1634 = vpop.f32.mrb[0].mxu0
  %1635 = vdwg.mxu0
  %v1636 = vadd.f32 %v1332, %v1633
  %v1637 = vxor.u32 %v1636, 2147483648
  %v1638 = vmul.f32 %v1637, 1.442695
  %v1639 = vpow.pop %v1638
  %v1640 = vadd.f32 %v1639, 1.0
  %v1641 = vrcp.pop %v1640
  %v1642 = vmul.f32 1.0, %v1641
  %v1643 = vtanh.pop %v1636
  %v1644 = vmul.f32 %v1642, %v1552
  %1646 = vrot.lane.b32.xlu0 %v1643, 64
  %v1647 = vpop.permute.xlu0 %1646
  %v1649 = vmul.f32 %v1642, %v1647
  %1651 = vrot.lane.b32.xlu0 %v1649, 32
  %v1652 = vpop.permute.xlu0 %1651
  %v1654 = vadd.f32 %v1644, %v1652
  %v1655 = vtanh.pop %v1654
  %1657 = vrot.lane.b32.xlu0 %v1655, 64
  %v1658 = vpop.permute.xlu0 %1657
  %v1660 = vmul.f32 %v1642, %v1658
  %1662 = vrot.lane.b32.xlu0 %v1660, 32
  %v1663 = vpop.permute.xlu0 %1662
  %1665 = vst.msk [vmem:[#allocation2 + $0x10] sm:$0xff] %vm43, %v1663
  %v1666 = vsel %vm43, %v1663, 0
  %1668 = vmatprep.subr.mxu0 0.0
  %1669 = vmatpush1.msra.mxu0 %v1355
  %1670 = vmatprep.subr.mxu0 0.0
  %1671 = vmatpush1.msra.mxu0 %v1356
  %1672 = vmatprep.subr.mxu0 0.0
  %1673 = vmatpush1.msra.mxu0 %v1357
  %1674 = vmatprep.subr.mxu0 0.0
  %1675 = vmatpush1.msra.mxu0 %v1358
  %1676 = vmatprep.subr.mxu0 0.0
  %1677 = vmatpush1.msra.mxu0 0.0
  %1678 = vmatprep.subr.mxu0 0.0
  %1679 = vmatpush1.msra.mxu0 0.0
  %1680 = vmatprep.subr.mxu0 0.0
  %1681 = vmatpush1.msra.mxu0 0.0
  %1682 = vmatprep.subr.mxu0 0.0
  %1683 = vmatpush1.msra.mxu0 0.0
  %1684 = vmatprep.subr.mxu0 0.0
  %1685 = vmatpush1.msra.mxu0 0.0
  %1686 = vmatprep.subr.mxu0 0.0
  %1687 = vmatpush1.msra.mxu0 0.0
  %1688 = vmatprep.subr.mxu0 0.0
  %1689 = vmatpush1.msra.mxu0 0.0
  %1690 = vmatprep.subr.mxu0 0.0
  %1691 = vmatpush1.msra.mxu0 0.0
  %1692 = vmatprep.subr.mxu0 0.0
  %1693 = vmatpush1.msra.mxu0 0.0
  %1694 = vmatprep.subr.mxu0 0.0
  %1695 = vmatpush1.msra.mxu0 0.0
  %1696 = vmatprep.subr.mxu0 0.0
  %1697 = vmatpush1.msra.mxu0 0.0
  %1698 = vmatprep.subr.mxu0 0.0
  %1699 = vmatpush1.msra.mxu0 0.0
  %1700 = vmatprep.subr.mxu0 0.0
  %1701 = vmatpush1.msra.mxu0 0.0
  %1702 = vmatprep.subr.mxu0 0.0
  %1703 = vmatpush1.msra.mxu0 0.0
  %1704 = vmatprep.subr.mxu0 0.0
  %1705 = vmatpush1.msra.mxu0 0.0
  %1706 = vmatprep.subr.mxu0 0.0
  %1707 = vmatpush1.msra.mxu0 0.0
  %1708 = vmatprep.subr.mxu0 0.0
  %1709 = vmatpush1.msra.mxu0 0.0
  %1710 = vmatprep.subr.mxu0 0.0
  %1711 = vmatpush1.msra.mxu0 0.0
  %1712 = vmatprep.subr.mxu0 0.0
  %1713 = vmatpush1.msra.mxu0 0.0
  %1714 = vmatprep.subr.mxu0 0.0
  %1715 = vmatpush1.msra.mxu0 0.0
  %1716 = vmatprep.subr.mxu0 0.0
  %1717 = vmatpush1.msra.mxu0 0.0
  %1718 = vmatprep.subr.mxu0 0.0
  %1719 = vmatpush1.msra.mxu0 0.0
  %1720 = vmatprep.subr.mxu0 0.0
  %1721 = vmatpush1.msra.mxu0 0.0
  %1722 = vmatprep.subr.mxu0 0.0
  %1723 = vmatpush1.msra.mxu0 0.0
  %1724 = vmatprep.subr.mxu0 0.0
  %1725 = vmatpush1.msra.mxu0 0.0
  %1726 = vmatprep.subr.mxu0 0.0
  %1727 = vmatpush1.msra.mxu0 0.0
  %1728 = vmatprep.subr.mxu0 0.0
  %1729 = vmatpush1.msra.mxu0 0.0
  %1730 = vmatprep.subr.mxu0 0.0
  %1731 = vmatpush1.msra.mxu0 0.0
  %1732 = vmatprep.mubr.f32.mxu0 0.0
  %1733 = vmatmul.mubr.f32.gmra.mrb[0].mxu0 %v1666
  %v1734 = vpop.f32.mrb[0].mxu0
  %v1735 = vadd.f32 0.0, %v1734
  %v1736 = vpop.f32.mrb[0].mxu0
  %1737 = vdwg.mxu0
  %v1738 = vadd.f32 %v1337, %v1735
  %v1739 = vxor.u32 %v1738, 2147483648
  %v1740 = vmul.f32 %v1739, 1.442695
  %v1741 = vpow.pop %v1740
  %v1742 = vadd.f32 %v1741, 1.0
  %v1743 = vrcp.pop %v1742
  %v1744 = vmul.f32 1.0, %v1743
  %v1745 = vtanh.pop %v1738
  %v1746 = vmul.f32 %v1744, %v1654
  %1748 = vrot.lane.b32.xlu0 %v1745, 64
  %v1749 = vpop.permute.xlu0 %1748
  %v1751 = vmul.f32 %v1744, %v1749
  %1753 = vrot.lane.b32.xlu0 %v1751, 32
  %v1754 = vpop.permute.xlu0 %1753
  %v1756 = vadd.f32 %v1746, %v1754
  %v1757 = vtanh.pop %v1756
  %1759 = vrot.lane.b32.xlu0 %v1757, 64
  %v1760 = vpop.permute.xlu0 %1759
  %v1762 = vmul.f32 %v1744, %v1760
  %1764 = vrot.lane.b32.xlu0 %v1762, 32
  %v1765 = vpop.permute.xlu0 %1764
  %1767 = vst.msk [vmem:[#allocation2 + $0x18] sm:$0xff] %vm43, %v1765
  %v1768 = vsel %vm43, %v1765, 0
  %1770 = vmatprep.subr.mxu0 0.0
  %1771 = vmatpush1.msra.mxu0 %v1355
  %1772 = vmatprep.subr.mxu0 0.0
  %1773 = vmatpush1.msra.mxu0 %v1356
  %1774 = vmatprep.subr.mxu0 0.0
  %1775 = vmatpush1.msra.mxu0 %v1357
  %1776 = vmatprep.subr.mxu0 0.0
  %1777 = vmatpush1.msra.mxu0 %v1358
  %1778 = vmatprep.subr.mxu0 0.0
  %1779 = vmatpush1.msra.mxu0 0.0
  %1780 = vmatprep.subr.mxu0 0.0
  %1781 = vmatpush1.msra.mxu0 0.0
  %1782 = vmatprep.subr.mxu0 0.0
  %1783 = vmatpush1.msra.mxu0 0.0
  %1784 = vmatprep.subr.mxu0 0.0
  %1785 = vmatpush1.msra.mxu0 0.0
  %1786 = vmatprep.subr.mxu0 0.0
  %1787 = vmatpush1.msra.mxu0 0.0
  %1788 = vmatprep.subr.mxu0 0.0
  %1789 = vmatpush1.msra.mxu0 0.0
  %1790 = vmatprep.subr.mxu0 0.0
  %1791 = vmatpush1.msra.mxu0 0.0
  %1792 = vmatprep.subr.mxu0 0.0
  %1793 = vmatpush1.msra.mxu0 0.0
  %1794 = vmatprep.subr.mxu0 0.0
  %1795 = vmatpush1.msra.mxu0 0.0
  %1796 = vmatprep.subr.mxu0 0.0
  %1797 = vmatpush1.msra.mxu0 0.0
  %1798 = vmatprep.subr.mxu0 0.0
  %1799 = vmatpush1.msra.mxu0 0.0
  %1800 = vmatprep.subr.mxu0 0.0
  %1801 = vmatpush1.msra.mxu0 0.0
  %1802 = vmatprep.subr.mxu0 0.0
  %1803 = vmatpush1.msra.mxu0 0.0
  %1804 = vmatprep.subr.mxu0 0.0
  %1805 = vmatpush1.msra.mxu0 0.0
  %1806 = vmatprep.subr.mxu0 0.0
  %1807 = vmatpush1.msra.mxu0 0.0
  %1808 = vmatprep.subr.mxu0 0.0
  %1809 = vmatpush1.msra.mxu0 0.0
  %1810 = vmatprep.subr.mxu0 0.0
  %1811 = vmatpush1.msra.mxu0 0.0
  %1812 = vmatprep.subr.mxu0 0.0
  %1813 = vmatpush1.msra.mxu0 0.0
  %1814 = vmatprep.subr.mxu0 0.0
  %1815 = vmatpush1.msra.mxu0 0.0
  %1816 = vmatprep.subr.mxu0 0.0
  %1817 = vmatpush1.msra.mxu0 0.0
  %1818 = vmatprep.subr.mxu0 0.0
  %1819 = vmatpush1.msra.mxu0 0.0
  %1820 = vmatprep.subr.mxu0 0.0
  %1821 = vmatpush1.msra.mxu0 0.0
  %1822 = vmatprep.subr.mxu0 0.0
  %1823 = vmatpush1.msra.mxu0 0.0
  %1824 = vmatprep.subr.mxu0 0.0
  %1825 = vmatpush1.msra.mxu0 0.0
  %1826 = vmatprep.subr.mxu0 0.0
  %1827 = vmatpush1.msra.mxu0 0.0
  %1828 = vmatprep.subr.mxu0 0.0
  %1829 = vmatpush1.msra.mxu0 0.0
  %1830 = vmatprep.subr.mxu0 0.0
  %1831 = vmatpush1.msra.mxu0 0.0
  %1832 = vmatprep.subr.mxu0 0.0
  %1833 = vmatpush1.msra.mxu0 0.0
  %1834 = vmatprep.mubr.f32.mxu0 0.0
  %1835 = vmatmul.mubr.f32.gmra.mrb[0].mxu0 %v1768
  %v1836 = vpop.f32.mrb[0].mxu0
  %v1837 = vadd.f32 0.0, %v1836
  %v1838 = vpop.f32.mrb[0].mxu0
  %1839 = vdwg.mxu0
  %v1840 = vadd.f32 %v1342, %v1837
  %v1841 = vxor.u32 %v1840, 2147483648
  %v1842 = vmul.f32 %v1841, 1.442695
  %v1843 = vpow.pop %v1842
  %v1844 = vadd.f32 %v1843, 1.0
  %v1845 = vrcp.pop %v1844
  %v1846 = vmul.f32 1.0, %v1845
  %v1847 = vtanh.pop %v1840
  %v1848 = vmul.f32 %v1846, %v1756
  %1850 = vrot.lane.b32.xlu0 %v1847, 64
  %v1851 = vpop.permute.xlu0 %1850
  %v1853 = vmul.f32 %v1846, %v1851
  %1855 = vrot.lane.b32.xlu0 %v1853, 32
  %v1856 = vpop.permute.xlu0 %1855
  %v1858 = vadd.f32 %v1848, %v1856
  %v1859 = vtanh.pop %v1858
  %1861 = vrot.lane.b32.xlu0 %v1859, 64
  %v1862 = vpop.permute.xlu0 %1861
  %v1864 = vmul.f32 %v1846, %v1862
  %1866 = vrot.lane.b32.xlu0 %v1864, 32
  %v1867 = vpop.permute.xlu0 %1866
  %1869 = vst.msk [vmem:[#allocation2 + $0x20] sm:$0xff] %vm43, %v1867
  %v1870 = vsel %vm43, %v1867, 0
  %1872 = vmatprep.subr.mxu0 0.0
  %1873 = vmatpush1.msra.mxu0 %v1355
  %1874 = vmatprep.subr.mxu0 0.0
  %1875 = vmatpush1.msra.mxu0 %v1356
  %1876 = vmatprep.subr.mxu0 0.0
  %1877 = vmatpush1.msra.mxu0 %v1357
  %1878 = vmatprep.subr.mxu0 0.0
  %1879 = vmatpush1.msra.mxu0 %v1358
  %1880 = vmatprep.subr.mxu0 0.0
  %1881 = vmatpush1.msra.mxu0 0.0
  %1882 = vmatprep.subr.mxu0 0.0
  %1883 = vmatpush1.msra.mxu0 0.0
  %1884 = vmatprep.subr.mxu0 0.0
  %1885 = vmatpush1.msra.mxu0 0.0
  %1886 = vmatprep.subr.mxu0 0.0
  %1887 = vmatpush1.msra.mxu0 0.0
  %1888 = vmatprep.subr.mxu0 0.0
  %1889 = vmatpush1.msra.mxu0 0.0
  %1890 = vmatprep.subr.mxu0 0.0
  %1891 = vmatpush1.msra.mxu0 0.0
  %1892 = vmatprep.subr.mxu0 0.0
  %1893 = vmatpush1.msra.mxu0 0.0
  %1894 = vmatprep.subr.mxu0 0.0
  %1895 = vmatpush1.msra.mxu0 0.0
  %1896 = vmatprep.subr.mxu0 0.0
  %1897 = vmatpush1.msra.mxu0 0.0
  %1898 = vmatprep.subr.mxu0 0.0
  %1899 = vmatpush1.msra.mxu0 0.0
  %1900 = vmatprep.subr.mxu0 0.0
  %1901 = vmatpush1.msra.mxu0 0.0
  %1902 = vmatprep.subr.mxu0 0.0
  %1903 = vmatpush1.msra.mxu0 0.0
  %1904 = vmatprep.subr.mxu0 0.0
  %1905 = vmatpush1.msra.mxu0 0.0
  %1906 = vmatprep.subr.mxu0 0.0
  %1907 = vmatpush1.msra.mxu0 0.0
  %1908 = vmatprep.subr.mxu0 0.0
  %1909 = vmatpush1.msra.mxu0 0.0
  %1910 = vmatprep.subr.mxu0 0.0
  %1911 = vmatpush1.msra.mxu0 0.0
  %1912 = vmatprep.subr.mxu0 0.0
  %1913 = vmatpush1.msra.mxu0 0.0
  %1914 = vmatprep.subr.mxu0 0.0
  %1915 = vmatpush1.msra.mxu0 0.0
  %1916 = vmatprep.subr.mxu0 0.0
  %1917 = vmatpush1.msra.mxu0 0.0
  %1918 = vmatprep.subr.mxu0 0.0
  %1919 = vmatpush1.msra.mxu0 0.0
  %1920 = vmatprep.subr.mxu0 0.0
  %1921 = vmatpush1.msra.mxu0 0.0
  %1922 = vmatprep.subr.mxu0 0.0
  %1923 = vmatpush1.msra.mxu0 0.0
  %1924 = vmatprep.subr.mxu0 0.0
  %1925 = vmatpush1.msra.mxu0 0.0
  %1926 = vmatprep.subr.mxu0 0.0
  %1927 = vmatpush1.msra.mxu0 0.0
  %1928 = vmatprep.subr.mxu0 0.0
  %1929 = vmatpush1.msra.mxu0 0.0
  %1930 = vmatprep.subr.mxu0 0.0
  %1931 = vmatpush1.msra.mxu0 0.0
  %1932 = vmatprep.subr.mxu0 0.0
  %1933 = vmatpush1.msra.mxu0 0.0
  %1934 = vmatprep.subr.mxu0 0.0
  %1935 = vmatpush1.msra.mxu0 0.0
  %1936 = vmatprep.mubr.f32.mxu0 0.0
  %1937 = vmatmul.mubr.f32.gmra.mrb[0].mxu0 %v1870
  %v1938 = vpop.f32.mrb[0].mxu0
  %v1939 = vadd.f32 0.0, %v1938
  %v1940 = vpop.f32.mrb[0].mxu0
  %1941 = vdwg.mxu0
  %v1942 = vadd.f32 %v1347, %v1939
  %v1943 = vxor.u32 %v1942, 2147483648
  %v1944 = vmul.f32 %v1943, 1.442695
  %v1945 = vpow.pop %v1944
  %v1946 = vadd.f32 %v1945, 1.0
  %v1947 = vrcp.pop %v1946
  %v1948 = vmul.f32 1.0, %v1947
  %v1949 = vtanh.pop %v1942
  %v1950 = vmul.f32 %v1948, %v1858
  %1952 = vrot.lane.b32.xlu0 %v1949, 64
  %v1953 = vpop.permute.xlu0 %1952
  %v1955 = vmul.f32 %v1948, %v1953
  %1957 = vrot.lane.b32.xlu0 %v1955, 32
  %v1958 = vpop.permute.xlu0 %1957
  %v1960 = vadd.f32 %v1950, %v1958
  %v1961 = vtanh.pop %v1960
  %1963 = vrot.lane.b32.xlu0 %v1961, 64
  %v1964 = vpop.permute.xlu0 %1963
  %v1966 = vmul.f32 %v1948, %v1964
  %1968 = vrot.lane.b32.xlu0 %v1966, 32
  %v1969 = vpop.permute.xlu0 %1968
  %1971 = vst.msk [vmem:[#allocation2 + $0x28] sm:$0xff] %vm43, %v1969
  %v1972 = vsel %vm43, %v1969, 0
  %1974 = vmatprep.subr.mxu0 0.0
  %1975 = vmatpush1.msra.mxu0 %v1355
  %1976 = vmatprep.subr.mxu0 0.0
  %1977 = vmatpush1.msra.mxu0 %v1356
  %1978 = vmatprep.subr.mxu0 0.0
  %1979 = vmatpush1.msra.mxu0 %v1357
  %1980 = vmatprep.subr.mxu0 0.0
  %1981 = vmatpush1.msra.mxu0 %v1358
  %1982 = vmatprep.subr.mxu0 0.0
  %1983 = vmatpush1.msra.mxu0 0.0
  %1984 = vmatprep.subr.mxu0 0.0
  %1985 = vmatpush1.msra.mxu0 0.0
  %1986 = vmatprep.subr.mxu0 0.0
  %1987 = vmatpush1.msra.mxu0 0.0
  %1988 = vmatprep.subr.mxu0 0.0
  %1989 = vmatpush1.msra.mxu0 0.0
  %1990 = vmatprep.subr.mxu0 0.0
  %1991 = vmatpush1.msra.mxu0 0.0
  %1992 = vmatprep.subr.mxu0 0.0
  %1993 = vmatpush1.msra.mxu0 0.0
  %1994 = vmatprep.subr.mxu0 0.0
  %1995 = vmatpush1.msra.mxu0 0.0
  %1996 = vmatprep.subr.mxu0 0.0
  %1997 = vmatpush1.msra.mxu0 0.0
  %1998 = vmatprep.subr.mxu0 0.0
  %1999 = vmatpush1.msra.mxu0 0.0
  %2000 = vmatprep.subr.mxu0 0.0
  %2001 = vmatpush1.msra.mxu0 0.0
  %2002 = vmatprep.subr.mxu0 0.0
  %2003 = vmatpush1.msra.mxu0 0.0
  %2004 = vmatprep.subr.mxu0 0.0
  %2005 = vmatpush1.msra.mxu0 0.0
  %2006 = vmatprep.subr.mxu0 0.0
  %2007 = vmatpush1.msra.mxu0 0.0
  %2008 = vmatprep.subr.mxu0 0.0
  %2009 = vmatpush1.msra.mxu0 0.0
  %2010 = vmatprep.subr.mxu0 0.0
  %2011 = vmatpush1.msra.mxu0 0.0
  %2012 = vmatprep.subr.mxu0 0.0
  %2013 = vmatpush1.msra.mxu0 0.0
  %2014 = vmatprep.subr.mxu0 0.0
  %2015 = vmatpush1.msra.mxu0 0.0
  %2016 = vmatprep.subr.mxu0 0.0
  %2017 = vmatpush1.msra.mxu0 0.0
  %2018 = vmatprep.subr.mxu0 0.0
  %2019 = vmatpush1.msra.mxu0 0.0
  %2020 = vmatprep.subr.mxu0 0.0
  %2021 = vmatpush1.msra.mxu0 0.0
  %2022 = vmatprep.subr.mxu0 0.0
  %2023 = vmatpush1.msra.mxu0 0.0
  %2024 = vmatprep.subr.mxu0 0.0
  %2025 = vmatpush1.msra.mxu0 0.0
  %2026 = vmatprep.subr.mxu0 0.0
  %2027 = vmatpush1.msra.mxu0 0.0
  %2028 = vmatprep.subr.mxu0 0.0
  %2029 = vmatpush1.msra.mxu0 0.0
  %2030 = vmatprep.subr.mxu0 0.0
  %2031 = vmatpush1.msra.mxu0 0.0
  %2032 = vmatprep.subr.mxu0 0.0
  %2033 = vmatpush1.msra.mxu0 0.0
  %2034 = vmatprep.subr.mxu0 0.0
  %2035 = vmatpush1.msra.mxu0 0.0
  %2036 = vmatprep.subr.mxu0 0.0
  %2037 = vmatpush1.msra.mxu0 0.0
  %2038 = vmatprep.mubr.f32.mxu0 0.0
  %2039 = vmatmul.mubr.f32.gmra.mrb[0].mxu0 %v1972
  %v2040 = vpop.f32.mrb[0].mxu0
  %v2041 = vadd.f32 0.0, %v2040
  %v2042 = vpop.f32.mrb[0].mxu0
  %2043 = vdwg.mxu0
  %v2044 = vadd.f32 %v1352, %v2041
  %v2045 = vxor.u32 %v2044, 2147483648
  %v2046 = vmul.f32 %v2045, 1.442695
  %v2047 = vpow.pop %v2046
  %v2048 = vadd.f32 %v2047, 1.0
  %v2049 = vrcp.pop %v2048
  %v2050 = vmul.f32 1.0, %v2049
  %v2051 = vtanh.pop %v2044
  %v2052 = vmul.f32 %v2050, %v1960
  %2054 = vrot.lane.b32.xlu0 %v2051, 64
  %v2055 = vpop.permute.xlu0 %2054
  %v2057 = vmul.f32 %v2050, %v2055
  %2059 = vrot.lane.b32.xlu0 %v2057, 32
  %v2060 = vpop.permute.xlu0 %2059
  %v2062 = vadd.f32 %v2052, %v2060
  %v2063 = vtanh.pop %v2062
  %2065 = vrot.lane.b32.xlu0 %v2063, 64
  %v2066 = vpop.permute.xlu0 %2065
  %v2068 = vmul.f32 %v2050, %v2066
  %2070 = vrot.lane.b32.xlu0 %v2068, 32
  %v2071 = vpop.permute.xlu0 %2070
  %2073 = vst.msk [vmem:[#allocation2 + $0x30] sm:$0xff] %vm43, %v2071
  %v2074 = vld [vmem:[#allocation2] sm:$0xff]
  %v2075 = vld [vmem:[#allocation2 + $0x8] sm:$0xff]
  %v2076 = vld [vmem:[#allocation2 + $0x10] sm:$0xff]
  %v2077 = vld [vmem:[#allocation2 + $0x18] sm:$0xff]
  %v2078 = vld [vmem:[#allocation2 + $0x20] sm:$0xff]
  %v2079 = vld [vmem:[#allocation2 + $0x28] sm:$0xff]
  %v2080 = vld [vmem:[#allocation2 + $0x30] sm:$0xff]
  %v2081 = vld [vmem:[%s4 + $0xc0] sm:$0xff]
  %v2082 = vld [vmem:[%s4 + $0xc8] sm:$0xff]
  %v2083 = vld [vmem:[%s4 + $0xd0] sm:$0xff]
  %v2084 = vld [vmem:[%s4 + $0xd8] sm:$0xff]
  %v2085 = vld [vmem:[%s5 + $0x4] sm:$0x1]
  %v2086 = vlaneseq
  %v2087 = vshrl.u32 %v2086, 7
  %v2088 = vsub.s32 0, %v2087
  %v2089 = vrot.slane %v2085, %v2088
  %v2091 = vsel %vm43, %v2074, 0
  %v2094 = vsel %vm43, %v2075, 0
  %v2097 = vsel %vm43, %v2076, 0
  %v2100 = vsel %vm43, %v2077, 0
  %v2103 = vsel %vm43, %v2078, 0
  %v2106 = vsel %vm43, %v2079, 0
  %v2109 = vsel %vm43, %v2080, 0
  %2111 = vmatprep.subr.mxu0 0.0
  %2112 = vmatpush1.msra.mxu0 %v2081
  %2113 = vmatprep.subr.mxu0 0.0
  %2114 = vmatpush1.msra.mxu0 %v2082
  %2115 = vmatprep.subr.mxu0 0.0
  %2116 = vmatpush1.msra.mxu0 %v2083
  %2117 = vmatprep.subr.mxu0 0.0
  %2118 = vmatpush1.msra.mxu0 %v2084
  %2119 = vmatprep.subr.mxu0 0.0
  %2120 = vmatpush1.msra.mxu0 0.0
  %2121 = vmatprep.subr.mxu0 0.0
  %2122 = vmatpush1.msra.mxu0 0.0
  %2123 = vmatprep.subr.mxu0 0.0
  %2124 = vmatpush1.msra.mxu0 0.0
  %2125 = vmatprep.subr.mxu0 0.0
  %2126 = vmatpush1.msra.mxu0 0.0
  %2127 = vmatprep.subr.mxu0 0.0
  %2128 = vmatpush1.msra.mxu0 0.0
  %2129 = vmatprep.subr.mxu0 0.0
  %2130 = vmatpush1.msra.mxu0 0.0
  %2131 = vmatprep.subr.mxu0 0.0
  %2132 = vmatpush1.msra.mxu0 0.0
  %2133 = vmatprep.subr.mxu0 0.0
  %2134 = vmatpush1.msra.mxu0 0.0
  %2135 = vmatprep.subr.mxu0 0.0
  %2136 = vmatpush1.msra.mxu0 0.0
  %2137 = vmatprep.subr.mxu0 0.0
  %2138 = vmatpush1.msra.mxu0 0.0
  %2139 = vmatprep.subr.mxu0 0.0
  %2140 = vmatpush1.msra.mxu0 0.0
  %2141 = vmatprep.subr.mxu0 0.0
  %2142 = vmatpush1.msra.mxu0 0.0
  %2143 = vmatprep.subr.mxu0 0.0
  %2144 = vmatpush1.msra.mxu0 0.0
  %2145 = vmatprep.subr.mxu0 0.0
  %2146 = vmatpush1.msra.mxu0 0.0
  %2147 = vmatprep.subr.mxu0 0.0
  %2148 = vmatpush1.msra.mxu0 0.0
  %2149 = vmatprep.subr.mxu0 0.0
  %2150 = vmatpush1.msra.mxu0 0.0
  %2151 = vmatprep.subr.mxu0 0.0
  %2152 = vmatpush1.msra.mxu0 0.0
  %2153 = vmatprep.subr.mxu0 0.0
  %2154 = vmatpush1.msra.mxu0 0.0
  %2155 = vmatprep.subr.mxu0 0.0
  %2156 = vmatpush1.msra.mxu0 0.0
  %2157 = vmatprep.subr.mxu0 0.0
  %2158 = vmatpush1.msra.mxu0 0.0
  %2159 = vmatprep.subr.mxu0 0.0
  %2160 = vmatpush1.msra.mxu0 0.0
  %2161 = vmatprep.subr.mxu0 0.0
  %2162 = vmatpush1.msra.mxu0 0.0
  %2163 = vmatprep.subr.mxu0 0.0
  %2164 = vmatpush1.msra.mxu0 0.0
  %2165 = vmatprep.subr.mxu0 0.0
  %2166 = vmatpush1.msra.mxu0 0.0
  %2167 = vmatprep.subr.mxu0 0.0
  %2168 = vmatpush1.msra.mxu0 0.0
  %2169 = vmatprep.subr.mxu0 0.0
  %2170 = vmatpush1.msra.mxu0 0.0
  %2171 = vmatprep.subr.mxu0 0.0
  %2172 = vmatpush1.msra.mxu0 0.0
  %2173 = vmatprep.subr.mxu0 0.0
  %2174 = vmatpush1.msra.mxu0 0.0
  %2175 = vmatprep.mubr.f32.mxu0 0.0
  %2176 = vmatmul.mubr.f32.gmra.mrb[0].mxu0 %v2091
  %v2177 = vpop.f32.mrb[0].mxu0
  %v2178 = vadd.f32 %v2089, %v2177
  %v2179 = vpop.f32.mrb[0].mxu0
  %2180 = vmatprep.mubr.f32.mxu0 0.0
  %2181 = vmatmul.mubr.f32.gmra.mrb[0].mxu0 %v2094
  %v2182 = vpop.f32.mrb[0].mxu0
  %v2183 = vadd.f32 %v2089, %v2182
  %v2184 = vpop.f32.mrb[0].mxu0
  %2185 = vmatprep.mubr.f32.mxu0 0.0
  %2186 = vmatmul.mubr.f32.gmra.mrb[0].mxu0 %v2097
  %v2187 = vpop.f32.mrb[0].mxu0
  %v2188 = vadd.f32 %v2089, %v2187
  %v2189 = vpop.f32.mrb[0].mxu0
  %2190 = vmatprep.mubr.f32.mxu0 0.0
  %2191 = vmatmul.mubr.f32.gmra.mrb[0].mxu0 %v2100
  %v2192 = vpop.f32.mrb[0].mxu0
  %v2193 = vadd.f32 %v2089, %v2192
  %v2194 = vpop.f32.mrb[0].mxu0
  %2195 = vmatprep.mubr.f32.mxu0 0.0
  %2196 = vmatmul.mubr.f32.gmra.mrb[0].mxu0 %v2103
  %v2197 = vpop.f32.mrb[0].mxu0
  %v2198 = vadd.f32 %v2089, %v2197
  %v2199 = vpop.f32.mrb[0].mxu0
  %2200 = vmatprep.mubr.f32.mxu0 0.0
  %2201 = vmatmul.mubr.f32.gmra.mrb[0].mxu0 %v2106
  %v2202 = vpop.f32.mrb[0].mxu0
  %v2203 = vadd.f32 %v2089, %v2202
  %v2204 = vpop.f32.mrb[0].mxu0
  %2205 = vmatprep.mubr.f32.mxu0 0.0
  %2206 = vmatmul.mubr.f32.gmra.mrb[0].mxu0 %v2109
  %v2207 = vpop.f32.mrb[0].mxu0
  %v2208 = vadd.f32 %v2089, %v2207
  %v2209 = vpop.f32.mrb[0].mxu0
  %2210 = vdwg.mxu0
  %2211 = vmax.xlane.f32.xlu0 %v2178
  %v2212 = vpop.xlane.xlu0 %2211
  %2213 = vmax.xlane.f32.xlu0 %v2183
  %v2214 = vpop.xlane.xlu0 %2213
  %2215 = vmax.xlane.f32.xlu0 %v2188
  %v2216 = vpop.xlane.xlu0 %2215
  %2217 = vmax.xlane.f32.xlu0 %v2193
  %v2218 = vpop.xlane.xlu0 %2217
  %2219 = vmax.xlane.f32.xlu0 %v2198
  %v2220 = vpop.xlane.xlu0 %2219
  %2221 = vmax.xlane.f32.xlu0 %v2203
  %v2222 = vpop.xlane.xlu0 %2221
  %2223 = vmax.xlane.f32.xlu0 %v2208
  %v2224 = vpop.xlane.xlu0 %2223
  %v2225 = vsub.f32 %v2178, %v2212
  %v2226 = vsub.f32 %v2183, %v2214
  %v2227 = vsub.f32 %v2188, %v2216
  %v2228 = vsub.f32 %v2193, %v2218
  %v2229 = vsub.f32 %v2198, %v2220
  %v2230 = vsub.f32 %v2203, %v2222
  %v2231 = vsub.f32 %v2208, %v2224
  %v2232 = vmul.f32 %v2225, 1.442695
  %v2233 = vpow.pop %v2232
  %v2234 = vmul.f32 %v2226, 1.442695
  %v2235 = vpow.pop %v2234
  %v2236 = vmul.f32 %v2227, 1.442695
  %v2237 = vpow.pop %v2236
  %v2238 = vmul.f32 %v2228, 1.442695
  %v2239 = vpow.pop %v2238
  %v2240 = vmul.f32 %v2229, 1.442695
  %v2241 = vpow.pop %v2240
  %v2242 = vmul.f32 %v2230, 1.442695
  %v2243 = vpow.pop %v2242
  %v2244 = vmul.f32 %v2231, 1.442695
  %v2245 = vpow.pop %v2244
  %2246 = vadd.xlane.f32.xlu0 %v2233
  %v2247 = vpop.xlane.xlu0 %2246
  %2248 = vadd.xlane.f32.xlu0 %v2235
  %v2249 = vpop.xlane.xlu0 %2248
  %2250 = vadd.xlane.f32.xlu0 %v2237
  %v2251 = vpop.xlane.xlu0 %2250
  %2252 = vadd.xlane.f32.xlu0 %v2239
  %v2253 = vpop.xlane.xlu0 %2252
  %2254 = vadd.xlane.f32.xlu0 %v2241
  %v2255 = vpop.xlane.xlu0 %2254
  %2256 = vadd.xlane.f32.xlu0 %v2243
  %v2257 = vpop.xlane.xlu0 %2256
  %2258 = vadd.xlane.f32.xlu0 %v2245
  %v2259 = vpop.xlane.xlu0 %2258
  %v2260 = vlog2.pop %v2247
  %v2261 = vmul.f32 %v2260, 0.6931472
  %v2262 = vlog2.pop %v2249
  %v2263 = vmul.f32 %v2262, 0.6931472
  %v2264 = vlog2.pop %v2251
  %v2265 = vmul.f32 %v2264, 0.6931472
  %v2266 = vlog2.pop %v2253
  %v2267 = vmul.f32 %v2266, 0.6931472
  %v2268 = vlog2.pop %v2255
  %v2269 = vmul.f32 %v2268, 0.6931472
  %v2270 = vlog2.pop %v2257
  %v2271 = vmul.f32 %v2270, 0.6931472
  %v2272 = vlog2.pop %v2259
  %v2273 = vmul.f32 %v2272, 0.6931472
  %v2274 = vadd.f32 %v2212, %v2261
  %v2275 = vadd.f32 %v2214, %v2263
  %v2276 = vadd.f32 %v2216, %v2265
  %v2277 = vadd.f32 %v2218, %v2267
  %v2278 = vadd.f32 %v2220, %v2269
  %v2279 = vadd.f32 %v2222, %v2271
  %v2280 = vadd.f32 %v2224, %v2273
  %v2281 = vld [vmem:[%s2] sm:$0xff]
  %v2282 = vld [vmem:[%s2 + $0x8] sm:$0xff]
  %v2283 = vld [vmem:[%s2 + $0x10] sm:$0xff]
  %v2284 = vld [vmem:[%s2 + $0x18] sm:$0xff]
  %v2285 = vld [vmem:[%s2 + $0x20] sm:$0xff]
  %v2286 = vld [vmem:[%s2 + $0x28] sm:$0xff]
  %v2287 = vld [vmem:[%s2 + $0x30] sm:$0xff]
  %v2288 = vlaneseq
  %v2289 = vand.u32 %v2288, 127
  %2290 = vset.pattern.permute.xlu0 0
  %2291 = vperm.xlu0 %2290, %v2281
  %v2292 = vpop.permute.xlu0 %2291
  %2293 = vset.pattern.permute.xlu0 0
  %2294 = vperm.xlu0 %2293, %v2282
  %v2295 = vpop.permute.xlu0 %2294
  %2296 = vset.pattern.permute.xlu0 0
  %2297 = vperm.xlu0 %2296, %v2283
  %v2298 = vpop.permute.xlu0 %2297
  %2299 = vset.pattern.permute.xlu0 0
  %2300 = vperm.xlu0 %2299, %v2284
  %v2301 = vpop.permute.xlu0 %2300
  %2302 = vset.pattern.permute.xlu0 0
  %2303 = vperm.xlu0 %2302, %v2285
  %v2304 = vpop.permute.xlu0 %2303
  %2305 = vset.pattern.permute.xlu0 0
  %2306 = vperm.xlu0 %2305, %v2286
  %v2307 = vpop.permute.xlu0 %2306
  %2308 = vset.pattern.permute.xlu0 0
  %2309 = vperm.xlu0 %2308, %v2287
  %v2310 = vpop.permute.xlu0 %2309
  %vm2311 = vcmp.eq.s32.totalorder %v2289, %v2292
  %vm2312 = vcmp.eq.s32.totalorder %v2289, %v2295
  %vm2313 = vcmp.eq.s32.totalorder %v2289, %v2298
  %vm2314 = vcmp.eq.s32.totalorder %v2289, %v2301
  %vm2315 = vcmp.eq.s32.totalorder %v2289, %v2304
  %vm2316 = vcmp.eq.s32.totalorder %v2289, %v2307
  %vm2317 = vcmp.eq.s32.totalorder %v2289, %v2310
  %v2318 = vsel %vm2311, %v2178, 0.0
  %v2319 = vsel %vm2312, %v2183, 0.0
  %v2320 = vsel %vm2313, %v2188, 0.0
  %v2321 = vsel %vm2314, %v2193, 0.0
  %v2322 = vsel %vm2315, %v2198, 0.0
  %v2323 = vsel %vm2316, %v2203, 0.0
  %v2324 = vsel %vm2317, %v2208, 0.0
  %2325 = vadd.xlane.f32.xlu0 %v2318
  %v2326 = vpop.xlane.xlu0 %2325
  %2327 = vadd.xlane.f32.xlu0 %v2319
  %v2328 = vpop.xlane.xlu0 %2327
  %2329 = vadd.xlane.f32.xlu0 %v2320
  %v2330 = vpop.xlane.xlu0 %2329
  %2331 = vadd.xlane.f32.xlu0 %v2321
  %v2332 = vpop.xlane.xlu0 %2331
  %2333 = vadd.xlane.f32.xlu0 %v2322
  %v2334 = vpop.xlane.xlu0 %2333
  %2335 = vadd.xlane.f32.xlu0 %v2323
  %v2336 = vpop.xlane.xlu0 %2335
  %2337 = vadd.xlane.f32.xlu0 %v2324
  %v2338 = vpop.xlane.xlu0 %2337
  %v2339 = vsub.f32 %v2326, %v2274
  %v2340 = vsub.f32 %v2328, %v2275
  %v2341 = vsub.f32 %v2330, %v2276
  %v2342 = vsub.f32 %v2332, %v2277
  %v2343 = vsub.f32 %v2334, %v2278
  %v2344 = vsub.f32 %v2336, %v2279
  %v2345 = vsub.f32 %v2338, %v2280
  %vm2346 = vcmp.ne.s32.totalorder %v2281, 0
  %vm2347 = vcmp.ne.s32.totalorder %v2282, 0
  %vm2348 = vcmp.ne.s32.totalorder %v2283, 0
  %vm2349 = vcmp.ne.s32.totalorder %v2284, 0
  %vm2350 = vcmp.ne.s32.totalorder %v2285, 0
  %vm2351 = vcmp.ne.s32.totalorder %v2286, 0
  %vm2352 = vcmp.ne.s32.totalorder %v2287, 0
  %v2353 = vsel %vm2346, 1, 0
  %v2354 = vsel %vm2347, 1, 0
  %v2355 = vsel %vm2348, 1, 0
  %v2356 = vsel %vm2349, 1, 0
  %v2357 = vsel %vm2350, 1, 0
  %v2358 = vsel %vm2351, 1, 0
  %v2359 = vsel %vm2352, 1, 0
  %v2360 = vcvt.s32.f32 %v2353
  %v2361 = vcvt.s32.f32 %v2354
  %v2362 = vcvt.s32.f32 %v2355
  %v2363 = vcvt.s32.f32 %v2356
  %v2364 = vcvt.s32.f32 %v2357
  %v2365 = vcvt.s32.f32 %v2358
  %v2366 = vcvt.s32.f32 %v2359
  %v2367 = vmul.f32 %v2339, %v2360
  %v2368 = vmul.f32 %v2340, %v2361
  %v2369 = vmul.f32 %v2341, %v2362
  %v2370 = vmul.f32 %v2342, %v2363
  %v2371 = vmul.f32 %v2343, %v2364
  %v2372 = vmul.f32 %v2344, %v2365
  %v2373 = vmul.f32 %v2345, %v2366
  %vm2374 = vcmask 7168
  %v2375 = vsel %vm2374, %v2367, 0.0
  %v2376 = vsel %vm2374, %v2368, 0.0
  %v2377 = vadd.f32 %v2375, %v2376
  %v2378 = vsel %vm2374, %v2369, 0.0
  %v2379 = vadd.f32 %v2377, %v2378
  %v2380 = vsel %vm2374, %v2370, 0.0
  %v2381 = vadd.f32 %v2379, %v2380
  %v2382 = vsel %vm2374, %v2371, 0.0
  %v2383 = vadd.f32 %v2381, %v2382
  %v2384 = vsel %vm2374, %v2372, 0.0
  %v2385 = vadd.f32 %v2383, %v2384
  %v2386 = vsel %vm2374, %v2373, 0.0
  %v2387 = vadd.f32 %v2385, %v2386
  %2388 = vadd.xlane.f32.xlu0 %v2387
  %v2389 = vpop.xlane.xlu0 %2388
  %v2390 = vrot.slane %v2389, 4
  %v2391 = vadd.f32 %v2389, %v2390
  %v2392 = vrot.slane %v2391, 2
  %v2393 = vadd.f32 %v2391, %v2392
  %v2394 = vrot.slane %v2393, 1
  %v2395 = vadd.f32 %v2393, %v2394
  %s2396 = vtos %v2395
  %v2397 = vsel %vm2374, %v2360, 0.0
  %v2398 = vsel %vm2374, %v2361, 0.0
  %v2399 = vadd.f32 %v2397, %v2398
  %v2400 = vsel %vm2374, %v2362, 0.0
  %v2401 = vadd.f32 %v2399, %v2400
  %v2402 = vsel %vm2374, %v2363, 0.0
  %v2403 = vadd.f32 %v2401, %v2402
  %v2404 = vsel %vm2374, %v2364, 0.0
  %v2405 = vadd.f32 %v2403, %v2404
  %v2406 = vsel %vm2374, %v2365, 0.0
  %v2407 = vadd.f32 %v2405, %v2406
  %v2408 = vsel %vm2374, %v2366, 0.0
  %v2409 = vadd.f32 %v2407, %v2408
  %2410 = vadd.xlane.f32.xlu0 %v2409
  %v2411 = vpop.xlane.xlu0 %2410
  %v2412 = vrot.slane %v2411, 4
  %v2413 = vadd.f32 %v2411, %v2412
  %v2414 = vrot.slane %v2413, 2
  %v2415 = vadd.f32 %v2413, %v2414
  %v2416 = vrot.slane %v2415, 1
  %v2417 = vadd.f32 %v2415, %v2416
  %s2418 = vtos %v2417
  %s2419 = smax.f32 %s2418, 1.0
  %v2420 = vstv %s2419
  %v2421 = vrcp.pop %v2420
  %s2422 = vtos %v2421
  %s2423 = smul.f32 %s2396, %s2422
  %vm2424 = vcmp.eq.f32.partialorder %v2178, %v2212
  %vm2425 = vcmp.eq.f32.partialorder %v2183, %v2214
  %vm2426 = vcmp.eq.f32.partialorder %v2188, %v2216
  %vm2427 = vcmp.eq.f32.partialorder %v2193, %v2218
  %vm2428 = vcmp.eq.f32.partialorder %v2198, %v2220
  %vm2429 = vcmp.eq.f32.partialorder %v2203, %v2222
  %vm2430 = vcmp.eq.f32.partialorder %v2208, %v2224
  %v2431 = vsel %vm2424, %v2289, 128
  %v2432 = vsel %vm2425, %v2289, 128
  %v2433 = vsel %vm2426, %v2289, 128
  %v2434 = vsel %vm2427, %v2289, 128
  %v2435 = vsel %vm2428, %v2289, 128
  %v2436 = vsel %vm2429, %v2289, 128
  %v2437 = vsel %vm2430, %v2289, 128
  %v2438 = vand.u32 %v2431, 65535
  %v2439 = vshra.s32 %v2431, 16
  %v2440 = vcvt.s32.f32 %v2438
  %v2441 = vcvt.s32.f32 %v2439
  %2442 = vmin.xlane.f32.xlu0 %v2441
  %v2443 = vpop.xlane.xlu0 %2442
  %vm2444 = vcmp.eq.f32.partialorder %v2441, %v2443
  %v2445 = vsel %vm2444, %v2440, inf
  %2446 = vmin.xlane.f32.xlu0 %v2445
  %v2447 = vpop.xlane.xlu0 %2446
  %v2448 = vcvt.f32.s32 %v2447
  %v2449 = vcvt.f32.s32 %v2443
  %v2450 = vshll.u32 %v2449, 16
  %v2451 = vadd.s32 %v2450, %v2448
  %v2452 = vand.u32 %v2432, 65535
  %v2453 = vshra.s32 %v2432, 16
  %v2454 = vcvt.s32.f32 %v2452
  %v2455 = vcvt.s32.f32 %v2453
  %2456 = vmin.xlane.f32.xlu0 %v2455
  %v2457 = vpop.xlane.xlu0 %2456
  %vm2458 = vcmp.eq.f32.partialorder %v2455, %v2457
  %v2459 = vsel %vm2458, %v2454, inf
  %2460 = vmin.xlane.f32.xlu0 %v2459
  %v2461 = vpop.xlane.xlu0 %2460
  %v2462 = vcvt.f32.s32 %v2461
  %v2463 = vcvt.f32.s32 %v2457
  %v2464 = vshll.u32 %v2463, 16
  %v2465 = vadd.s32 %v2464, %v2462
  %v2466 = vand.u32 %v2433, 65535
  %v2467 = vshra.s32 %v2433, 16
  %v2468 = vcvt.s32.f32 %v2466
  %v2469 = vcvt.s32.f32 %v2467
  %2470 = vmin.xlane.f32.xlu0 %v2469
  %v2471 = vpop.xlane.xlu0 %2470
  %vm2472 = vcmp.eq.f32.partialorder %v2469, %v2471
  %v2473 = vsel %vm2472, %v2468, inf
  %2474 = vmin.xlane.f32.xlu0 %v2473
  %v2475 = vpop.xlane.xlu0 %2474
  %v2476 = vcvt.f32.s32 %v2475
  %v2477 = vcvt.f32.s32 %v2471
  %v2478 = vshll.u32 %v2477, 16
  %v2479 = vadd.s32 %v2478, %v2476
  %v2480 = vand.u32 %v2434, 65535
  %v2481 = vshra.s32 %v2434, 16
  %v2482 = vcvt.s32.f32 %v2480
  %v2483 = vcvt.s32.f32 %v2481
  %2484 = vmin.xlane.f32.xlu0 %v2483
  %v2485 = vpop.xlane.xlu0 %2484
  %vm2486 = vcmp.eq.f32.partialorder %v2483, %v2485
  %v2487 = vsel %vm2486, %v2482, inf
  %2488 = vmin.xlane.f32.xlu0 %v2487
  %v2489 = vpop.xlane.xlu0 %2488
  %v2490 = vcvt.f32.s32 %v2489
  %v2491 = vcvt.f32.s32 %v2485
  %v2492 = vshll.u32 %v2491, 16
  %v2493 = vadd.s32 %v2492, %v2490
  %v2494 = vand.u32 %v2435, 65535
  %v2495 = vshra.s32 %v2435, 16
  %v2496 = vcvt.s32.f32 %v2494
  %v2497 = vcvt.s32.f32 %v2495
  %2498 = vmin.xlane.f32.xlu0 %v2497
  %v2499 = vpop.xlane.xlu0 %2498
  %vm2500 = vcmp.eq.f32.partialorder %v2497, %v2499
  %v2501 = vsel %vm2500, %v2496, inf
  %2502 = vmin.xlane.f32.xlu0 %v2501
  %v2503 = vpop.xlane.xlu0 %2502
  %v2504 = vcvt.f32.s32 %v2503
  %v2505 = vcvt.f32.s32 %v2499
  %v2506 = vshll.u32 %v2505, 16
  %v2507 = vadd.s32 %v2506, %v2504
  %v2508 = vand.u32 %v2436, 65535
  %v2509 = vshra.s32 %v2436, 16
  %v2510 = vcvt.s32.f32 %v2508
  %v2511 = vcvt.s32.f32 %v2509
  %2512 = vmin.xlane.f32.xlu0 %v2511
  %v2513 = vpop.xlane.xlu0 %2512
  %vm2514 = vcmp.eq.f32.partialorder %v2511, %v2513
  %v2515 = vsel %vm2514, %v2510, inf
  %2516 = vmin.xlane.f32.xlu0 %v2515
  %v2517 = vpop.xlane.xlu0 %2516
  %v2518 = vcvt.f32.s32 %v2517
  %v2519 = vcvt.f32.s32 %v2513
  %v2520 = vshll.u32 %v2519, 16
  %v2521 = vadd.s32 %v2520, %v2518
  %v2522 = vand.u32 %v2437, 65535
  %v2523 = vshra.s32 %v2437, 16
  %v2524 = vcvt.s32.f32 %v2522
  %v2525 = vcvt.s32.f32 %v2523
  %2526 = vmin.xlane.f32.xlu0 %v2525
  %v2527 = vpop.xlane.xlu0 %2526
  %vm2528 = vcmp.eq.f32.partialorder %v2525, %v2527
  %v2529 = vsel %vm2528, %v2524, inf
  %2530 = vmin.xlane.f32.xlu0 %v2529
  %v2531 = vpop.xlane.xlu0 %2530
  %v2532 = vcvt.f32.s32 %v2531
  %v2533 = vcvt.f32.s32 %v2527
  %v2534 = vshll.u32 %v2533, 16
  %v2535 = vadd.s32 %v2534, %v2532
  %2536 = vst.msk [vmem:[%s7] sm:$0xff] %vm2374, %v2451
  %2537 = vst.msk [vmem:[%s7 + $0x8] sm:$0xff] %vm2374, %v2465
  %2538 = vst.msk [vmem:[%s7 + $0x10] sm:$0xff] %vm2374, %v2479
  %2539 = vst.msk [vmem:[%s7 + $0x18] sm:$0xff] %vm2374, %v2493
  %2540 = vst.msk [vmem:[%s7 + $0x20] sm:$0xff] %vm2374, %v2507
  %2541 = vst.msk [vmem:[%s7 + $0x28] sm:$0xff] %vm2374, %v2521
  %2542 = vst.msk [vmem:[%s7 + $0x30] sm:$0xff] %vm2374, %v2535
  %vm2543 = vcmp.eq.s32.totalorder %v2289, 0
  %v2544 = vstv %s1163
  %v2545 = vstv %s2423
  %v2546 = vsel %vm2543, %v2544, %v2545
  %vm2547 = vcmask 8192
  %2548 = vst.msk [vmem:[%s6] sm:$0x1] %vm2547, %v2546
  // Predicated region
  $region26: #{gaussian_vae_forward.1} parent=0 // pred_check
    _
  $region27: #{gaussian_vae_forward.1} parent=0 // pred_check_branch
    %2550 = sbr.rel (0) target = $region29
  $region28: #{gaussian_vae_forward.1} parent=0 // pred_region
    _
  $region29: #{gaussian_vae_forward.1} parent=0 // pred_fallthru
    _
  // Predicated region
  $region30: #{gaussian_vae_forward.1} parent=0 // pred_check
    _
  $region31: #{gaussian_vae_forward.1} parent=0 // pred_check_branch
    %2552 = sbr.rel (0) target = $region33
  $region32: #{gaussian_vae_forward.1} parent=0 // pred_region
    _
  $region33: #{gaussian_vae_forward.1} parent=0 // pred_fallthru
    _
  // Predicated region
  $region34: #{gaussian_vae_forward.1} parent=0 // pred_check
    _
  $region35: #{gaussian_vae_forward.1} parent=0 // pred_check_branch
    %2554 = sbr.rel (0) target = $region37
  $region36: #{gaussian_vae_forward.1} parent=0 // pred_region
    _
  $region37: #{gaussian_vae_forward.1} parent=0 // pred_fallthru
    _
  // Predicated region
  $region38: #{gaussian_vae_forward.1} parent=0 // pred_check
    _
  $region39: #{gaussian_vae_forward.1} parent=0 // pred_check_branch
    %2556 = sbr.rel (0) target = $region41
  $region40: #{gaussian_vae_forward.1} parent=0 // pred_region
    _
  $region41: #{gaussian_vae_forward.1} parent=0 // pred_fallthru
    _

</llo_original>
